<compile_context>
chip_gen: v7x
topology: tpu7x:2x2x1
jax: 0.10.0
libtpu: 0.0.40
codegen_flags: <defaults>
</compile_context>

<pallas_src>
import functools

import jax
import jax.numpy as jnp
from jax.experimental import pallas as pl
from jax.experimental.pallas import tpu as pltpu

EPS = 1e-5  # InstanceNorm2d default


def _unet_up_kernel(x_ref, w_ref, o_ref, *, H, W, Cin, Cout):
    """Fused ConvTranspose2d(4,2,1) + InstanceNorm2d + ReLU for one sample.

    x_ref: (1, H+2, W+2, Cin)    bf16  zero-padded NHWC input (resident)
    w_ref: (2, 2, 4*Cin, Cout)   bf16  per-phase weight matrices [rh, rw]
    o_ref: (1, H, 2, W, 2*Cout)  f32   output; contiguous-reshapes to NHWC
    """
    HW = H * W
    ssum = jnp.zeros((1, Cout), jnp.float32)
    ssq = jnp.zeros((1, Cout), jnp.float32)

    # --- sub-pixel 4-phase transposed conv: one MXU matmul per phase -------
    # Output pixel (2a+rh, 2b+rw) = sum_{ci,th,tw}
    #   xpad[a+rh+th, b+rw+tw, ci] * Wt[ci, co, 3-2*th-rh, 3-2*tw-rw]
    for rh in range(2):
        ys = []
        for rw in range(2):
            taps = [x_ref[0, rh + th:rh + th + H, rw + tw:rw + tw + W, :]
                    for th in range(2) for tw in range(2)]
            # (H, W, 4*Cin) -> (H*W, 4*Cin): lanes (channels*taps) unchanged.
            p = jnp.concatenate(taps, axis=-1).reshape(HW, 4 * Cin)
            y = jnp.dot(p, w_ref[rh, rw],
                        preferred_element_type=jnp.float32)      # (HW, Cout)
            # single-pass InstanceNorm statistics, f32
            ssum += jnp.sum(y, axis=0, keepdims=True)
            ssq += jnp.sum(y * y, axis=0, keepdims=True)
            ys.append(y)
        # both rw phases concatenated on lanes -> one full-lane store
        y_cat = jnp.concatenate(ys, axis=-1)                      # (HW, 2*Cout)
        o_ref[0, :, rh, :, :] = y_cat.reshape(H, W, 2 * Cout)     # unnormalized

    # --- InstanceNorm (biased variance, eps=1e-5) + ReLU, in place ---------
    inv_n = 1.0 / float(4 * HW)          # stats over the full 2H x 2W output
    mean = ssum * inv_n
    var = ssq * inv_n - mean * mean
    inv = jax.lax.rsqrt(var + EPS)
    scale = jnp.concatenate([inv, inv], axis=-1).reshape(1, 1, 2 * Cout)
    shift = jnp.concatenate([mean * inv, mean * inv],
                            axis=-1).reshape(1, 1, 2 * Cout)
    for rh in range(2):
        y = o_ref[0, :, rh, :, :]                                 # (H, W, 2Cout)
        o_ref[0, :, rh, :, :] = jnp.maximum(y * scale - shift, 0.0)


def unet_up_forward(x, weight):
    """UNetUp forward.

    x:      (N, Cin, H, W)     float32, NCHW (PyTorch convention)
    weight: (Cin, Cout, 4, 4)  ConvTranspose2d weight (PyTorch convention)
    returns (N, Cout, 2H, 2W)  float32, NCHW
    """
    N, Cin, H, W = x.shape
    Cin_w, Cout, KH, KW = weight.shape
    assert Cin == Cin_w and KH == 4 and KW == 4
    HW = H * W

    # --- cheap input prep: bf16 cast, NCHW->NHWC, pad by 1 (no im2col) -----
    x_cl = jnp.transpose(x.astype(jnp.bfloat16), (0, 2, 3, 1))    # (N,H,W,Cin)
    xp = jnp.pad(x_cl, ((0, 0), (1, 1), (1, 1), (0, 0)))          # (N,H+2,W+2,Cin)

    # --- per-phase weight matrices; row order (tap, ci) matches kernel concat
    wmats = []
    for rh in range(2):
        row = []
        for rw in range(2):
            wt = jnp.stack([weight[:, :, 3 - 2 * th - rh, 3 - 2 * tw - rw]
                            for th in range(2) for tw in range(2)],
                           axis=0)                                # (4, Cin, Cout)
            row.append(wt.reshape(4 * Cin, Cout))
        wmats.append(jnp.stack(row, axis=0))
    w_mat = jnp.stack(wmats, axis=0).astype(jnp.bfloat16)         # (2,2,4Cin,Cout)

    # --- VMEM budget: double-buffered in/out blocks + weights + transients --
    in_bytes = (H + 2) * (W + 2) * Cin * 2
    out_bytes = 4 * HW * Cout * 4
    w_bytes = 16 * Cin * Cout * 2
    transient = 4 * HW * Cin * 2 + 2 * HW * Cout * 4
    per_step = 2 * (in_bytes + out_bytes + w_bytes) + transient
    try:
        info = pltpu.get_tpu_info()
        vmem_cap = int(getattr(info, "vmem_capacity_bytes", 64 * 2 ** 20))
    except Exception:
        vmem_cap = 64 * 2 ** 20          # v7x per-TC capacity (smallest case)
    vmem_limit = int(min(max(per_step + (4 << 20), 16 << 20),
                         int(0.6 * vmem_cap)))
    # TODO(synk): spatially-tiled two-pass fallback for samples whose fused
    # per-sample footprint exceeds the VMEM budget (not needed for pix2pix).

    flops = 32 * N * HW * Cin * Cout + 12 * N * 4 * HW * Cout
    bytes_accessed = xp.size * 2 + w_mat.size * 2 + N * 4 * HW * Cout * 4

    out5 = pl.pallas_call(
        functools.partial(_unet_up_kernel, H=H, W=W, Cin=Cin, Cout=Cout),
        out_shape=jax.ShapeDtypeStruct((N, H, 2, W, 2 * Cout), jnp.float32),
        grid_spec=pltpu.PrefetchScalarGridSpec(
            num_scalar_prefetch=0,
            grid=(N,),
            in_specs=[
                pl.BlockSpec((1, H + 2, W + 2, Cin), lambda n: (n, 0, 0, 0)),
                pl.BlockSpec((2, 2, 4 * Cin, Cout), lambda n: (0, 0, 0, 0)),
            ],
            out_specs=pl.BlockSpec((1, H, 2, W, 2 * Cout),
                                   lambda n: (n, 0, 0, 0, 0)),
        ),
        compiler_params=pltpu.CompilerParams(
            dimension_semantics=("parallel",),   # megacore / dual-TC over N
            vmem_limit_bytes=vmem_limit,
        ),
        cost_estimate=pl.CostEstimate(
            flops=int(flops), transcendentals=int(N * Cout),
            bytes_accessed=int(bytes_accessed)),
    )(xp, w_mat)

    # sub-pixel shuffle is a pure contiguous reshape in this layout;
    # one well-shaped NHWC->NCHW transpose restores the PyTorch layout.
    out_nhwc = out5.reshape(N, 2 * H, 2 * W, Cout)
    return jnp.transpose(out_nhwc, (0, 3, 1, 2))


def _reference(x, weight):
    """Pure-JAX reference: ConvTranspose2d(4,2,1) + InstanceNorm2d + ReLU."""
    w_flip = weight[:, :, ::-1, ::-1]                   # (Cin, Cout, 4, 4)
    rhs = jnp.transpose(w_flip, (1, 0, 2, 3))           # OIHW
    y = jax.lax.conv_general_dilated(
        x, rhs, window_strides=(1, 1), padding=((2, 2), (2, 2)),
        lhs_dilation=(2, 2), rhs_dilation=(1, 1),
        dimension_numbers=("NCHW", "OIHW", "NCHW"))
    mean = jnp.mean(y, axis=(2, 3), keepdims=True)
    var = jnp.mean((y - mean) ** 2, axis=(2, 3), keepdims=True)
    return jnp.maximum((y - mean) * jax.lax.rsqrt(var + EPS), 0.0)


if __name__ == "__main__":
    key = jax.random.PRNGKey(0)
    kx, kw = jax.random.split(key)

    N, Cin, H, W = 2, 4, 16, 16
    Cout = 8

    x = jax.random.normal(kx, (N, Cin, H, W), dtype=jnp.float32)
    # Deterministic ConvTranspose2d weight, PyTorch shape (Cin, Cout, 4, 4).
    fan_in = Cin * 4 * 4
    bound = 1.0 / (fan_in ** 0.5)
    weight = jax.random.uniform(kw, (Cin, Cout, 4, 4),
                                minval=-bound, maxval=bound, dtype=jnp.float32)

    fwd = jax.jit(unet_up_forward)
    y = fwd(x, weight)
    jax.block_until_ready(y)
    assert y.shape == (N, Cout, 2 * H, 2 * W)

    y_ref = _reference(x, weight)
    err = float(jnp.max(jnp.abs(y - y_ref)))
    assert err < 5e-2, f"max abs error vs reference too large: {err}"

    # TODO(synk): dropout path (dropout > 0) not implemented; default config uses dropout=0.0.
    print("KERNEL_OK")
</pallas_src>

<mosaic_0001>
module attributes {stable_mosaic.version = 11 : i64} {
  func.func @_unet_up_kernel(%arg0: i32, %arg1: memref<1x18x18x4xbf16, #tpu.memory_space<vmem>>, %arg2: memref<2x2x16x8xbf16, #tpu.memory_space<vmem>>, %arg3: memref<1x16x2x16x16xf32, #tpu.memory_space<vmem>>) attributes {dimension_semantics = [#tpu.dimension_semantics<parallel>], iteration_bounds = array<i64: 2>, scalar_prefetch = 0 : i64, scratch_operands = 0 : i64, tpu.core_type = #tpu.core_type<tc>, window_params = [{transform_indices = @transform_0, window_bounds = array<i64: 1, 18, 18, 4>}, {pipeline_mode = #tpu.pipeline_mode<synchronous>, transform_indices = @transform_1, window_bounds = array<i64: 2, 2, 16, 8>}, {transform_indices = @transform_2, window_bounds = array<i64: 1, 16, 2, 16, 16>}]} {
    %cst = arith.constant 0.000000e+00 : f32
    %0 = vector.broadcast %cst : f32 to vector<1x8xf32>
    %cst_0 = arith.constant 0.000000e+00 : f32
    %1 = vector.broadcast %cst_0 : f32 to vector<1x8xf32>
    %c0 = arith.constant 0 : index
    %c0_1 = arith.constant 0 : index
    %c0_2 = arith.constant 0 : index
    %c0_3 = arith.constant 0 : index
    %2 = vector.load %arg1[%c0, %c0_1, %c0_2, %c0_3] : memref<1x18x18x4xbf16, #tpu.memory_space<vmem>>, vector<1x16x16x4xbf16>
    %3 = vector.shape_cast %2 : vector<1x16x16x4xbf16> to vector<16x16x4xbf16>
    %c0_4 = arith.constant 0 : index
    %c0_5 = arith.constant 0 : index
    %c1 = arith.constant 1 : index
    %c0_6 = arith.constant 0 : index
    %4 = vector.load %arg1[%c0_4, %c0_5, %c1, %c0_6] : memref<1x18x18x4xbf16, #tpu.memory_space<vmem>>, vector<1x16x16x4xbf16>
    %5 = vector.shape_cast %4 : vector<1x16x16x4xbf16> to vector<16x16x4xbf16>
    %c0_7 = arith.constant 0 : index
    %c1_8 = arith.constant 1 : index
    %c0_9 = arith.constant 0 : index
    %c0_10 = arith.constant 0 : index
    %6 = vector.load %arg1[%c0_7, %c1_8, %c0_9, %c0_10] : memref<1x18x18x4xbf16, #tpu.memory_space<vmem>>, vector<1x16x16x4xbf16>
    %7 = vector.shape_cast %6 : vector<1x16x16x4xbf16> to vector<16x16x4xbf16>
    %c0_11 = arith.constant 0 : index
    %c1_12 = arith.constant 1 : index
    %c1_13 = arith.constant 1 : index
    %c0_14 = arith.constant 0 : index
    %8 = vector.load %arg1[%c0_11, %c1_12, %c1_13, %c0_14] : memref<1x18x18x4xbf16, #tpu.memory_space<vmem>>, vector<1x16x16x4xbf16>
    %9 = vector.shape_cast %8 : vector<1x16x16x4xbf16> to vector<16x16x4xbf16>
    %10 = tpu.concatenate %3, %5, %7, %9 in 2 : vector<16x16x4xbf16>, vector<16x16x4xbf16>, vector<16x16x4xbf16>, vector<16x16x4xbf16> -> vector<16x16x16xbf16>
    %11 = vector.shape_cast %10 : vector<16x16x16xbf16> to vector<256x16xbf16>
    %c0_15 = arith.constant 0 : index
    %c0_16 = arith.constant 0 : index
    %c0_17 = arith.constant 0 : index
    %c0_18 = arith.constant 0 : index
    %12 = vector.load %arg2[%c0_15, %c0_16, %c0_17, %c0_18] : memref<2x2x16x8xbf16, #tpu.memory_space<vmem>>, vector<1x1x16x8xbf16>
    %13 = vector.shape_cast %12 : vector<1x1x16x8xbf16> to vector<16x8xbf16>
    %cst_19 = arith.constant dense<0.000000e+00> : vector<256x8xf32>
    %14 = tpu.matmul %11, %13, %cst_19 {dimension_numbers = #tpu.dot_dimension_numbers<[1], [0], [0], [1], [0, 0, 1, 1], [], []>} : vector<256x16xbf16>, vector<16x8xbf16>, vector<256x8xf32> -> vector<256x8xf32>
    %cst_20 = arith.constant dense<0.000000e+00> : vector<8xf32>
    %15 = vector.multi_reduction <add>, %14, %cst_20 [0] : vector<256x8xf32> to vector<8xf32>
    %16 = vector.shape_cast %15 : vector<8xf32> to vector<1x8xf32>
    %17 = arith.addf %0, %16 : vector<1x8xf32>
    %18 = arith.mulf %14, %14 : vector<256x8xf32>
    %cst_21 = arith.constant dense<0.000000e+00> : vector<8xf32>
    %19 = vector.multi_reduction <add>, %18, %cst_21 [0] : vector<256x8xf32> to vector<8xf32>
    %20 = vector.shape_cast %19 : vector<8xf32> to vector<1x8xf32>
    %21 = arith.addf %1, %20 : vector<1x8xf32>
    %c0_22 = arith.constant 0 : index
    %c0_23 = arith.constant 0 : index
    %c1_24 = arith.constant 1 : index
    %c0_25 = arith.constant 0 : index
    %22 = vector.load %arg1[%c0_22, %c0_23, %c1_24, %c0_25] : memref<1x18x18x4xbf16, #tpu.memory_space<vmem>>, vector<1x16x16x4xbf16>
    %23 = vector.shape_cast %22 : vector<1x16x16x4xbf16> to vector<16x16x4xbf16>
    %c0_26 = arith.constant 0 : index
    %c0_27 = arith.constant 0 : index
    %c2 = arith.constant 2 : index
    %c0_28 = arith.constant 0 : index
    %24 = vector.load %arg1[%c0_26, %c0_27, %c2, %c0_28] : memref<1x18x18x4xbf16, #tpu.memory_space<vmem>>, vector<1x16x16x4xbf16>
    %25 = vector.shape_cast %24 : vector<1x16x16x4xbf16> to vector<16x16x4xbf16>
    %c0_29 = arith.constant 0 : index
    %c1_30 = arith.constant 1 : index
    %c1_31 = arith.constant 1 : index
    %c0_32 = arith.constant 0 : index
    %26 = vector.load %arg1[%c0_29, %c1_30, %c1_31, %c0_32] : memref<1x18x18x4xbf16, #tpu.memory_space<vmem>>, vector<1x16x16x4xbf16>
    %27 = vector.shape_cast %26 : vector<1x16x16x4xbf16> to vector<16x16x4xbf16>
    %c0_33 = arith.constant 0 : index
    %c1_34 = arith.constant 1 : index
    %c2_35 = arith.constant 2 : index
    %c0_36 = arith.constant 0 : index
    %28 = vector.load %arg1[%c0_33, %c1_34, %c2_35, %c0_36] : memref<1x18x18x4xbf16, #tpu.memory_space<vmem>>, vector<1x16x16x4xbf16>
    %29 = vector.shape_cast %28 : vector<1x16x16x4xbf16> to vector<16x16x4xbf16>
    %30 = tpu.concatenate %23, %25, %27, %29 in 2 : vector<16x16x4xbf16>, vector<16x16x4xbf16>, vector<16x16x4xbf16>, vector<16x16x4xbf16> -> vector<16x16x16xbf16>
    %31 = vector.shape_cast %30 : vector<16x16x16xbf16> to vector<256x16xbf16>
    %c0_37 = arith.constant 0 : index
    %c1_38 = arith.constant 1 : index
    %c0_39 = arith.constant 0 : index
    %c0_40 = arith.constant 0 : index
    %32 = vector.load %arg2[%c0_37, %c1_38, %c0_39, %c0_40] : memref<2x2x16x8xbf16, #tpu.memory_space<vmem>>, vector<1x1x16x8xbf16>
    %33 = vector.shape_cast %32 : vector<1x1x16x8xbf16> to vector<16x8xbf16>
    %cst_41 = arith.constant dense<0.000000e+00> : vector<256x8xf32>
    %34 = tpu.matmul %31, %33, %cst_41 {dimension_numbers = #tpu.dot_dimension_numbers<[1], [0], [0], [1], [0, 0, 1, 1], [], []>} : vector<256x16xbf16>, vector<16x8xbf16>, vector<256x8xf32> -> vector<256x8xf32>
    %cst_42 = arith.constant dense<0.000000e+00> : vector<8xf32>
    %35 = vector.multi_reduction <add>, %34, %cst_42 [0] : vector<256x8xf32> to vector<8xf32>
    %36 = vector.shape_cast %35 : vector<8xf32> to vector<1x8xf32>
    %37 = arith.addf %17, %36 : vector<1x8xf32>
    %38 = arith.mulf %34, %34 : vector<256x8xf32>
    %cst_43 = arith.constant dense<0.000000e+00> : vector<8xf32>
    %39 = vector.multi_reduction <add>, %38, %cst_43 [0] : vector<256x8xf32> to vector<8xf32>
    %40 = vector.shape_cast %39 : vector<8xf32> to vector<1x8xf32>
    %41 = arith.addf %21, %40 : vector<1x8xf32>
    %42 = tpu.concatenate %14, %34 in 1 : vector<256x8xf32>, vector<256x8xf32> -> vector<256x16xf32>
    %43 = vector.shape_cast %42 : vector<256x16xf32> to vector<16x16x16xf32>
    %c0_44 = arith.constant 0 : index
    %c0_45 = arith.constant 0 : index
    %c0_46 = arith.constant 0 : index
    %c0_47 = arith.constant 0 : index
    %c0_48 = arith.constant 0 : index
    %44 = vector.load %arg3[%c0_44, %c0_45, %c0_46, %c0_47, %c0_48] : memref<1x16x2x16x16xf32, #tpu.memory_space<vmem>>, vector<1x16x1x16x16xf32>
    %45 = vector.shape_cast %44 : vector<1x16x1x16x16xf32> to vector<16x16x16xf32>
    %46 = vector.shape_cast %43 : vector<16x16x16xf32> to vector<1x16x1x16x16xf32>
    tpu.vector_store %arg3[%c0_44, %c0_45, %c0_46, %c0_47, %c0_48], %46 {strides = array<i32>} : memref<1x16x2x16x16xf32, #tpu.memory_space<vmem>>, vector<1x16x1x16x16xf32>,
    %c0_49 = arith.constant 0 : index
    %c1_50 = arith.constant 1 : index
    %c0_51 = arith.constant 0 : index
    %c0_52 = arith.constant 0 : index
    %47 = vector.load %arg1[%c0_49, %c1_50, %c0_51, %c0_52] : memref<1x18x18x4xbf16, #tpu.memory_space<vmem>>, vector<1x16x16x4xbf16>
    %48 = vector.shape_cast %47 : vector<1x16x16x4xbf16> to vector<16x16x4xbf16>
    %c0_53 = arith.constant 0 : index
    %c1_54 = arith.constant 1 : index
    %c1_55 = arith.constant 1 : index
    %c0_56 = arith.constant 0 : index
    %49 = vector.load %arg1[%c0_53, %c1_54, %c1_55, %c0_56] : memref<1x18x18x4xbf16, #tpu.memory_space<vmem>>, vector<1x16x16x4xbf16>
    %50 = vector.shape_cast %49 : vector<1x16x16x4xbf16> to vector<16x16x4xbf16>
    %c0_57 = arith.constant 0 : index
    %c2_58 = arith.constant 2 : index
    %c0_59 = arith.constant 0 : index
    %c0_60 = arith.constant 0 : index
    %51 = vector.load %arg1[%c0_57, %c2_58, %c0_59, %c0_60] : memref<1x18x18x4xbf16, #tpu.memory_space<vmem>>, vector<1x16x16x4xbf16>
    %52 = vector.shape_cast %51 : vector<1x16x16x4xbf16> to vector<16x16x4xbf16>
    %c0_61 = arith.constant 0 : index
    %c2_62 = arith.constant 2 : index
    %c1_63 = arith.constant 1 : index
    %c0_64 = arith.constant 0 : index
    %53 = vector.load %arg1[%c0_61, %c2_62, %c1_63, %c0_64] : memref<1x18x18x4xbf16, #tpu.memory_space<vmem>>, vector<1x16x16x4xbf16>
    %54 = vector.shape_cast %53 : vector<1x16x16x4xbf16> to vector<16x16x4xbf16>
    %55 = tpu.concatenate %48, %50, %52, %54 in 2 : vector<16x16x4xbf16>, vector<16x16x4xbf16>, vector<16x16x4xbf16>, vector<16x16x4xbf16> -> vector<16x16x16xbf16>
    %56 = vector.shape_cast %55 : vector<16x16x16xbf16> to vector<256x16xbf16>
    %c1_65 = arith.constant 1 : index
    %c0_66 = arith.constant 0 : index
    %c0_67 = arith.constant 0 : index
    %c0_68 = arith.constant 0 : index
    %57 = vector.load %arg2[%c1_65, %c0_66, %c0_67, %c0_68] : memref<2x2x16x8xbf16, #tpu.memory_space<vmem>>, vector<1x1x16x8xbf16>
    %58 = vector.shape_cast %57 : vector<1x1x16x8xbf16> to vector<16x8xbf16>
    %cst_69 = arith.constant dense<0.000000e+00> : vector<256x8xf32>
    %59 = tpu.matmul %56, %58, %cst_69 {dimension_numbers = #tpu.dot_dimension_numbers<[1], [0], [0], [1], [0, 0, 1, 1], [], []>} : vector<256x16xbf16>, vector<16x8xbf16>, vector<256x8xf32> -> vector<256x8xf32>
    %cst_70 = arith.constant dense<0.000000e+00> : vector<8xf32>
    %60 = vector.multi_reduction <add>, %59, %cst_70 [0] : vector<256x8xf32> to vector<8xf32>
    %61 = vector.shape_cast %60 : vector<8xf32> to vector<1x8xf32>
    %62 = arith.addf %37, %61 : vector<1x8xf32>
    %63 = arith.mulf %59, %59 : vector<256x8xf32>
    %cst_71 = arith.constant dense<0.000000e+00> : vector<8xf32>
    %64 = vector.multi_reduction <add>, %63, %cst_71 [0] : vector<256x8xf32> to vector<8xf32>
    %65 = vector.shape_cast %64 : vector<8xf32> to vector<1x8xf32>
    %66 = arith.addf %41, %65 : vector<1x8xf32>
    %c0_72 = arith.constant 0 : index
    %c1_73 = arith.constant 1 : index
    %c1_74 = arith.constant 1 : index
    %c0_75 = arith.constant 0 : index
    %67 = vector.load %arg1[%c0_72, %c1_73, %c1_74, %c0_75] : memref<1x18x18x4xbf16, #tpu.memory_space<vmem>>, vector<1x16x16x4xbf16>
    %68 = vector.shape_cast %67 : vector<1x16x16x4xbf16> to vector<16x16x4xbf16>
    %c0_76 = arith.constant 0 : index
    %c1_77 = arith.constant 1 : index
    %c2_78 = arith.constant 2 : index
    %c0_79 = arith.constant 0 : index
    %69 = vector.load %arg1[%c0_76, %c1_77, %c2_78, %c0_79] : memref<1x18x18x4xbf16, #tpu.memory_space<vmem>>, vector<1x16x16x4xbf16>
    %70 = vector.shape_cast %69 : vector<1x16x16x4xbf16> to vector<16x16x4xbf16>
    %c0_80 = arith.constant 0 : index
    %c2_81 = arith.constant 2 : index
    %c1_82 = arith.constant 1 : index
    %c0_83 = arith.constant 0 : index
    %71 = vector.load %arg1[%c0_80, %c2_81, %c1_82, %c0_83] : memref<1x18x18x4xbf16, #tpu.memory_space<vmem>>, vector<1x16x16x4xbf16>
    %72 = vector.shape_cast %71 : vector<1x16x16x4xbf16> to vector<16x16x4xbf16>
    %c0_84 = arith.constant 0 : index
    %c2_85 = arith.constant 2 : index
    %c2_86 = arith.constant 2 : index
    %c0_87 = arith.constant 0 : index
    %73 = vector.load %arg1[%c0_84, %c2_85, %c2_86, %c0_87] : memref<1x18x18x4xbf16, #tpu.memory_space<vmem>>, vector<1x16x16x4xbf16>
    %74 = vector.shape_cast %73 : vector<1x16x16x4xbf16> to vector<16x16x4xbf16>
    %75 = tpu.concatenate %68, %70, %72, %74 in 2 : vector<16x16x4xbf16>, vector<16x16x4xbf16>, vector<16x16x4xbf16>, vector<16x16x4xbf16> -> vector<16x16x16xbf16>
    %76 = vector.shape_cast %75 : vector<16x16x16xbf16> to vector<256x16xbf16>
    %c1_88 = arith.constant 1 : index
    %c1_89 = arith.constant 1 : index
    %c0_90 = arith.constant 0 : index
    %c0_91 = arith.constant 0 : index
    %77 = vector.load %arg2[%c1_88, %c1_89, %c0_90, %c0_91] : memref<2x2x16x8xbf16, #tpu.memory_space<vmem>>, vector<1x1x16x8xbf16>
    %78 = vector.shape_cast %77 : vector<1x1x16x8xbf16> to vector<16x8xbf16>
    %cst_92 = arith.constant dense<0.000000e+00> : vector<256x8xf32>
    %79 = tpu.matmul %76, %78, %cst_92 {dimension_numbers = #tpu.dot_dimension_numbers<[1], [0], [0], [1], [0, 0, 1, 1], [], []>} : vector<256x16xbf16>, vector<16x8xbf16>, vector<256x8xf32> -> vector<256x8xf32>
    %cst_93 = arith.constant dense<0.000000e+00> : vector<8xf32>
    %80 = vector.multi_reduction <add>, %79, %cst_93 [0] : vector<256x8xf32> to vector<8xf32>
    %81 = vector.shape_cast %80 : vector<8xf32> to vector<1x8xf32>
    %82 = arith.addf %62, %81 : vector<1x8xf32>
    %83 = arith.mulf %79, %79 : vector<256x8xf32>
    %cst_94 = arith.constant dense<0.000000e+00> : vector<8xf32>
    %84 = vector.multi_reduction <add>, %83, %cst_94 [0] : vector<256x8xf32> to vector<8xf32>
    %85 = vector.shape_cast %84 : vector<8xf32> to vector<1x8xf32>
    %86 = arith.addf %66, %85 : vector<1x8xf32>
    %87 = tpu.concatenate %59, %79 in 1 : vector<256x8xf32>, vector<256x8xf32> -> vector<256x16xf32>
    %88 = vector.shape_cast %87 : vector<256x16xf32> to vector<16x16x16xf32>
    %c0_95 = arith.constant 0 : index
    %c0_96 = arith.constant 0 : index
    %c1_97 = arith.constant 1 : index
    %c0_98 = arith.constant 0 : index
    %c0_99 = arith.constant 0 : index
    %89 = vector.load %arg3[%c0_95, %c0_96, %c1_97, %c0_98, %c0_99] : memref<1x16x2x16x16xf32, #tpu.memory_space<vmem>>, vector<1x16x1x16x16xf32>
    %90 = vector.shape_cast %89 : vector<1x16x1x16x16xf32> to vector<16x16x16xf32>
    %91 = vector.shape_cast %88 : vector<16x16x16xf32> to vector<1x16x1x16x16xf32>
    tpu.vector_store %arg3[%c0_95, %c0_96, %c1_97, %c0_98, %c0_99], %91 {strides = array<i32>} : memref<1x16x2x16x16xf32, #tpu.memory_space<vmem>>, vector<1x16x1x16x16xf32>,
    %cst_100 = arith.constant 9.765625E-4 : f32
    %92 = vector.broadcast %cst_100 : f32 to vector<1x8xf32>
    %93 = arith.mulf %82, %92 : vector<1x8xf32>
    %cst_101 = arith.constant 9.765625E-4 : f32
    %94 = vector.broadcast %cst_101 : f32 to vector<1x8xf32>
    %95 = arith.mulf %86, %94 : vector<1x8xf32>
    %96 = arith.mulf %93, %93 : vector<1x8xf32>
    %97 = arith.subf %95, %96 : vector<1x8xf32>
    %cst_102 = arith.constant 9.99999974E-6 : f32
    %98 = vector.broadcast %cst_102 : f32 to vector<1x8xf32>
    %99 = arith.addf %97, %98 : vector<1x8xf32>
    %100 = math.rsqrt %99 : vector<1x8xf32>
    %101 = tpu.concatenate %100, %100 in 1 : vector<1x8xf32>, vector<1x8xf32> -> vector<1x16xf32>
    %102 = vector.shape_cast %101 : vector<1x16xf32> to vector<1x1x16xf32>
    %103 = arith.mulf %93, %100 : vector<1x8xf32>
    %104 = arith.mulf %93, %100 : vector<1x8xf32>
    %105 = tpu.concatenate %103, %104 in 1 : vector<1x8xf32>, vector<1x8xf32> -> vector<1x16xf32>
    %106 = vector.shape_cast %105 : vector<1x16xf32> to vector<1x1x16xf32>
    %c0_103 = arith.constant 0 : index
    %c0_104 = arith.constant 0 : index
    %c0_105 = arith.constant 0 : index
    %c0_106 = arith.constant 0 : index
    %c0_107 = arith.constant 0 : index
    %107 = vector.load %arg3[%c0_103, %c0_104, %c0_105, %c0_106, %c0_107] : memref<1x16x2x16x16xf32, #tpu.memory_space<vmem>>, vector<1x16x1x16x16xf32>
    %108 = vector.shape_cast %107 : vector<1x16x1x16x16xf32> to vector<16x16x16xf32>
    %109 = vector.broadcast %102 : vector<1x1x16xf32> to vector<16x16x16xf32>
    %110 = arith.mulf %108, %109 : vector<16x16x16xf32>
    %111 = vector.broadcast %106 : vector<1x1x16xf32> to vector<16x16x16xf32>
    %112 = arith.subf %110, %111 : vector<16x16x16xf32>
    %cst_108 = arith.constant 0.000000e+00 : f32
    %113 = vector.broadcast %cst_108 : f32 to vector<16x16x16xf32>
    %114 = arith.maximumf %112, %113 : vector<16x16x16xf32>
    %c0_109 = arith.constant 0 : index
    %c0_110 = arith.constant 0 : index
    %c0_111 = arith.constant 0 : index
    %c0_112 = arith.constant 0 : index
    %c0_113 = arith.constant 0 : index
    %115 = vector.load %arg3[%c0_109, %c0_110, %c0_111, %c0_112, %c0_113] : memref<1x16x2x16x16xf32, #tpu.memory_space<vmem>>, vector<1x16x1x16x16xf32>
    %116 = vector.shape_cast %115 : vector<1x16x1x16x16xf32> to vector<16x16x16xf32>
    %117 = vector.shape_cast %114 : vector<16x16x16xf32> to vector<1x16x1x16x16xf32>
    tpu.vector_store %arg3[%c0_109, %c0_110, %c0_111, %c0_112, %c0_113], %117 {strides = array<i32>} : memref<1x16x2x16x16xf32, #tpu.memory_space<vmem>>, vector<1x16x1x16x16xf32>,
    %c0_114 = arith.constant 0 : index
    %c0_115 = arith.constant 0 : index
    %c1_116 = arith.constant 1 : index
    %c0_117 = arith.constant 0 : index
    %c0_118 = arith.constant 0 : index
    %118 = vector.load %arg3[%c0_114, %c0_115, %c1_116, %c0_117, %c0_118] : memref<1x16x2x16x16xf32, #tpu.memory_space<vmem>>, vector<1x16x1x16x16xf32>
    %119 = vector.shape_cast %118 : vector<1x16x1x16x16xf32> to vector<16x16x16xf32>
    %120 = vector.broadcast %102 : vector<1x1x16xf32> to vector<16x16x16xf32>
    %121 = arith.mulf %119, %120 : vector<16x16x16xf32>
    %122 = vector.broadcast %106 : vector<1x1x16xf32> to vector<16x16x16xf32>
    %123 = arith.subf %121, %122 : vector<16x16x16xf32>
    %cst_119 = arith.constant 0.000000e+00 : f32
    %124 = vector.broadcast %cst_119 : f32 to vector<16x16x16xf32>
    %125 = arith.maximumf %123, %124 : vector<16x16x16xf32>
    %c0_120 = arith.constant 0 : index
    %c0_121 = arith.constant 0 : index
    %c1_122 = arith.constant 1 : index
    %c0_123 = arith.constant 0 : index
    %c0_124 = arith.constant 0 : index
    %126 = vector.load %arg3[%c0_120, %c0_121, %c1_122, %c0_123, %c0_124] : memref<1x16x2x16x16xf32, #tpu.memory_space<vmem>>, vector<1x16x1x16x16xf32>
    %127 = vector.shape_cast %126 : vector<1x16x1x16x16xf32> to vector<16x16x16xf32>
    %128 = vector.shape_cast %125 : vector<16x16x16xf32> to vector<1x16x1x16x16xf32>
    tpu.vector_store %arg3[%c0_120, %c0_121, %c1_122, %c0_123, %c0_124], %128 {strides = array<i32>} : memref<1x16x2x16x16xf32, #tpu.memory_space<vmem>>, vector<1x16x1x16x16xf32>,
    return
  }
  func.func @transform_0(%arg0: i32) -> (i32, i32, i32, i32) {
    %c0_i32 = arith.constant 0 : i32
    %c0_i32_0 = arith.constant 0 : i32
    %c0_i32_1 = arith.constant 0 : i32
    %c0_i32_2 = arith.constant 0 : i32
    return %arg0, %c0_i32, %c0_i32_0, %c0_i32_1 : i32, i32, i32, i32
  }
  func.func @transform_1(%arg0: i32) -> (i32, i32, i32, i32) {
    %c0_i32 = arith.constant 0 : i32
    %c0_i32_0 = arith.constant 0 : i32
    %c0_i32_1 = arith.constant 0 : i32
    %c0_i32_2 = arith.constant 0 : i32
    %c0_i32_3 = arith.constant 0 : i32
    return %c0_i32, %c0_i32_0, %c0_i32_1, %c0_i32_2 : i32, i32, i32, i32
  }
  func.func @transform_2(%arg0: i32) -> (i32, i32, i32, i32, i32) {
    %c0_i32 = arith.constant 0 : i32
    %c0_i32_0 = arith.constant 0 : i32
    %c0_i32_1 = arith.constant 0 : i32
    %c0_i32_2 = arith.constant 0 : i32
    %c0_i32_3 = arith.constant 0 : i32
    return %arg0, %c0_i32, %c0_i32_0, %c0_i32_1, %c0_i32_2 : i32, i32, i32, i32, i32
  }
}

</mosaic_0001>

<llo_original>
// kernel: unet_up_forward.1
$region0: #{unet_up_forward.1}
  #allocation0 [shape = 'u32[]', space=smem, size = 0x4, offset = 0x4, fixed_abs, tag = 'smem constant byte address 0x4 - core index']
  #allocation1 [shape = 'u32[144,128]{1,0:T(1,128)}', space=vmem, size = 0x12000, scoped, tag = 'internal scratch']
  %s0 = inlined_call_operand.vmem [shape: bf16[2,18,18,4], index: 0, kind: input, shape index: {}]
  %s1 = inlined_call_operand.vmem [shape: bf16[2,2,16,8], index: 1, kind: input, shape index: {}]
  %s2 = inlined_call_operand.vmem [shape: f32[2,16,2,16,16], index: 2, kind: output, shape index: {}]
  %s3 = sld [smem:[#allocation0]]
  $region41: #{unet_up_forward.1} parent=0
    _
  %s5 = ssub.s32 1, %s3
  %s6 = scalar_select 0, %s5, %s3
  loop: start=0, step=1, limit=4
  $region2: #{unet_up_forward.1} parent=0 // loop_pre_header
    _
  $region3: #{unet_up_forward.1} parent=0 // loop_header
    %s8 = sphi 0, %s12
    %p9 = scmp.ge.s32.totalorder %s8, 4
    %s18 = sphi 0, %s20
    %s21 = sphi 0, %s18
    %s22 = sphi 0, %s21
    %s38 = sphi 0, %s22
    %s42 = sphi 0, %s42
    %s44 = sphi 0, %s42
    %s45 = sphi 0, %s44
    %s59 = sphi 0, %s45
    %s65 = sphi 0, %s67
    %s68 = sphi 0, %s65
    %s69 = sphi 0, %s68
    %s85 = sphi 0, %s69
  $region4: #{unet_up_forward.1} parent=0 // loop_header_branch
    %11 = sbr.rel (%p9) target = $region8
  $region5: #{unet_up_forward.1} parent=0 // loop_body
    %s13 = ssub.s32 %s8, 1
    %s14 = ssub.s32 %s8, 2
    %s15 = sadd.s32 %s8, 1
    %s16 = ssub.s32 %s8, %s15
    %p17 = scmp.eq.s32.totalorder %s16, 0
    %s19 = sadd.s32 %s18, 1
    %s20 = scalar_select %p17, %s18, %s19
    %p23 = pneg %p17
    %p24 = scmp.eq.s32.totalorder %s8, 1
    %p25 = por %p23, %p24
    %p26 = scmp.ne.s32.totalorder %s18, %s21
    %p27 = scmp.eq.s32.totalorder %s8, 0
    %p28 = por %p26, %p27
    %p29 = scmp.ne.s32.totalorder %s18, %s21
    %p30 = scmp.eq.s32.totalorder %s13, 1
    %p31 = por %p29, %p30
    %p32 = scmp.ne.s32.totalorder %s21, %s22
    %p33 = scmp.eq.s32.totalorder %s13, 0
    %p34 = por %p32, %p33
    %p35 = scmp.ne.s32.totalorder %s21, %s22
    %p36 = scmp.eq.s32.totalorder %s14, 1
    %p37 = por %p35, %p36
    %p39 = scmp.ne.s32.totalorder %s22, %s38
    %p40 = scmp.eq.s32.totalorder %s14, 0
    %p41 = por %p39, %p40
    %s43 = sadd.s32 %s42, 1
    %p46 = scmp.eq.s32.totalorder %s8, 1
    %p47 = scmp.ne.s32.totalorder %s42, %s44
    %p48 = scmp.eq.s32.totalorder %s8, 0
    %p49 = por %p47, %p48
    %p50 = scmp.ne.s32.totalorder %s42, %s44
    %p51 = scmp.eq.s32.totalorder %s13, 1
    %p52 = por %p50, %p51
    %p53 = scmp.ne.s32.totalorder %s44, %s45
    %p54 = scmp.eq.s32.totalorder %s13, 0
    %p55 = por %p53, %p54
    %p56 = scmp.ne.s32.totalorder %s44, %s45
    %p57 = scmp.eq.s32.totalorder %s14, 1
    %p58 = por %p56, %p57
    %p60 = scmp.ne.s32.totalorder %s45, %s59
    %p61 = scmp.eq.s32.totalorder %s14, 0
    %p62 = por %p60, %p61
    %s63 = ssub.s32 %s8, %s15
    %p64 = scmp.eq.s32.totalorder %s63, 0
    %s66 = sadd.s32 %s65, 1
    %s67 = scalar_select %p64, %s65, %s66
    %p70 = pneg %p64
    %p71 = scmp.eq.s32.totalorder %s8, 1
    %p72 = por %p70, %p71
    %p73 = scmp.ne.s32.totalorder %s65, %s68
    %p74 = scmp.eq.s32.totalorder %s8, 0
    %p75 = por %p73, %p74
    %p76 = scmp.ne.s32.totalorder %s65, %s68
    %p77 = scmp.eq.s32.totalorder %s13, 1
    %p78 = por %p76, %p77
    %p79 = scmp.ne.s32.totalorder %s68, %s69
    %p80 = scmp.eq.s32.totalorder %s13, 0
    %p81 = por %p79, %p80
    %p82 = scmp.ne.s32.totalorder %s68, %s69
    %p83 = scmp.eq.s32.totalorder %s14, 1
    %p84 = por %p82, %p83
    %p86 = scmp.ne.s32.totalorder %s69, %s85
    %p87 = scmp.eq.s32.totalorder %s14, 0
    %p88 = por %p86, %p87
    %p89 = scmp.le.s32.totalorder 1, %s8
    %p90 = scmp.lt.s32.totalorder %s8, 3
    %p91 = pnand %p89, %p90
    %p92 = pneg %p91
    // Predicated region
    $region9: #{unet_up_forward.1} parent=5 // pred_check
      _
    $region10: #{unet_up_forward.1} parent=5 // pred_check_branch
      %94 = sbr.rel (%p91) target = $region12
    $region11: #{unet_up_forward.1} parent=5 // pred_region
      %s95 = ssub.s32 %s8, 1
      // Predicated region
      $region13: #{unet_up_forward.1} parent=11 // pred_check
        %p96 = pneg %p55
      $region14: #{unet_up_forward.1} parent=11 // pred_check_branch
        %98 = sbr.rel (%p96) target = $region16
      $region15: #{unet_up_forward.1} parent=11 // pred_region
        _
      $region16: #{unet_up_forward.1} parent=11 // pred_fallthru
        _
    $region12: #{unet_up_forward.1} parent=5 // pred_fallthru
      _
    %p99 = scmp.lt.s32.totalorder %s8, 2
    // Predicated region
    $region17: #{unet_up_forward.1} parent=5 // pred_check
      %p100 = pneg %p99
    $region18: #{unet_up_forward.1} parent=5 // pred_check_branch
      %102 = sbr.rel (%p100) target = $region20
    $region19: #{unet_up_forward.1} parent=5 // pred_region
      // Predicated region
      $region21: #{unet_up_forward.1} parent=19 // pred_check
        %p103 = pneg %p28
      $region22: #{unet_up_forward.1} parent=19 // pred_check_branch
        %105 = sbr.rel (%p103) target = $region24
      $region23: #{unet_up_forward.1} parent=19 // pred_region
        %p106 = scmp.lt.s32.totalorder %s8, 1
        %s107 = scalar_select %p106, %s8, 1
        %s108 = smul.addr %s107, 54
        %s109 = smul.addr %s108, 4
        %s110 = scalar_lea.vmem %s0, %s109
      $region24: #{unet_up_forward.1} parent=19 // pred_fallthru
        _
    $region20: #{unet_up_forward.1} parent=5 // pred_fallthru
      _
    %p111 = scmp.le.s32.totalorder 1, %s8
    %p112 = scmp.lt.s32.totalorder %s8, 3
    %p113 = pnand %p111, %p112
    %p114 = pneg %p113
    // Predicated region
    $region25: #{unet_up_forward.1} parent=5 // pred_check
      _
    $region26: #{unet_up_forward.1} parent=5 // pred_check_branch
      %116 = sbr.rel (%p113) target = $region28
    $region27: #{unet_up_forward.1} parent=5 // pred_region
      %s117 = ssub.s32 %s8, 1
      %p118 = scmp.lt.s32.totalorder %s13, 1
      %s119 = scalar_select %p118, %s13, 1
      %s120 = smul.addr %s119, 54
      %s121 = smul.addr %s120, 4
      %s122 = scalar_lea.vmem %s0, %s121
      %p123 = pneg %p34
      %p124 = pneg %p31
      %p125 = pneg %p55
      %p126 = pneg %p52
      %p127 = pneg %p81
      %p128 = pneg %p78
      %p129 = scmp.lt.s32.totalorder %s13, 1
      %s130 = scalar_select %p129, %s13, 1
      %s131 = smul.addr %s130, 64
      %s132 = smul.addr %s131, 8
      %s133 = scalar_lea.vmem %s2, %s132
      %p134 = scmp.lt.s32.totalorder %s13, 1
      %s135 = scalar_select %p134, %s13, 1
      %s136 = smul.addr %s135, 54
      %s137 = smul.addr %s136, 4
      %s138 = scalar_lea.vmem %s0, %s137
      %p139 = scmp.lt.s32.totalorder %s13, 1
      %s140 = scalar_select %p139, %s13, 1
      %s141 = smul.addr %s140, 64
      %s142 = smul.addr %s141, 8
      %s143 = scalar_lea.vmem %s2, %s142
      %v145 = vld [vmem:[%s138] sm:$0xf]
      %v146 = vld [vmem:[%s138 + $0x4] sm:$0xf]
      %v147 = vld [vmem:[%s138 + $0xc] sm:$0xf]
      %v148 = vld [vmem:[%s138 + $0x10] sm:$0xf]
      %v149 = vld [vmem:[%s138 + $0x18] sm:$0xf]
      %v150 = vld [vmem:[%s138 + $0x1c] sm:$0xf]
      %v151 = vld [vmem:[%s138 + $0x24] sm:$0xf]
      %v152 = vld [vmem:[%s138 + $0x28] sm:$0xf]
      %v153 = vld [vmem:[%s138 + $0x30] sm:$0xf]
      %v154 = vld [vmem:[%s138 + $0x34] sm:$0xf]
      %v155 = vld [vmem:[%s138 + $0x3c] sm:$0xf]
      %v156 = vld [vmem:[%s138 + $0x40] sm:$0xf]
      %v157 = vld [vmem:[%s138 + $0x48] sm:$0xf]
      %v158 = vld [vmem:[%s138 + $0x4c] sm:$0xf]
      %v159 = vld [vmem:[%s138 + $0x54] sm:$0xf]
      %v160 = vld [vmem:[%s138 + $0x58] sm:$0xf]
      %v161 = vld [vmem:[%s138 + $0x60] sm:$0xf]
      %v162 = vld [vmem:[%s138 + $0x64] sm:$0xf]
      %v163 = vld [vmem:[%s138 + $0x6c] sm:$0xf]
      %v164 = vld [vmem:[%s138 + $0x70] sm:$0xf]
      %v165 = vld [vmem:[%s138 + $0x78] sm:$0xf]
      %v166 = vld [vmem:[%s138 + $0x7c] sm:$0xf]
      %v167 = vld [vmem:[%s138 + $0x84] sm:$0xf]
      %v168 = vld [vmem:[%s138 + $0x88] sm:$0xf]
      %v169 = vld [vmem:[%s138 + $0x90] sm:$0xf]
      %v170 = vld [vmem:[%s138 + $0x94] sm:$0xf]
      %v171 = vld [vmem:[%s138 + $0x9c] sm:$0xf]
      %v172 = vld [vmem:[%s138 + $0xa0] sm:$0xf]
      %v173 = vld [vmem:[%s138 + $0xa8] sm:$0xf]
      %v174 = vld [vmem:[%s138 + $0xac] sm:$0xf]
      %v175 = vld [vmem:[%s138 + $0xb4] sm:$0xf]
      %v176 = vld [vmem:[%s138 + $0xb8] sm:$0xf]
      %v177 = vld [vmem:[%s138 + $0x8] sm:$0x1]
      %v178 = vld [vmem:[%s138 + $0x14] sm:$0x1]
      %v179 = vld [vmem:[%s138 + $0x20] sm:$0x1]
      %v180 = vld [vmem:[%s138 + $0x2c] sm:$0x1]
      %v181 = vld [vmem:[%s138 + $0x38] sm:$0x1]
      %v182 = vld [vmem:[%s138 + $0x44] sm:$0x1]
      %v183 = vld [vmem:[%s138 + $0x50] sm:$0x1]
      %v184 = vld [vmem:[%s138 + $0x5c] sm:$0x1]
      %v185 = vld [vmem:[%s138 + $0x68] sm:$0x1]
      %v186 = vld [vmem:[%s138 + $0x74] sm:$0x1]
      %v187 = vld [vmem:[%s138 + $0x80] sm:$0x1]
      %v188 = vld [vmem:[%s138 + $0x8c] sm:$0x1]
      %v189 = vld [vmem:[%s138 + $0x98] sm:$0x1]
      %v190 = vld [vmem:[%s138 + $0xa4] sm:$0x1]
      %v191 = vld [vmem:[%s138 + $0xb0] sm:$0x1]
      %v192 = vld [vmem:[%s138 + $0xbc] sm:$0x1]
      %s193 = scalar_lea.vmem %s138, 12
      %v194 = vld [vmem:[%s193] sm:$0xf]
      %v195 = vld [vmem:[%s193 + $0x4] sm:$0xf]
      %v196 = vld [vmem:[%s193 + $0xc] sm:$0xf]
      %v197 = vld [vmem:[%s193 + $0x10] sm:$0xf]
      %v198 = vld [vmem:[%s193 + $0x18] sm:$0xf]
      %v199 = vld [vmem:[%s193 + $0x1c] sm:$0xf]
      %v200 = vld [vmem:[%s193 + $0x24] sm:$0xf]
      %v201 = vld [vmem:[%s193 + $0x28] sm:$0xf]
      %v202 = vld [vmem:[%s193 + $0x30] sm:$0xf]
      %v203 = vld [vmem:[%s193 + $0x34] sm:$0xf]
      %v204 = vld [vmem:[%s193 + $0x3c] sm:$0xf]
      %v205 = vld [vmem:[%s193 + $0x40] sm:$0xf]
      %v206 = vld [vmem:[%s193 + $0x48] sm:$0xf]
      %v207 = vld [vmem:[%s193 + $0x4c] sm:$0xf]
      %v208 = vld [vmem:[%s193 + $0x54] sm:$0xf]
      %v209 = vld [vmem:[%s193 + $0x58] sm:$0xf]
      %v210 = vld [vmem:[%s193 + $0x60] sm:$0xf]
      %v211 = vld [vmem:[%s193 + $0x64] sm:$0xf]
      %v212 = vld [vmem:[%s193 + $0x6c] sm:$0xf]
      %v213 = vld [vmem:[%s193 + $0x70] sm:$0xf]
      %v214 = vld [vmem:[%s193 + $0x78] sm:$0xf]
      %v215 = vld [vmem:[%s193 + $0x7c] sm:$0xf]
      %v216 = vld [vmem:[%s193 + $0x84] sm:$0xf]
      %v217 = vld [vmem:[%s193 + $0x88] sm:$0xf]
      %v218 = vld [vmem:[%s193 + $0x90] sm:$0xf]
      %v219 = vld [vmem:[%s193 + $0x94] sm:$0xf]
      %v220 = vld [vmem:[%s193 + $0x9c] sm:$0xf]
      %v221 = vld [vmem:[%s193 + $0xa0] sm:$0xf]
      %v222 = vld [vmem:[%s193 + $0xa8] sm:$0xf]
      %v223 = vld [vmem:[%s193 + $0xac] sm:$0xf]
      %v224 = vld [vmem:[%s193 + $0xb4] sm:$0xf]
      %v225 = vld [vmem:[%s193 + $0xb8] sm:$0xf]
      %v226 = vld [vmem:[%s193 + $0x8] sm:$0x1]
      %v227 = vld [vmem:[%s193 + $0x14] sm:$0x1]
      %v228 = vld [vmem:[%s193 + $0x20] sm:$0x1]
      %v229 = vld [vmem:[%s193 + $0x2c] sm:$0x1]
      %v230 = vld [vmem:[%s193 + $0x38] sm:$0x1]
      %v231 = vld [vmem:[%s193 + $0x44] sm:$0x1]
      %v232 = vld [vmem:[%s193 + $0x50] sm:$0x1]
      %v233 = vld [vmem:[%s193 + $0x5c] sm:$0x1]
      %v234 = vld [vmem:[%s193 + $0x68] sm:$0x1]
      %v235 = vld [vmem:[%s193 + $0x74] sm:$0x1]
      %v236 = vld [vmem:[%s193 + $0x80] sm:$0x1]
      %v237 = vld [vmem:[%s193 + $0x8c] sm:$0x1]
      %v238 = vld [vmem:[%s193 + $0x98] sm:$0x1]
      %v239 = vld [vmem:[%s193 + $0xa4] sm:$0x1]
      %v240 = vld [vmem:[%s193 + $0xb0] sm:$0x1]
      %v241 = vld [vmem:[%s193 + $0xbc] sm:$0x1]
      %v274 = vunpack.c.l.b16 %v145
      %v275 = vunpack.c.l.b16 %v146
      %v276 = vunpack.c.l.b16 %v147
      %v277 = vunpack.c.l.b16 %v148
      %v278 = vunpack.c.l.b16 %v149
      %v279 = vunpack.c.l.b16 %v150
      %v280 = vunpack.c.l.b16 %v151
      %v281 = vunpack.c.l.b16 %v152
      %v282 = vunpack.c.l.b16 %v153
      %v283 = vunpack.c.l.b16 %v154
      %v284 = vunpack.c.l.b16 %v155
      %v285 = vunpack.c.l.b16 %v156
      %v286 = vunpack.c.l.b16 %v157
      %v287 = vunpack.c.l.b16 %v158
      %v288 = vunpack.c.l.b16 %v159
      %v289 = vunpack.c.l.b16 %v160
      %v290 = vunpack.c.l.b16 %v161
      %v291 = vunpack.c.l.b16 %v162
      %v292 = vunpack.c.l.b16 %v163
      %v293 = vunpack.c.l.b16 %v164
      %v294 = vunpack.c.l.b16 %v165
      %v295 = vunpack.c.l.b16 %v166
      %v296 = vunpack.c.l.b16 %v167
      %v297 = vunpack.c.l.b16 %v168
      %v298 = vunpack.c.l.b16 %v169
      %v299 = vunpack.c.l.b16 %v170
      %v300 = vunpack.c.l.b16 %v171
      %v301 = vunpack.c.l.b16 %v172
      %v302 = vunpack.c.l.b16 %v173
      %v303 = vunpack.c.l.b16 %v174
      %v304 = vunpack.c.l.b16 %v175
      %v305 = vunpack.c.l.b16 %v176
      %v306 = vpack.c.b16 %v275, %v274
      %v307 = vpack.c.b16 %v277, %v276
      %v308 = vpack.c.b16 %v279, %v278
      %v309 = vpack.c.b16 %v281, %v280
      %v310 = vpack.c.b16 %v283, %v282
      %v311 = vpack.c.b16 %v285, %v284
      %v312 = vpack.c.b16 %v287, %v286
      %v313 = vpack.c.b16 %v289, %v288
      %v314 = vpack.c.b16 %v291, %v290
      %v315 = vpack.c.b16 %v293, %v292
      %v316 = vpack.c.b16 %v295, %v294
      %v317 = vpack.c.b16 %v297, %v296
      %v318 = vpack.c.b16 %v299, %v298
      %v319 = vpack.c.b16 %v301, %v300
      %v320 = vpack.c.b16 %v303, %v302
      %v321 = vpack.c.b16 %v305, %v304
      %v338 = vunpack.c.l.b16 %v177
      %v339 = vunpack.c.l.b16 %v178
      %v340 = vunpack.c.l.b16 %v179
      %v341 = vunpack.c.l.b16 %v180
      %v342 = vunpack.c.l.b16 %v181
      %v343 = vunpack.c.l.b16 %v182
      %v344 = vunpack.c.l.b16 %v183
      %v345 = vunpack.c.l.b16 %v184
      %v346 = vunpack.c.l.b16 %v185
      %v347 = vunpack.c.l.b16 %v186
      %v348 = vunpack.c.l.b16 %v187
      %v349 = vunpack.c.l.b16 %v188
      %v350 = vunpack.c.l.b16 %v189
      %v351 = vunpack.c.l.b16 %v190
      %v352 = vunpack.c.l.b16 %v191
      %v353 = vunpack.c.l.b16 %v192
      %v354 = vpack.c.b16 %v338, %v338
      %v355 = vpack.c.b16 %v339, %v339
      %v356 = vpack.c.b16 %v340, %v340
      %v357 = vpack.c.b16 %v341, %v341
      %v358 = vpack.c.b16 %v342, %v342
      %v359 = vpack.c.b16 %v343, %v343
      %v360 = vpack.c.b16 %v344, %v344
      %v361 = vpack.c.b16 %v345, %v345
      %v362 = vpack.c.b16 %v346, %v346
      %v363 = vpack.c.b16 %v347, %v347
      %v364 = vpack.c.b16 %v348, %v348
      %v365 = vpack.c.b16 %v349, %v349
      %v366 = vpack.c.b16 %v350, %v350
      %v367 = vpack.c.b16 %v351, %v351
      %v368 = vpack.c.b16 %v352, %v352
      %v369 = vpack.c.b16 %v353, %v353
      %vm370 = vsmask.f32 7424
      %v372 = vshrl.u32 %v306, 16
      %v374 = vshll.u32 %v306, 16
      %v376 = vrot.slane %v374, 1
      %v377 = vor.u32 %v372, %v376
      %v379 = vshll.u32 %v354, 16
      %v381 = vrot.slane %v379, 1
      %v382 = vsel %vm370, %v377, %v381
      %v384 = vshrl.u32 %v307, 16
      %v386 = vshll.u32 %v307, 16
      %v388 = vrot.slane %v386, 1
      %v389 = vor.u32 %v384, %v388
      %v391 = vshll.u32 %v355, 16
      %v393 = vrot.slane %v391, 1
      %v394 = vsel %vm370, %v389, %v393
      %v396 = vshrl.u32 %v308, 16
      %v398 = vshll.u32 %v308, 16
      %v400 = vrot.slane %v398, 1
      %v401 = vor.u32 %v396, %v400
      %v403 = vshll.u32 %v356, 16
      %v405 = vrot.slane %v403, 1
      %v406 = vsel %vm370, %v401, %v405
      %v408 = vshrl.u32 %v309, 16
      %v410 = vshll.u32 %v309, 16
      %v412 = vrot.slane %v410, 1
      %v413 = vor.u32 %v408, %v412
      %v415 = vshll.u32 %v357, 16
      %v417 = vrot.slane %v415, 1
      %v418 = vsel %vm370, %v413, %v417
      %v420 = vshrl.u32 %v310, 16
      %v422 = vshll.u32 %v310, 16
      %v424 = vrot.slane %v422, 1
      %v425 = vor.u32 %v420, %v424
      %v427 = vshll.u32 %v358, 16
      %v429 = vrot.slane %v427, 1
      %v430 = vsel %vm370, %v425, %v429
      %v432 = vshrl.u32 %v311, 16
      %v434 = vshll.u32 %v311, 16
      %v436 = vrot.slane %v434, 1
      %v437 = vor.u32 %v432, %v436
      %v439 = vshll.u32 %v359, 16
      %v441 = vrot.slane %v439, 1
      %v442 = vsel %vm370, %v437, %v441
      %v444 = vshrl.u32 %v312, 16
      %v446 = vshll.u32 %v312, 16
      %v448 = vrot.slane %v446, 1
      %v449 = vor.u32 %v444, %v448
      %v451 = vshll.u32 %v360, 16
      %v453 = vrot.slane %v451, 1
      %v454 = vsel %vm370, %v449, %v453
      %v456 = vshrl.u32 %v313, 16
      %v458 = vshll.u32 %v313, 16
      %v460 = vrot.slane %v458, 1
      %v461 = vor.u32 %v456, %v460
      %v463 = vshll.u32 %v361, 16
      %v465 = vrot.slane %v463, 1
      %v466 = vsel %vm370, %v461, %v465
      %v468 = vshrl.u32 %v314, 16
      %v470 = vshll.u32 %v314, 16
      %v472 = vrot.slane %v470, 1
      %v473 = vor.u32 %v468, %v472
      %v475 = vshll.u32 %v362, 16
      %v477 = vrot.slane %v475, 1
      %v478 = vsel %vm370, %v473, %v477
      %v480 = vshrl.u32 %v315, 16
      %v482 = vshll.u32 %v315, 16
      %v484 = vrot.slane %v482, 1
      %v485 = vor.u32 %v480, %v484
      %v487 = vshll.u32 %v363, 16
      %v489 = vrot.slane %v487, 1
      %v490 = vsel %vm370, %v485, %v489
      %v492 = vshrl.u32 %v316, 16
      %v494 = vshll.u32 %v316, 16
      %v496 = vrot.slane %v494, 1
      %v497 = vor.u32 %v492, %v496
      %v499 = vshll.u32 %v364, 16
      %v501 = vrot.slane %v499, 1
      %v502 = vsel %vm370, %v497, %v501
      %v504 = vshrl.u32 %v317, 16
      %v506 = vshll.u32 %v317, 16
      %v508 = vrot.slane %v506, 1
      %v509 = vor.u32 %v504, %v508
      %v511 = vshll.u32 %v365, 16
      %v513 = vrot.slane %v511, 1
      %v514 = vsel %vm370, %v509, %v513
      %v516 = vshrl.u32 %v318, 16
      %v518 = vshll.u32 %v318, 16
      %v520 = vrot.slane %v518, 1
      %v521 = vor.u32 %v516, %v520
      %v523 = vshll.u32 %v366, 16
      %v525 = vrot.slane %v523, 1
      %v526 = vsel %vm370, %v521, %v525
      %v528 = vshrl.u32 %v319, 16
      %v530 = vshll.u32 %v319, 16
      %v532 = vrot.slane %v530, 1
      %v533 = vor.u32 %v528, %v532
      %v535 = vshll.u32 %v367, 16
      %v537 = vrot.slane %v535, 1
      %v538 = vsel %vm370, %v533, %v537
      %v540 = vshrl.u32 %v320, 16
      %v542 = vshll.u32 %v320, 16
      %v544 = vrot.slane %v542, 1
      %v545 = vor.u32 %v540, %v544
      %v547 = vshll.u32 %v368, 16
      %v549 = vrot.slane %v547, 1
      %v550 = vsel %vm370, %v545, %v549
      %v552 = vshrl.u32 %v321, 16
      %v554 = vshll.u32 %v321, 16
      %v556 = vrot.slane %v554, 1
      %v557 = vor.u32 %v552, %v556
      %v559 = vshll.u32 %v369, 16
      %v561 = vrot.slane %v559, 1
      %v562 = vsel %vm370, %v557, %v561
      %563 = vrot.lane.b32.xlu0 %v382, 4
      %v564 = vpop.permute.xlu0 %563
      %565 = vrot.lane.b32.xlu0 %v394, 4
      %v566 = vpop.permute.xlu0 %565
      %567 = vrot.lane.b32.xlu0 %v406, 4
      %v568 = vpop.permute.xlu0 %567
      %569 = vrot.lane.b32.xlu0 %v418, 4
      %v570 = vpop.permute.xlu0 %569
      %571 = vrot.lane.b32.xlu0 %v430, 4
      %v572 = vpop.permute.xlu0 %571
      %573 = vrot.lane.b32.xlu0 %v442, 4
      %v574 = vpop.permute.xlu0 %573
      %575 = vrot.lane.b32.xlu0 %v454, 4
      %v576 = vpop.permute.xlu0 %575
      %577 = vrot.lane.b32.xlu0 %v466, 4
      %v578 = vpop.permute.xlu0 %577
      %579 = vrot.lane.b32.xlu0 %v478, 4
      %v580 = vpop.permute.xlu0 %579
      %581 = vrot.lane.b32.xlu0 %v490, 4
      %v582 = vpop.permute.xlu0 %581
      %583 = vrot.lane.b32.xlu0 %v502, 4
      %v584 = vpop.permute.xlu0 %583
      %585 = vrot.lane.b32.xlu0 %v514, 4
      %v586 = vpop.permute.xlu0 %585
      %587 = vrot.lane.b32.xlu0 %v526, 4
      %v588 = vpop.permute.xlu0 %587
      %589 = vrot.lane.b32.xlu0 %v538, 4
      %v590 = vpop.permute.xlu0 %589
      %591 = vrot.lane.b32.xlu0 %v550, 4
      %v592 = vpop.permute.xlu0 %591
      %593 = vrot.lane.b32.xlu0 %v562, 4
      %v594 = vpop.permute.xlu0 %593
      %v627 = vunpack.c.l.b16 %v194
      %v628 = vunpack.c.l.b16 %v195
      %v629 = vunpack.c.l.b16 %v196
      %v630 = vunpack.c.l.b16 %v197
      %v631 = vunpack.c.l.b16 %v198
      %v632 = vunpack.c.l.b16 %v199
      %v633 = vunpack.c.l.b16 %v200
      %v634 = vunpack.c.l.b16 %v201
      %v635 = vunpack.c.l.b16 %v202
      %v636 = vunpack.c.l.b16 %v203
      %v637 = vunpack.c.l.b16 %v204
      %v638 = vunpack.c.l.b16 %v205
      %v639 = vunpack.c.l.b16 %v206
      %v640 = vunpack.c.l.b16 %v207
      %v641 = vunpack.c.l.b16 %v208
      %v642 = vunpack.c.l.b16 %v209
      %v643 = vunpack.c.l.b16 %v210
      %v644 = vunpack.c.l.b16 %v211
      %v645 = vunpack.c.l.b16 %v212
      %v646 = vunpack.c.l.b16 %v213
      %v647 = vunpack.c.l.b16 %v214
      %v648 = vunpack.c.l.b16 %v215
      %v649 = vunpack.c.l.b16 %v216
      %v650 = vunpack.c.l.b16 %v217
      %v651 = vunpack.c.l.b16 %v218
      %v652 = vunpack.c.l.b16 %v219
      %v653 = vunpack.c.l.b16 %v220
      %v654 = vunpack.c.l.b16 %v221
      %v655 = vunpack.c.l.b16 %v222
      %v656 = vunpack.c.l.b16 %v223
      %v657 = vunpack.c.l.b16 %v224
      %v658 = vunpack.c.l.b16 %v225
      %v659 = vpack.c.b16 %v628, %v627
      %v660 = vpack.c.b16 %v630, %v629
      %v661 = vpack.c.b16 %v632, %v631
      %v662 = vpack.c.b16 %v634, %v633
      %v663 = vpack.c.b16 %v636, %v635
      %v664 = vpack.c.b16 %v638, %v637
      %v665 = vpack.c.b16 %v640, %v639
      %v666 = vpack.c.b16 %v642, %v641
      %v667 = vpack.c.b16 %v644, %v643
      %v668 = vpack.c.b16 %v646, %v645
      %v669 = vpack.c.b16 %v648, %v647
      %v670 = vpack.c.b16 %v650, %v649
      %v671 = vpack.c.b16 %v652, %v651
      %v672 = vpack.c.b16 %v654, %v653
      %v673 = vpack.c.b16 %v656, %v655
      %v674 = vpack.c.b16 %v658, %v657
      %675 = vrot.lane.b32.xlu0 %v659, 8
      %v676 = vpop.permute.xlu0 %675
      %677 = vrot.lane.b32.xlu0 %v660, 8
      %v678 = vpop.permute.xlu0 %677
      %679 = vrot.lane.b32.xlu0 %v661, 8
      %v680 = vpop.permute.xlu0 %679
      %681 = vrot.lane.b32.xlu0 %v662, 8
      %v682 = vpop.permute.xlu0 %681
      %683 = vrot.lane.b32.xlu0 %v663, 8
      %v684 = vpop.permute.xlu0 %683
      %685 = vrot.lane.b32.xlu0 %v664, 8
      %v686 = vpop.permute.xlu0 %685
      %687 = vrot.lane.b32.xlu0 %v665, 8
      %v688 = vpop.permute.xlu0 %687
      %689 = vrot.lane.b32.xlu0 %v666, 8
      %v690 = vpop.permute.xlu0 %689
      %691 = vrot.lane.b32.xlu0 %v667, 8
      %v692 = vpop.permute.xlu0 %691
      %693 = vrot.lane.b32.xlu0 %v668, 8
      %v694 = vpop.permute.xlu0 %693
      %695 = vrot.lane.b32.xlu0 %v669, 8
      %v696 = vpop.permute.xlu0 %695
      %697 = vrot.lane.b32.xlu0 %v670, 8
      %v698 = vpop.permute.xlu0 %697
      %699 = vrot.lane.b32.xlu0 %v671, 8
      %v700 = vpop.permute.xlu0 %699
      %701 = vrot.lane.b32.xlu0 %v672, 8
      %v702 = vpop.permute.xlu0 %701
      %703 = vrot.lane.b32.xlu0 %v673, 8
      %v704 = vpop.permute.xlu0 %703
      %705 = vrot.lane.b32.xlu0 %v674, 8
      %v706 = vpop.permute.xlu0 %705
      %v723 = vunpack.c.l.b16 %v226
      %v724 = vunpack.c.l.b16 %v227
      %v725 = vunpack.c.l.b16 %v228
      %v726 = vunpack.c.l.b16 %v229
      %v727 = vunpack.c.l.b16 %v230
      %v728 = vunpack.c.l.b16 %v231
      %v729 = vunpack.c.l.b16 %v232
      %v730 = vunpack.c.l.b16 %v233
      %v731 = vunpack.c.l.b16 %v234
      %v732 = vunpack.c.l.b16 %v235
      %v733 = vunpack.c.l.b16 %v236
      %v734 = vunpack.c.l.b16 %v237
      %v735 = vunpack.c.l.b16 %v238
      %v736 = vunpack.c.l.b16 %v239
      %v737 = vunpack.c.l.b16 %v240
      %v738 = vunpack.c.l.b16 %v241
      %v739 = vpack.c.b16 %v723, %v723
      %v740 = vpack.c.b16 %v724, %v724
      %v741 = vpack.c.b16 %v725, %v725
      %v742 = vpack.c.b16 %v726, %v726
      %v743 = vpack.c.b16 %v727, %v727
      %v744 = vpack.c.b16 %v728, %v728
      %v745 = vpack.c.b16 %v729, %v729
      %v746 = vpack.c.b16 %v730, %v730
      %v747 = vpack.c.b16 %v731, %v731
      %v748 = vpack.c.b16 %v732, %v732
      %v749 = vpack.c.b16 %v733, %v733
      %v750 = vpack.c.b16 %v734, %v734
      %v751 = vpack.c.b16 %v735, %v735
      %v752 = vpack.c.b16 %v736, %v736
      %v753 = vpack.c.b16 %v737, %v737
      %v754 = vpack.c.b16 %v738, %v738
      %v756 = vshrl.u32 %v659, 16
      %v758 = vshll.u32 %v659, 16
      %v760 = vrot.slane %v758, 1
      %v761 = vor.u32 %v756, %v760
      %v763 = vshll.u32 %v739, 16
      %v765 = vrot.slane %v763, 1
      %v766 = vsel %vm370, %v761, %v765
      %v768 = vshrl.u32 %v660, 16
      %v770 = vshll.u32 %v660, 16
      %v772 = vrot.slane %v770, 1
      %v773 = vor.u32 %v768, %v772
      %v775 = vshll.u32 %v740, 16
      %v777 = vrot.slane %v775, 1
      %v778 = vsel %vm370, %v773, %v777
      %v780 = vshrl.u32 %v661, 16
      %v782 = vshll.u32 %v661, 16
      %v784 = vrot.slane %v782, 1
      %v785 = vor.u32 %v780, %v784
      %v787 = vshll.u32 %v741, 16
      %v789 = vrot.slane %v787, 1
      %v790 = vsel %vm370, %v785, %v789
      %v792 = vshrl.u32 %v662, 16
      %v794 = vshll.u32 %v662, 16
      %v796 = vrot.slane %v794, 1
      %v797 = vor.u32 %v792, %v796
      %v799 = vshll.u32 %v742, 16
      %v801 = vrot.slane %v799, 1
      %v802 = vsel %vm370, %v797, %v801
      %v804 = vshrl.u32 %v663, 16
      %v806 = vshll.u32 %v663, 16
      %v808 = vrot.slane %v806, 1
      %v809 = vor.u32 %v804, %v808
      %v811 = vshll.u32 %v743, 16
      %v813 = vrot.slane %v811, 1
      %v814 = vsel %vm370, %v809, %v813
      %v816 = vshrl.u32 %v664, 16
      %v818 = vshll.u32 %v664, 16
      %v820 = vrot.slane %v818, 1
      %v821 = vor.u32 %v816, %v820
      %v823 = vshll.u32 %v744, 16
      %v825 = vrot.slane %v823, 1
      %v826 = vsel %vm370, %v821, %v825
      %v828 = vshrl.u32 %v665, 16
      %v830 = vshll.u32 %v665, 16
      %v832 = vrot.slane %v830, 1
      %v833 = vor.u32 %v828, %v832
      %v835 = vshll.u32 %v745, 16
      %v837 = vrot.slane %v835, 1
      %v838 = vsel %vm370, %v833, %v837
      %v840 = vshrl.u32 %v666, 16
      %v842 = vshll.u32 %v666, 16
      %v844 = vrot.slane %v842, 1
      %v845 = vor.u32 %v840, %v844
      %v847 = vshll.u32 %v746, 16
      %v849 = vrot.slane %v847, 1
      %v850 = vsel %vm370, %v845, %v849
      %v852 = vshrl.u32 %v667, 16
      %v854 = vshll.u32 %v667, 16
      %v856 = vrot.slane %v854, 1
      %v857 = vor.u32 %v852, %v856
      %v859 = vshll.u32 %v747, 16
      %v861 = vrot.slane %v859, 1
      %v862 = vsel %vm370, %v857, %v861
      %v864 = vshrl.u32 %v668, 16
      %v866 = vshll.u32 %v668, 16
      %v868 = vrot.slane %v866, 1
      %v869 = vor.u32 %v864, %v868
      %v871 = vshll.u32 %v748, 16
      %v873 = vrot.slane %v871, 1
      %v874 = vsel %vm370, %v869, %v873
      %v876 = vshrl.u32 %v669, 16
      %v878 = vshll.u32 %v669, 16
      %v880 = vrot.slane %v878, 1
      %v881 = vor.u32 %v876, %v880
      %v883 = vshll.u32 %v749, 16
      %v885 = vrot.slane %v883, 1
      %v886 = vsel %vm370, %v881, %v885
      %v888 = vshrl.u32 %v670, 16
      %v890 = vshll.u32 %v670, 16
      %v892 = vrot.slane %v890, 1
      %v893 = vor.u32 %v888, %v892
      %v895 = vshll.u32 %v750, 16
      %v897 = vrot.slane %v895, 1
      %v898 = vsel %vm370, %v893, %v897
      %v900 = vshrl.u32 %v671, 16
      %v902 = vshll.u32 %v671, 16
      %v904 = vrot.slane %v902, 1
      %v905 = vor.u32 %v900, %v904
      %v907 = vshll.u32 %v751, 16
      %v909 = vrot.slane %v907, 1
      %v910 = vsel %vm370, %v905, %v909
      %v912 = vshrl.u32 %v672, 16
      %v914 = vshll.u32 %v672, 16
      %v916 = vrot.slane %v914, 1
      %v917 = vor.u32 %v912, %v916
      %v919 = vshll.u32 %v752, 16
      %v921 = vrot.slane %v919, 1
      %v922 = vsel %vm370, %v917, %v921
      %v924 = vshrl.u32 %v673, 16
      %v926 = vshll.u32 %v673, 16
      %v928 = vrot.slane %v926, 1
      %v929 = vor.u32 %v924, %v928
      %v931 = vshll.u32 %v753, 16
      %v933 = vrot.slane %v931, 1
      %v934 = vsel %vm370, %v929, %v933
      %v936 = vshrl.u32 %v674, 16
      %v938 = vshll.u32 %v674, 16
      %v940 = vrot.slane %v938, 1
      %v941 = vor.u32 %v936, %v940
      %v943 = vshll.u32 %v754, 16
      %v945 = vrot.slane %v943, 1
      %v946 = vsel %vm370, %v941, %v945
      %947 = vrot.lane.b32.xlu0 %v766, 12
      %v948 = vpop.permute.xlu0 %947
      %949 = vrot.lane.b32.xlu0 %v778, 12
      %v950 = vpop.permute.xlu0 %949
      %951 = vrot.lane.b32.xlu0 %v790, 12
      %v952 = vpop.permute.xlu0 %951
      %953 = vrot.lane.b32.xlu0 %v802, 12
      %v954 = vpop.permute.xlu0 %953
      %955 = vrot.lane.b32.xlu0 %v814, 12
      %v956 = vpop.permute.xlu0 %955
      %957 = vrot.lane.b32.xlu0 %v826, 12
      %v958 = vpop.permute.xlu0 %957
      %959 = vrot.lane.b32.xlu0 %v838, 12
      %v960 = vpop.permute.xlu0 %959
      %961 = vrot.lane.b32.xlu0 %v850, 12
      %v962 = vpop.permute.xlu0 %961
      %963 = vrot.lane.b32.xlu0 %v862, 12
      %v964 = vpop.permute.xlu0 %963
      %965 = vrot.lane.b32.xlu0 %v874, 12
      %v966 = vpop.permute.xlu0 %965
      %967 = vrot.lane.b32.xlu0 %v886, 12
      %v968 = vpop.permute.xlu0 %967
      %969 = vrot.lane.b32.xlu0 %v898, 12
      %v970 = vpop.permute.xlu0 %969
      %971 = vrot.lane.b32.xlu0 %v910, 12
      %v972 = vpop.permute.xlu0 %971
      %973 = vrot.lane.b32.xlu0 %v922, 12
      %v974 = vpop.permute.xlu0 %973
      %975 = vrot.lane.b32.xlu0 %v934, 12
      %v976 = vpop.permute.xlu0 %975
      %977 = vrot.lane.b32.xlu0 %v946, 12
      %v978 = vpop.permute.xlu0 %977
      %vm979 = vcmask 31744
      %v981 = vsel %vm979, %v306, %v564
      %v983 = vsel %vm979, %v307, %v566
      %v985 = vsel %vm979, %v308, %v568
      %v987 = vsel %vm979, %v309, %v570
      %v989 = vsel %vm979, %v310, %v572
      %v991 = vsel %vm979, %v311, %v574
      %v993 = vsel %vm979, %v312, %v576
      %v995 = vsel %vm979, %v313, %v578
      %v997 = vsel %vm979, %v314, %v580
      %v999 = vsel %vm979, %v315, %v582
      %v1001 = vsel %vm979, %v316, %v584
      %v1003 = vsel %vm979, %v317, %v586
      %v1005 = vsel %vm979, %v318, %v588
      %v1007 = vsel %vm979, %v319, %v590
      %v1009 = vsel %vm979, %v320, %v592
      %v1011 = vsel %vm979, %v321, %v594
      %vm1012 = vcmask 64512
      %v1014 = vsel %vm1012, %v981, %v676
      %v1016 = vsel %vm1012, %v983, %v678
      %v1018 = vsel %vm1012, %v985, %v680
      %v1020 = vsel %vm1012, %v987, %v682
      %v1022 = vsel %vm1012, %v989, %v684
      %v1024 = vsel %vm1012, %v991, %v686
      %v1026 = vsel %vm1012, %v993, %v688
      %v1028 = vsel %vm1012, %v995, %v690
      %v1030 = vsel %vm1012, %v997, %v692
      %v1032 = vsel %vm1012, %v999, %v694
      %v1034 = vsel %vm1012, %v1001, %v696
      %v1036 = vsel %vm1012, %v1003, %v698
      %v1038 = vsel %vm1012, %v1005, %v700
      %v1040 = vsel %vm1012, %v1007, %v702
      %v1042 = vsel %vm1012, %v1009, %v704
      %v1044 = vsel %vm1012, %v1011, %v706
      %vm1045 = vcmask 97280
      %v1047 = vsel %vm1045, %v1014, %v948
      %v1049 = vsel %vm1045, %v1016, %v950
      %v1051 = vsel %vm1045, %v1018, %v952
      %v1053 = vsel %vm1045, %v1020, %v954
      %v1055 = vsel %vm1045, %v1022, %v956
      %v1057 = vsel %vm1045, %v1024, %v958
      %v1059 = vsel %vm1045, %v1026, %v960
      %v1061 = vsel %vm1045, %v1028, %v962
      %v1063 = vsel %vm1045, %v1030, %v964
      %v1065 = vsel %vm1045, %v1032, %v966
      %v1067 = vsel %vm1045, %v1034, %v968
      %v1069 = vsel %vm1045, %v1036, %v970
      %v1071 = vsel %vm1045, %v1038, %v972
      %v1073 = vsel %vm1045, %v1040, %v974
      %v1075 = vsel %vm1045, %v1042, %v976
      %v1077 = vsel %vm1045, %v1044, %v978
      %v1078 = vld [vmem:[%s1] sm:$0xf]
      %v1079 = vld [vmem:[%s1 + $0x4] sm:$0xf]
      %v1082 = vunpack.c.l.b16 %v1078
      %v1083 = vunpack.c.l.b16 %v1079
      %v1084 = vpack.c.b16 %v1083, %v1082
      %vm1086 = vcmask 130048
      %v1087 = vsel %vm1086, %v1047, 0
      %v1089 = vsel %vm1086, %v1049, 0
      %v1091 = vsel %vm1086, %v1051, 0
      %v1093 = vsel %vm1086, %v1053, 0
      %v1095 = vsel %vm1086, %v1055, 0
      %v1097 = vsel %vm1086, %v1057, 0
      %v1099 = vsel %vm1086, %v1059, 0
      %v1101 = vsel %vm1086, %v1061, 0
      %v1103 = vsel %vm1086, %v1063, 0
      %v1105 = vsel %vm1086, %v1065, 0
      %v1107 = vsel %vm1086, %v1067, 0
      %v1109 = vsel %vm1086, %v1069, 0
      %v1111 = vsel %vm1086, %v1071, 0
      %v1113 = vsel %vm1086, %v1073, 0
      %v1115 = vsel %vm1086, %v1075, 0
      %v1117 = vsel %vm1086, %v1077, 0
      %1119 = vmatprep.subr.bf16.mxu0 0
      %1120 = vmatpush1.bf16.msra.mxu0 %v1084
      %1121 = vmatprep.subr.bf16.mxu0 0
      %1122 = vmatpush1.bf16.msra.mxu0 0
      %1123 = vmatprep.subr.bf16.mxu0 0
      %1124 = vmatpush1.bf16.msra.mxu0 0
      %1125 = vmatprep.subr.bf16.mxu0 0
      %1126 = vmatpush1.bf16.msra.mxu0 0
      %1127 = vmatprep.subr.bf16.mxu0 0
      %1128 = vmatpush1.bf16.msra.mxu0 0
      %1129 = vmatprep.subr.bf16.mxu0 0
      %1130 = vmatpush1.bf16.msra.mxu0 0
      %1131 = vmatprep.subr.bf16.mxu0 0
      %1132 = vmatpush1.bf16.msra.mxu0 0
      %1133 = vmatprep.subr.bf16.mxu0 0
      %1134 = vmatpush1.bf16.msra.mxu0 0
      %1135 = vmatprep.subr.bf16.mxu0 0
      %1136 = vmatpush1.bf16.msra.mxu0 0
      %1137 = vmatprep.subr.bf16.mxu0 0
      %1138 = vmatpush1.bf16.msra.mxu0 0
      %1139 = vmatprep.subr.bf16.mxu0 0
      %1140 = vmatpush1.bf16.msra.mxu0 0
      %1141 = vmatprep.subr.bf16.mxu0 0
      %1142 = vmatpush1.bf16.msra.mxu0 0
      %1143 = vmatprep.subr.bf16.mxu0 0
      %1144 = vmatpush1.bf16.msra.mxu0 0
      %1145 = vmatprep.subr.bf16.mxu0 0
      %1146 = vmatpush1.bf16.msra.mxu0 0
      %1147 = vmatprep.subr.bf16.mxu0 0
      %1148 = vmatpush1.bf16.msra.mxu0 0
      %1149 = vmatprep.subr.bf16.mxu0 0
      %1150 = vmatpush1.bf16.msra.mxu0 0
      %1151 = vmatprep.mubr.bf16.mxu0 0
      %1152 = vmatmul.mubr.bf16.gmra.mrb[0].mxu0 %v1087
      %v1153 = vpop.f32.mrb[0].mxu0
      %v1154 = vadd.f32 0.0, %v1153
      %v1155 = vpop.f32.mrb[0].mxu0
      %v1156 = vpop.f32.mrb[0].mxu0
      %v1157 = vadd.f32 0.0, %v1156
      %v1158 = vpop.f32.mrb[0].mxu0
      %1159 = vmatprep.mubr.bf16.mxu0 0
      %1160 = vmatmul.mubr.bf16.gmra.mrb[0].mxu0 %v1089
      %v1161 = vpop.f32.mrb[0].mxu0
      %v1162 = vadd.f32 0.0, %v1161
      %v1163 = vpop.f32.mrb[0].mxu0
      %v1164 = vpop.f32.mrb[0].mxu0
      %v1165 = vadd.f32 0.0, %v1164
      %v1166 = vpop.f32.mrb[0].mxu0
      %1167 = vmatprep.mubr.bf16.mxu0 0
      %1168 = vmatmul.mubr.bf16.gmra.mrb[0].mxu0 %v1091
      %v1169 = vpop.f32.mrb[0].mxu0
      %v1170 = vadd.f32 0.0, %v1169
      %v1171 = vpop.f32.mrb[0].mxu0
      %v1172 = vpop.f32.mrb[0].mxu0
      %v1173 = vadd.f32 0.0, %v1172
      %v1174 = vpop.f32.mrb[0].mxu0
      %1175 = vmatprep.mubr.bf16.mxu0 0
      %1176 = vmatmul.mubr.bf16.gmra.mrb[0].mxu0 %v1093
      %v1177 = vpop.f32.mrb[0].mxu0
      %v1178 = vadd.f32 0.0, %v1177
      %v1179 = vpop.f32.mrb[0].mxu0
      %v1180 = vpop.f32.mrb[0].mxu0
      %v1181 = vadd.f32 0.0, %v1180
      %v1182 = vpop.f32.mrb[0].mxu0
      %1183 = vmatprep.mubr.bf16.mxu0 0
      %1184 = vmatmul.mubr.bf16.gmra.mrb[0].mxu0 %v1095
      %v1185 = vpop.f32.mrb[0].mxu0
      %v1186 = vadd.f32 0.0, %v1185
      %v1187 = vpop.f32.mrb[0].mxu0
      %v1188 = vpop.f32.mrb[0].mxu0
      %v1189 = vadd.f32 0.0, %v1188
      %v1190 = vpop.f32.mrb[0].mxu0
      %1191 = vmatprep.mubr.bf16.mxu0 0
      %1192 = vmatmul.mubr.bf16.gmra.mrb[0].mxu0 %v1097
      %v1193 = vpop.f32.mrb[0].mxu0
      %v1194 = vadd.f32 0.0, %v1193
      %v1195 = vpop.f32.mrb[0].mxu0
      %v1196 = vpop.f32.mrb[0].mxu0
      %v1197 = vadd.f32 0.0, %v1196
      %v1198 = vpop.f32.mrb[0].mxu0
      %1199 = vmatprep.mubr.bf16.mxu0 0
      %1200 = vmatmul.mubr.bf16.gmra.mrb[0].mxu0 %v1099
      %v1201 = vpop.f32.mrb[0].mxu0
      %v1202 = vadd.f32 0.0, %v1201
      %v1203 = vpop.f32.mrb[0].mxu0
      %v1204 = vpop.f32.mrb[0].mxu0
      %v1205 = vadd.f32 0.0, %v1204
      %v1206 = vpop.f32.mrb[0].mxu0
      %1207 = vmatprep.mubr.bf16.mxu0 0
      %1208 = vmatmul.mubr.bf16.gmra.mrb[0].mxu0 %v1101
      %v1209 = vpop.f32.mrb[0].mxu0
      %v1210 = vadd.f32 0.0, %v1209
      %v1211 = vpop.f32.mrb[0].mxu0
      %v1212 = vpop.f32.mrb[0].mxu0
      %v1213 = vadd.f32 0.0, %v1212
      %v1214 = vpop.f32.mrb[0].mxu0
      %1215 = vmatprep.mubr.bf16.mxu0 0
      %1216 = vmatmul.mubr.bf16.gmra.mrb[0].mxu0 %v1103
      %v1217 = vpop.f32.mrb[0].mxu0
      %v1218 = vadd.f32 0.0, %v1217
      %v1219 = vpop.f32.mrb[0].mxu0
      %v1220 = vpop.f32.mrb[0].mxu0
      %v1221 = vadd.f32 0.0, %v1220
      %v1222 = vpop.f32.mrb[0].mxu0
      %1223 = vmatprep.mubr.bf16.mxu0 0
      %1224 = vmatmul.mubr.bf16.gmra.mrb[0].mxu0 %v1105
      %v1225 = vpop.f32.mrb[0].mxu0
      %v1226 = vadd.f32 0.0, %v1225
      %v1227 = vpop.f32.mrb[0].mxu0
      %v1228 = vpop.f32.mrb[0].mxu0
      %v1229 = vadd.f32 0.0, %v1228
      %v1230 = vpop.f32.mrb[0].mxu0
      %1231 = vmatprep.mubr.bf16.mxu0 0
      %1232 = vmatmul.mubr.bf16.gmra.mrb[0].mxu0 %v1107
      %v1233 = vpop.f32.mrb[0].mxu0
      %v1234 = vadd.f32 0.0, %v1233
      %v1235 = vpop.f32.mrb[0].mxu0
      %v1236 = vpop.f32.mrb[0].mxu0
      %v1237 = vadd.f32 0.0, %v1236
      %v1238 = vpop.f32.mrb[0].mxu0
      %1239 = vmatprep.mubr.bf16.mxu0 0
      %1240 = vmatmul.mubr.bf16.gmra.mrb[0].mxu0 %v1109
      %v1241 = vpop.f32.mrb[0].mxu0
      %v1242 = vadd.f32 0.0, %v1241
      %v1243 = vpop.f32.mrb[0].mxu0
      %v1244 = vpop.f32.mrb[0].mxu0
      %v1245 = vadd.f32 0.0, %v1244
      %v1246 = vpop.f32.mrb[0].mxu0
      %1247 = vmatprep.mubr.bf16.mxu0 0
      %1248 = vmatmul.mubr.bf16.gmra.mrb[0].mxu0 %v1111
      %v1249 = vpop.f32.mrb[0].mxu0
      %v1250 = vadd.f32 0.0, %v1249
      %v1251 = vpop.f32.mrb[0].mxu0
      %v1252 = vpop.f32.mrb[0].mxu0
      %v1253 = vadd.f32 0.0, %v1252
      %v1254 = vpop.f32.mrb[0].mxu0
      %1255 = vmatprep.mubr.bf16.mxu0 0
      %1256 = vmatmul.mubr.bf16.gmra.mrb[0].mxu0 %v1113
      %v1257 = vpop.f32.mrb[0].mxu0
      %v1258 = vadd.f32 0.0, %v1257
      %v1259 = vpop.f32.mrb[0].mxu0
      %v1260 = vpop.f32.mrb[0].mxu0
      %v1261 = vadd.f32 0.0, %v1260
      %v1262 = vpop.f32.mrb[0].mxu0
      %1263 = vmatprep.mubr.bf16.mxu0 0
      %1264 = vmatmul.mubr.bf16.gmra.mrb[0].mxu0 %v1115
      %v1265 = vpop.f32.mrb[0].mxu0
      %v1266 = vadd.f32 0.0, %v1265
      %v1267 = vpop.f32.mrb[0].mxu0
      %v1268 = vpop.f32.mrb[0].mxu0
      %v1269 = vadd.f32 0.0, %v1268
      %v1270 = vpop.f32.mrb[0].mxu0
      %1271 = vmatprep.mubr.bf16.mxu0 0
      %1272 = vmatmul.mubr.bf16.gmra.mrb[0].mxu0 %v1117
      %v1273 = vpop.f32.mrb[0].mxu0
      %v1274 = vadd.f32 0.0, %v1273
      %v1275 = vpop.f32.mrb[0].mxu0
      %v1276 = vpop.f32.mrb[0].mxu0
      %v1277 = vadd.f32 0.0, %v1276
      %v1278 = vpop.f32.mrb[0].mxu0
      %1279 = vdwg.mxu0
      %v1280 = vsel %vm1012, %v1154, 0.0
      %v1281 = vsel %vm1012, %v1157, 0.0
      %v1282 = vadd.f32 %v1280, %v1281
      %v1283 = vsel %vm1012, %v1162, 0.0
      %v1284 = vadd.f32 %v1282, %v1283
      %v1285 = vsel %vm1012, %v1165, 0.0
      %v1286 = vadd.f32 %v1284, %v1285
      %v1287 = vsel %vm1012, %v1170, 0.0
      %v1288 = vadd.f32 %v1286, %v1287
      %v1289 = vsel %vm1012, %v1173, 0.0
      %v1290 = vadd.f32 %v1288, %v1289
      %v1291 = vsel %vm1012, %v1178, 0.0
      %v1292 = vadd.f32 %v1290, %v1291
      %v1293 = vsel %vm1012, %v1181, 0.0
      %v1294 = vadd.f32 %v1292, %v1293
      %v1295 = vsel %vm1012, %v1186, 0.0
      %v1296 = vadd.f32 %v1294, %v1295
      %v1297 = vsel %vm1012, %v1189, 0.0
      %v1298 = vadd.f32 %v1296, %v1297
      %v1299 = vsel %vm1012, %v1194, 0.0
      %v1300 = vadd.f32 %v1298, %v1299
      %v1301 = vsel %vm1012, %v1197, 0.0
      %v1302 = vadd.f32 %v1300, %v1301
      %v1303 = vsel %vm1012, %v1202, 0.0
      %v1304 = vadd.f32 %v1302, %v1303
      %v1305 = vsel %vm1012, %v1205, 0.0
      %v1306 = vadd.f32 %v1304, %v1305
      %v1307 = vsel %vm1012, %v1210, 0.0
      %v1308 = vadd.f32 %v1306, %v1307
      %v1309 = vsel %vm1012, %v1213, 0.0
      %v1310 = vadd.f32 %v1308, %v1309
      %v1311 = vsel %vm1012, %v1218, 0.0
      %v1312 = vadd.f32 %v1310, %v1311
      %v1313 = vsel %vm1012, %v1221, 0.0
      %v1314 = vadd.f32 %v1312, %v1313
      %v1315 = vsel %vm1012, %v1226, 0.0
      %v1316 = vadd.f32 %v1314, %v1315
      %v1317 = vsel %vm1012, %v1229, 0.0
      %v1318 = vadd.f32 %v1316, %v1317
      %v1319 = vsel %vm1012, %v1234, 0.0
      %v1320 = vadd.f32 %v1318, %v1319
      %v1321 = vsel %vm1012, %v1237, 0.0
      %v1322 = vadd.f32 %v1320, %v1321
      %v1323 = vsel %vm1012, %v1242, 0.0
      %v1324 = vadd.f32 %v1322, %v1323
      %v1325 = vsel %vm1012, %v1245, 0.0
      %v1326 = vadd.f32 %v1324, %v1325
      %v1327 = vsel %vm1012, %v1250, 0.0
      %v1328 = vadd.f32 %v1326, %v1327
      %v1329 = vsel %vm1012, %v1253, 0.0
      %v1330 = vadd.f32 %v1328, %v1329
      %v1331 = vsel %vm1012, %v1258, 0.0
      %v1332 = vadd.f32 %v1330, %v1331
      %v1333 = vsel %vm1012, %v1261, 0.0
      %v1334 = vadd.f32 %v1332, %v1333
      %v1335 = vsel %vm1012, %v1266, 0.0
      %v1336 = vadd.f32 %v1334, %v1335
      %v1337 = vsel %vm1012, %v1269, 0.0
      %v1338 = vadd.f32 %v1336, %v1337
      %v1339 = vsel %vm1012, %v1274, 0.0
      %v1340 = vadd.f32 %v1338, %v1339
      %v1341 = vsel %vm1012, %v1277, 0.0
      %v1342 = vadd.f32 %v1340, %v1341
      %v1343 = vrot.slane %v1342, 4
      %v1344 = vadd.f32 %v1342, %v1343
      %v1345 = vrot.slane %v1344, 2
      %v1346 = vadd.f32 %v1344, %v1345
      %v1347 = vrot.slane %v1346, 1
      %v1348 = vadd.f32 %v1346, %v1347
      %v1349 = vadd.f32 %v1348, 0.0
      %v1350 = vmul.f32 %v1154, %v1154
      %v1351 = vmul.f32 %v1157, %v1157
      %v1352 = vmul.f32 %v1162, %v1162
      %v1353 = vmul.f32 %v1165, %v1165
      %v1354 = vmul.f32 %v1170, %v1170
      %v1355 = vmul.f32 %v1173, %v1173
      %v1356 = vmul.f32 %v1178, %v1178
      %v1357 = vmul.f32 %v1181, %v1181
      %v1358 = vmul.f32 %v1186, %v1186
      %v1359 = vmul.f32 %v1189, %v1189
      %v1360 = vmul.f32 %v1194, %v1194
      %v1361 = vmul.f32 %v1197, %v1197
      %v1362 = vmul.f32 %v1202, %v1202
      %v1363 = vmul.f32 %v1205, %v1205
      %v1364 = vmul.f32 %v1210, %v1210
      %v1365 = vmul.f32 %v1213, %v1213
      %v1366 = vmul.f32 %v1218, %v1218
      %v1367 = vmul.f32 %v1221, %v1221
      %v1368 = vmul.f32 %v1226, %v1226
      %v1369 = vmul.f32 %v1229, %v1229
      %v1370 = vmul.f32 %v1234, %v1234
      %v1371 = vmul.f32 %v1237, %v1237
      %v1372 = vmul.f32 %v1242, %v1242
      %v1373 = vmul.f32 %v1245, %v1245
      %v1374 = vmul.f32 %v1250, %v1250
      %v1375 = vmul.f32 %v1253, %v1253
      %v1376 = vmul.f32 %v1258, %v1258
      %v1377 = vmul.f32 %v1261, %v1261
      %v1378 = vmul.f32 %v1266, %v1266
      %v1379 = vmul.f32 %v1269, %v1269
      %v1380 = vmul.f32 %v1274, %v1274
      %v1381 = vmul.f32 %v1277, %v1277
      %v1382 = vsel %vm1012, %v1350, 0.0
      %v1383 = vsel %vm1012, %v1351, 0.0
      %v1384 = vadd.f32 %v1382, %v1383
      %v1385 = vsel %vm1012, %v1352, 0.0
      %v1386 = vadd.f32 %v1384, %v1385
      %v1387 = vsel %vm1012, %v1353, 0.0
      %v1388 = vadd.f32 %v1386, %v1387
      %v1389 = vsel %vm1012, %v1354, 0.0
      %v1390 = vadd.f32 %v1388, %v1389
      %v1391 = vsel %vm1012, %v1355, 0.0
      %v1392 = vadd.f32 %v1390, %v1391
      %v1393 = vsel %vm1012, %v1356, 0.0
      %v1394 = vadd.f32 %v1392, %v1393
      %v1395 = vsel %vm1012, %v1357, 0.0
      %v1396 = vadd.f32 %v1394, %v1395
      %v1397 = vsel %vm1012, %v1358, 0.0
      %v1398 = vadd.f32 %v1396, %v1397
      %v1399 = vsel %vm1012, %v1359, 0.0
      %v1400 = vadd.f32 %v1398, %v1399
      %v1401 = vsel %vm1012, %v1360, 0.0
      %v1402 = vadd.f32 %v1400, %v1401
      %v1403 = vsel %vm1012, %v1361, 0.0
      %v1404 = vadd.f32 %v1402, %v1403
      %v1405 = vsel %vm1012, %v1362, 0.0
      %v1406 = vadd.f32 %v1404, %v1405
      %v1407 = vsel %vm1012, %v1363, 0.0
      %v1408 = vadd.f32 %v1406, %v1407
      %v1409 = vsel %vm1012, %v1364, 0.0
      %v1410 = vadd.f32 %v1408, %v1409
      %v1411 = vsel %vm1012, %v1365, 0.0
      %v1412 = vadd.f32 %v1410, %v1411
      %v1413 = vsel %vm1012, %v1366, 0.0
      %v1414 = vadd.f32 %v1412, %v1413
      %v1415 = vsel %vm1012, %v1367, 0.0
      %v1416 = vadd.f32 %v1414, %v1415
      %v1417 = vsel %vm1012, %v1368, 0.0
      %v1418 = vadd.f32 %v1416, %v1417
      %v1419 = vsel %vm1012, %v1369, 0.0
      %v1420 = vadd.f32 %v1418, %v1419
      %v1421 = vsel %vm1012, %v1370, 0.0
      %v1422 = vadd.f32 %v1420, %v1421
      %v1423 = vsel %vm1012, %v1371, 0.0
      %v1424 = vadd.f32 %v1422, %v1423
      %v1425 = vsel %vm1012, %v1372, 0.0
      %v1426 = vadd.f32 %v1424, %v1425
      %v1427 = vsel %vm1012, %v1373, 0.0
      %v1428 = vadd.f32 %v1426, %v1427
      %v1429 = vsel %vm1012, %v1374, 0.0
      %v1430 = vadd.f32 %v1428, %v1429
      %v1431 = vsel %vm1012, %v1375, 0.0
      %v1432 = vadd.f32 %v1430, %v1431
      %v1433 = vsel %vm1012, %v1376, 0.0
      %v1434 = vadd.f32 %v1432, %v1433
      %v1435 = vsel %vm1012, %v1377, 0.0
      %v1436 = vadd.f32 %v1434, %v1435
      %v1437 = vsel %vm1012, %v1378, 0.0
      %v1438 = vadd.f32 %v1436, %v1437
      %v1439 = vsel %vm1012, %v1379, 0.0
      %v1440 = vadd.f32 %v1438, %v1439
      %v1441 = vsel %vm1012, %v1380, 0.0
      %v1442 = vadd.f32 %v1440, %v1441
      %v1443 = vsel %vm1012, %v1381, 0.0
      %v1444 = vadd.f32 %v1442, %v1443
      %v1445 = vrot.slane %v1444, 4
      %v1446 = vadd.f32 %v1444, %v1445
      %v1447 = vrot.slane %v1446, 2
      %v1448 = vadd.f32 %v1446, %v1447
      %v1449 = vrot.slane %v1448, 1
      %v1450 = vadd.f32 %v1448, %v1449
      %v1451 = vadd.f32 %v1450, 0.0
      %v1452 = vld [vmem:[%s138] sm:$0xe]
      %v1453 = vld [vmem:[%s138 + $0xc] sm:$0xe]
      %v1454 = vld [vmem:[%s138 + $0x18] sm:$0xe]
      %v1455 = vld [vmem:[%s138 + $0x24] sm:$0xe]
      %v1456 = vld [vmem:[%s138 + $0x30] sm:$0xe]
      %v1457 = vld [vmem:[%s138 + $0x3c] sm:$0xe]
      %v1458 = vld [vmem:[%s138 + $0x48] sm:$0xe]
      %v1459 = vld [vmem:[%s138 + $0x54] sm:$0xe]
      %v1460 = vld [vmem:[%s138 + $0x60] sm:$0xe]
      %v1461 = vld [vmem:[%s138 + $0x6c] sm:$0xe]
      %v1462 = vld [vmem:[%s138 + $0x78] sm:$0xe]
      %v1463 = vld [vmem:[%s138 + $0x84] sm:$0xe]
      %v1464 = vld [vmem:[%s138 + $0x90] sm:$0xe]
      %v1465 = vld [vmem:[%s138 + $0x9c] sm:$0xe]
      %v1466 = vld [vmem:[%s138 + $0xa8] sm:$0xe]
      %v1467 = vld [vmem:[%s138 + $0xb4] sm:$0xe]
      %v1468 = vld [vmem:[%s193] sm:$0xe]
      %v1469 = vld [vmem:[%s193 + $0xc] sm:$0xe]
      %v1470 = vld [vmem:[%s193 + $0x18] sm:$0xe]
      %v1471 = vld [vmem:[%s193 + $0x24] sm:$0xe]
      %v1472 = vld [vmem:[%s193 + $0x30] sm:$0xe]
      %v1473 = vld [vmem:[%s193 + $0x3c] sm:$0xe]
      %v1474 = vld [vmem:[%s193 + $0x48] sm:$0xe]
      %v1475 = vld [vmem:[%s193 + $0x54] sm:$0xe]
      %v1476 = vld [vmem:[%s193 + $0x60] sm:$0xe]
      %v1477 = vld [vmem:[%s193 + $0x6c] sm:$0xe]
      %v1478 = vld [vmem:[%s193 + $0x78] sm:$0xe]
      %v1479 = vld [vmem:[%s193 + $0x84] sm:$0xe]
      %v1480 = vld [vmem:[%s193 + $0x90] sm:$0xe]
      %v1481 = vld [vmem:[%s193 + $0x9c] sm:$0xe]
      %v1482 = vld [vmem:[%s193 + $0xa8] sm:$0xe]
      %v1483 = vld [vmem:[%s193 + $0xb4] sm:$0xe]
      %v1500 = vunpack.c.l.b16 %v1452
      %v1501 = vunpack.c.l.b16 %v1453
      %v1502 = vunpack.c.l.b16 %v1454
      %v1503 = vunpack.c.l.b16 %v1455
      %v1504 = vunpack.c.l.b16 %v1456
      %v1505 = vunpack.c.l.b16 %v1457
      %v1506 = vunpack.c.l.b16 %v1458
      %v1507 = vunpack.c.l.b16 %v1459
      %v1508 = vunpack.c.l.b16 %v1460
      %v1509 = vunpack.c.l.b16 %v1461
      %v1510 = vunpack.c.l.b16 %v1462
      %v1511 = vunpack.c.l.b16 %v1463
      %v1512 = vunpack.c.l.b16 %v1464
      %v1513 = vunpack.c.l.b16 %v1465
      %v1514 = vunpack.c.l.b16 %v1466
      %v1515 = vunpack.c.l.b16 %v1467
      %v1516 = vpack.c.b16 %v275, %v1500
      %v1517 = vpack.c.b16 %v277, %v1501
      %v1518 = vpack.c.b16 %v279, %v1502
      %v1519 = vpack.c.b16 %v281, %v1503
      %v1520 = vpack.c.b16 %v283, %v1504
      %v1521 = vpack.c.b16 %v285, %v1505
      %v1522 = vpack.c.b16 %v287, %v1506
      %v1523 = vpack.c.b16 %v289, %v1507
      %v1524 = vpack.c.b16 %v291, %v1508
      %v1525 = vpack.c.b16 %v293, %v1509
      %v1526 = vpack.c.b16 %v295, %v1510
      %v1527 = vpack.c.b16 %v297, %v1511
      %v1528 = vpack.c.b16 %v299, %v1512
      %v1529 = vpack.c.b16 %v301, %v1513
      %v1530 = vpack.c.b16 %v303, %v1514
      %v1531 = vpack.c.b16 %v305, %v1515
      %v1533 = vshrl.u32 %v1516, 16
      %v1535 = vshll.u32 %v1516, 16
      %v1537 = vrot.slane %v1535, 1
      %v1538 = vor.u32 %v1533, %v1537
      %v1539 = vsel %vm370, %v1538, %v381
      %v1540 = vshrl.u32 %v354, 16
      %v1543 = vshrl.u32 %v1517, 16
      %v1545 = vshll.u32 %v1517, 16
      %v1547 = vrot.slane %v1545, 1
      %v1548 = vor.u32 %v1543, %v1547
      %v1549 = vsel %vm370, %v1548, %v393
      %v1550 = vshrl.u32 %v355, 16
      %v1553 = vshrl.u32 %v1518, 16
      %v1555 = vshll.u32 %v1518, 16
      %v1557 = vrot.slane %v1555, 1
      %v1558 = vor.u32 %v1553, %v1557
      %v1559 = vsel %vm370, %v1558, %v405
      %v1560 = vshrl.u32 %v356, 16
      %v1563 = vshrl.u32 %v1519, 16
      %v1565 = vshll.u32 %v1519, 16
      %v1567 = vrot.slane %v1565, 1
      %v1568 = vor.u32 %v1563, %v1567
      %v1569 = vsel %vm370, %v1568, %v417
      %v1570 = vshrl.u32 %v357, 16
      %v1573 = vshrl.u32 %v1520, 16
      %v1575 = vshll.u32 %v1520, 16
      %v1577 = vrot.slane %v1575, 1
      %v1578 = vor.u32 %v1573, %v1577
      %v1579 = vsel %vm370, %v1578, %v429
      %v1580 = vshrl.u32 %v358, 16
      %v1583 = vshrl.u32 %v1521, 16
      %v1585 = vshll.u32 %v1521, 16
      %v1587 = vrot.slane %v1585, 1
      %v1588 = vor.u32 %v1583, %v1587
      %v1589 = vsel %vm370, %v1588, %v441
      %v1590 = vshrl.u32 %v359, 16
      %v1593 = vshrl.u32 %v1522, 16
      %v1595 = vshll.u32 %v1522, 16
      %v1597 = vrot.slane %v1595, 1
      %v1598 = vor.u32 %v1593, %v1597
      %v1599 = vsel %vm370, %v1598, %v453
      %v1600 = vshrl.u32 %v360, 16
      %v1603 = vshrl.u32 %v1523, 16
      %v1605 = vshll.u32 %v1523, 16
      %v1607 = vrot.slane %v1605, 1
      %v1608 = vor.u32 %v1603, %v1607
      %v1609 = vsel %vm370, %v1608, %v465
      %v1610 = vshrl.u32 %v361, 16
      %v1613 = vshrl.u32 %v1524, 16
      %v1615 = vshll.u32 %v1524, 16
      %v1617 = vrot.slane %v1615, 1
      %v1618 = vor.u32 %v1613, %v1617
      %v1619 = vsel %vm370, %v1618, %v477
      %v1620 = vshrl.u32 %v362, 16
      %v1623 = vshrl.u32 %v1525, 16
      %v1625 = vshll.u32 %v1525, 16
      %v1627 = vrot.slane %v1625, 1
      %v1628 = vor.u32 %v1623, %v1627
      %v1629 = vsel %vm370, %v1628, %v489
      %v1630 = vshrl.u32 %v363, 16
      %v1633 = vshrl.u32 %v1526, 16
      %v1635 = vshll.u32 %v1526, 16
      %v1637 = vrot.slane %v1635, 1
      %v1638 = vor.u32 %v1633, %v1637
      %v1639 = vsel %vm370, %v1638, %v501
      %v1640 = vshrl.u32 %v364, 16
      %v1643 = vshrl.u32 %v1527, 16
      %v1645 = vshll.u32 %v1527, 16
      %v1647 = vrot.slane %v1645, 1
      %v1648 = vor.u32 %v1643, %v1647
      %v1649 = vsel %vm370, %v1648, %v513
      %v1650 = vshrl.u32 %v365, 16
      %v1653 = vshrl.u32 %v1528, 16
      %v1655 = vshll.u32 %v1528, 16
      %v1657 = vrot.slane %v1655, 1
      %v1658 = vor.u32 %v1653, %v1657
      %v1659 = vsel %vm370, %v1658, %v525
      %v1660 = vshrl.u32 %v366, 16
      %v1663 = vshrl.u32 %v1529, 16
      %v1665 = vshll.u32 %v1529, 16
      %v1667 = vrot.slane %v1665, 1
      %v1668 = vor.u32 %v1663, %v1667
      %v1669 = vsel %vm370, %v1668, %v537
      %v1670 = vshrl.u32 %v367, 16
      %v1673 = vshrl.u32 %v1530, 16
      %v1675 = vshll.u32 %v1530, 16
      %v1677 = vrot.slane %v1675, 1
      %v1678 = vor.u32 %v1673, %v1677
      %v1679 = vsel %vm370, %v1678, %v549
      %v1680 = vshrl.u32 %v368, 16
      %v1683 = vshrl.u32 %v1531, 16
      %v1685 = vshll.u32 %v1531, 16
      %v1687 = vrot.slane %v1685, 1
      %v1688 = vor.u32 %v1683, %v1687
      %v1689 = vsel %vm370, %v1688, %v561
      %v1690 = vshrl.u32 %v369, 16
      %1692 = vrot.lane.b32.xlu0 %v1539, 4
      %v1693 = vpop.permute.xlu0 %1692
      %1694 = vrot.lane.b32.xlu0 %v1540, 4
      %v1695 = vpop.permute.xlu0 %1694
      %1696 = vrot.lane.b32.xlu0 %v1549, 4
      %v1697 = vpop.permute.xlu0 %1696
      %1698 = vrot.lane.b32.xlu0 %v1550, 4
      %v1699 = vpop.permute.xlu0 %1698
      %1700 = vrot.lane.b32.xlu0 %v1559, 4
      %v1701 = vpop.permute.xlu0 %1700
      %1702 = vrot.lane.b32.xlu0 %v1560, 4
      %v1703 = vpop.permute.xlu0 %1702
      %1704 = vrot.lane.b32.xlu0 %v1569, 4
      %v1705 = vpop.permute.xlu0 %1704
      %1706 = vrot.lane.b32.xlu0 %v1570, 4
      %v1707 = vpop.permute.xlu0 %1706
      %1708 = vrot.lane.b32.xlu0 %v1579, 4
      %v1709 = vpop.permute.xlu0 %1708
      %1710 = vrot.lane.b32.xlu0 %v1580, 4
      %v1711 = vpop.permute.xlu0 %1710
      %1712 = vrot.lane.b32.xlu0 %v1589, 4
      %v1713 = vpop.permute.xlu0 %1712
      %1714 = vrot.lane.b32.xlu0 %v1590, 4
      %v1715 = vpop.permute.xlu0 %1714
      %1716 = vrot.lane.b32.xlu0 %v1599, 4
      %v1717 = vpop.permute.xlu0 %1716
      %1718 = vrot.lane.b32.xlu0 %v1600, 4
      %v1719 = vpop.permute.xlu0 %1718
      %1720 = vrot.lane.b32.xlu0 %v1609, 4
      %v1721 = vpop.permute.xlu0 %1720
      %1722 = vrot.lane.b32.xlu0 %v1610, 4
      %v1723 = vpop.permute.xlu0 %1722
      %1724 = vrot.lane.b32.xlu0 %v1619, 4
      %v1725 = vpop.permute.xlu0 %1724
      %1726 = vrot.lane.b32.xlu0 %v1620, 4
      %v1727 = vpop.permute.xlu0 %1726
      %1728 = vrot.lane.b32.xlu0 %v1629, 4
      %v1729 = vpop.permute.xlu0 %1728
      %1730 = vrot.lane.b32.xlu0 %v1630, 4
      %v1731 = vpop.permute.xlu0 %1730
      %1732 = vrot.lane.b32.xlu0 %v1639, 4
      %v1733 = vpop.permute.xlu0 %1732
      %1734 = vrot.lane.b32.xlu0 %v1640, 4
      %v1735 = vpop.permute.xlu0 %1734
      %1736 = vrot.lane.b32.xlu0 %v1649, 4
      %v1737 = vpop.permute.xlu0 %1736
      %1738 = vrot.lane.b32.xlu0 %v1650, 4
      %v1739 = vpop.permute.xlu0 %1738
      %1740 = vrot.lane.b32.xlu0 %v1659, 4
      %v1741 = vpop.permute.xlu0 %1740
      %1742 = vrot.lane.b32.xlu0 %v1660, 4
      %v1743 = vpop.permute.xlu0 %1742
      %1744 = vrot.lane.b32.xlu0 %v1669, 4
      %v1745 = vpop.permute.xlu0 %1744
      %1746 = vrot.lane.b32.xlu0 %v1670, 4
      %v1747 = vpop.permute.xlu0 %1746
      %1748 = vrot.lane.b32.xlu0 %v1679, 4
      %v1749 = vpop.permute.xlu0 %1748
      %1750 = vrot.lane.b32.xlu0 %v1680, 4
      %v1751 = vpop.permute.xlu0 %1750
      %1752 = vrot.lane.b32.xlu0 %v1689, 4
      %v1753 = vpop.permute.xlu0 %1752
      %1754 = vrot.lane.b32.xlu0 %v1690, 4
      %v1755 = vpop.permute.xlu0 %1754
      %1756 = vrot.lane.b32.xlu0 %v739, 8
      %v1757 = vpop.permute.xlu0 %1756
      %1758 = vrot.lane.b32.xlu0 %v740, 8
      %v1759 = vpop.permute.xlu0 %1758
      %1760 = vrot.lane.b32.xlu0 %v741, 8
      %v1761 = vpop.permute.xlu0 %1760
      %1762 = vrot.lane.b32.xlu0 %v742, 8
      %v1763 = vpop.permute.xlu0 %1762
      %1764 = vrot.lane.b32.xlu0 %v743, 8
      %v1765 = vpop.permute.xlu0 %1764
      %1766 = vrot.lane.b32.xlu0 %v744, 8
      %v1767 = vpop.permute.xlu0 %1766
      %1768 = vrot.lane.b32.xlu0 %v745, 8
      %v1769 = vpop.permute.xlu0 %1768
      %1770 = vrot.lane.b32.xlu0 %v746, 8
      %v1771 = vpop.permute.xlu0 %1770
      %1772 = vrot.lane.b32.xlu0 %v747, 8
      %v1773 = vpop.permute.xlu0 %1772
      %1774 = vrot.lane.b32.xlu0 %v748, 8
      %v1775 = vpop.permute.xlu0 %1774
      %1776 = vrot.lane.b32.xlu0 %v749, 8
      %v1777 = vpop.permute.xlu0 %1776
      %1778 = vrot.lane.b32.xlu0 %v750, 8
      %v1779 = vpop.permute.xlu0 %1778
      %1780 = vrot.lane.b32.xlu0 %v751, 8
      %v1781 = vpop.permute.xlu0 %1780
      %1782 = vrot.lane.b32.xlu0 %v752, 8
      %v1783 = vpop.permute.xlu0 %1782
      %1784 = vrot.lane.b32.xlu0 %v753, 8
      %v1785 = vpop.permute.xlu0 %1784
      %1786 = vrot.lane.b32.xlu0 %v754, 8
      %v1787 = vpop.permute.xlu0 %1786
      %v1804 = vunpack.c.l.b16 %v1468
      %v1805 = vunpack.c.l.b16 %v1469
      %v1806 = vunpack.c.l.b16 %v1470
      %v1807 = vunpack.c.l.b16 %v1471
      %v1808 = vunpack.c.l.b16 %v1472
      %v1809 = vunpack.c.l.b16 %v1473
      %v1810 = vunpack.c.l.b16 %v1474
      %v1811 = vunpack.c.l.b16 %v1475
      %v1812 = vunpack.c.l.b16 %v1476
      %v1813 = vunpack.c.l.b16 %v1477
      %v1814 = vunpack.c.l.b16 %v1478
      %v1815 = vunpack.c.l.b16 %v1479
      %v1816 = vunpack.c.l.b16 %v1480
      %v1817 = vunpack.c.l.b16 %v1481
      %v1818 = vunpack.c.l.b16 %v1482
      %v1819 = vunpack.c.l.b16 %v1483
      %v1820 = vpack.c.b16 %v628, %v1804
      %v1821 = vpack.c.b16 %v630, %v1805
      %v1822 = vpack.c.b16 %v632, %v1806
      %v1823 = vpack.c.b16 %v634, %v1807
      %v1824 = vpack.c.b16 %v636, %v1808
      %v1825 = vpack.c.b16 %v638, %v1809
      %v1826 = vpack.c.b16 %v640, %v1810
      %v1827 = vpack.c.b16 %v642, %v1811
      %v1828 = vpack.c.b16 %v644, %v1812
      %v1829 = vpack.c.b16 %v646, %v1813
      %v1830 = vpack.c.b16 %v648, %v1814
      %v1831 = vpack.c.b16 %v650, %v1815
      %v1832 = vpack.c.b16 %v652, %v1816
      %v1833 = vpack.c.b16 %v654, %v1817
      %v1834 = vpack.c.b16 %v656, %v1818
      %v1835 = vpack.c.b16 %v658, %v1819
      %v1837 = vshrl.u32 %v1820, 16
      %v1839 = vshll.u32 %v1820, 16
      %v1841 = vrot.slane %v1839, 1
      %v1842 = vor.u32 %v1837, %v1841
      %v1843 = vsel %vm370, %v1842, %v765
      %v1844 = vshrl.u32 %v739, 16
      %v1847 = vshrl.u32 %v1821, 16
      %v1849 = vshll.u32 %v1821, 16
      %v1851 = vrot.slane %v1849, 1
      %v1852 = vor.u32 %v1847, %v1851
      %v1853 = vsel %vm370, %v1852, %v777
      %v1854 = vshrl.u32 %v740, 16
      %v1857 = vshrl.u32 %v1822, 16
      %v1859 = vshll.u32 %v1822, 16
      %v1861 = vrot.slane %v1859, 1
      %v1862 = vor.u32 %v1857, %v1861
      %v1863 = vsel %vm370, %v1862, %v789
      %v1864 = vshrl.u32 %v741, 16
      %v1867 = vshrl.u32 %v1823, 16
      %v1869 = vshll.u32 %v1823, 16
      %v1871 = vrot.slane %v1869, 1
      %v1872 = vor.u32 %v1867, %v1871
      %v1873 = vsel %vm370, %v1872, %v801
      %v1874 = vshrl.u32 %v742, 16
      %v1877 = vshrl.u32 %v1824, 16
      %v1879 = vshll.u32 %v1824, 16
      %v1881 = vrot.slane %v1879, 1
      %v1882 = vor.u32 %v1877, %v1881
      %v1883 = vsel %vm370, %v1882, %v813
      %v1884 = vshrl.u32 %v743, 16
      %v1887 = vshrl.u32 %v1825, 16
      %v1889 = vshll.u32 %v1825, 16
      %v1891 = vrot.slane %v1889, 1
      %v1892 = vor.u32 %v1887, %v1891
      %v1893 = vsel %vm370, %v1892, %v825
      %v1894 = vshrl.u32 %v744, 16
      %v1897 = vshrl.u32 %v1826, 16
      %v1899 = vshll.u32 %v1826, 16
      %v1901 = vrot.slane %v1899, 1
      %v1902 = vor.u32 %v1897, %v1901
      %v1903 = vsel %vm370, %v1902, %v837
      %v1904 = vshrl.u32 %v745, 16
      %v1907 = vshrl.u32 %v1827, 16
      %v1909 = vshll.u32 %v1827, 16
      %v1911 = vrot.slane %v1909, 1
      %v1912 = vor.u32 %v1907, %v1911
      %v1913 = vsel %vm370, %v1912, %v849
      %v1914 = vshrl.u32 %v746, 16
      %v1917 = vshrl.u32 %v1828, 16
      %v1919 = vshll.u32 %v1828, 16
      %v1921 = vrot.slane %v1919, 1
      %v1922 = vor.u32 %v1917, %v1921
      %v1923 = vsel %vm370, %v1922, %v861
      %v1924 = vshrl.u32 %v747, 16
      %v1927 = vshrl.u32 %v1829, 16
      %v1929 = vshll.u32 %v1829, 16
      %v1931 = vrot.slane %v1929, 1
      %v1932 = vor.u32 %v1927, %v1931
      %v1933 = vsel %vm370, %v1932, %v873
      %v1934 = vshrl.u32 %v748, 16
      %v1937 = vshrl.u32 %v1830, 16
      %v1939 = vshll.u32 %v1830, 16
      %v1941 = vrot.slane %v1939, 1
      %v1942 = vor.u32 %v1937, %v1941
      %v1943 = vsel %vm370, %v1942, %v885
      %v1944 = vshrl.u32 %v749, 16
      %v1947 = vshrl.u32 %v1831, 16
      %v1949 = vshll.u32 %v1831, 16
      %v1951 = vrot.slane %v1949, 1
      %v1952 = vor.u32 %v1947, %v1951
      %v1953 = vsel %vm370, %v1952, %v897
      %v1954 = vshrl.u32 %v750, 16
      %v1957 = vshrl.u32 %v1832, 16
      %v1959 = vshll.u32 %v1832, 16
      %v1961 = vrot.slane %v1959, 1
      %v1962 = vor.u32 %v1957, %v1961
      %v1963 = vsel %vm370, %v1962, %v909
      %v1964 = vshrl.u32 %v751, 16
      %v1967 = vshrl.u32 %v1833, 16
      %v1969 = vshll.u32 %v1833, 16
      %v1971 = vrot.slane %v1969, 1
      %v1972 = vor.u32 %v1967, %v1971
      %v1973 = vsel %vm370, %v1972, %v921
      %v1974 = vshrl.u32 %v752, 16
      %v1977 = vshrl.u32 %v1834, 16
      %v1979 = vshll.u32 %v1834, 16
      %v1981 = vrot.slane %v1979, 1
      %v1982 = vor.u32 %v1977, %v1981
      %v1983 = vsel %vm370, %v1982, %v933
      %v1984 = vshrl.u32 %v753, 16
      %v1987 = vshrl.u32 %v1835, 16
      %v1989 = vshll.u32 %v1835, 16
      %v1991 = vrot.slane %v1989, 1
      %v1992 = vor.u32 %v1987, %v1991
      %v1993 = vsel %vm370, %v1992, %v945
      %v1994 = vshrl.u32 %v754, 16
      %1996 = vrot.lane.b32.xlu0 %v1843, 12
      %v1997 = vpop.permute.xlu0 %1996
      %1998 = vrot.lane.b32.xlu0 %v1844, 12
      %v1999 = vpop.permute.xlu0 %1998
      %2000 = vrot.lane.b32.xlu0 %v1853, 12
      %v2001 = vpop.permute.xlu0 %2000
      %2002 = vrot.lane.b32.xlu0 %v1854, 12
      %v2003 = vpop.permute.xlu0 %2002
      %2004 = vrot.lane.b32.xlu0 %v1863, 12
      %v2005 = vpop.permute.xlu0 %2004
      %2006 = vrot.lane.b32.xlu0 %v1864, 12
      %v2007 = vpop.permute.xlu0 %2006
      %2008 = vrot.lane.b32.xlu0 %v1873, 12
      %v2009 = vpop.permute.xlu0 %2008
      %2010 = vrot.lane.b32.xlu0 %v1874, 12
      %v2011 = vpop.permute.xlu0 %2010
      %2012 = vrot.lane.b32.xlu0 %v1883, 12
      %v2013 = vpop.permute.xlu0 %2012
      %2014 = vrot.lane.b32.xlu0 %v1884, 12
      %v2015 = vpop.permute.xlu0 %2014
      %2016 = vrot.lane.b32.xlu0 %v1893, 12
      %v2017 = vpop.permute.xlu0 %2016
      %2018 = vrot.lane.b32.xlu0 %v1894, 12
      %v2019 = vpop.permute.xlu0 %2018
      %2020 = vrot.lane.b32.xlu0 %v1903, 12
      %v2021 = vpop.permute.xlu0 %2020
      %2022 = vrot.lane.b32.xlu0 %v1904, 12
      %v2023 = vpop.permute.xlu0 %2022
      %2024 = vrot.lane.b32.xlu0 %v1913, 12
      %v2025 = vpop.permute.xlu0 %2024
      %2026 = vrot.lane.b32.xlu0 %v1914, 12
      %v2027 = vpop.permute.xlu0 %2026
      %2028 = vrot.lane.b32.xlu0 %v1923, 12
      %v2029 = vpop.permute.xlu0 %2028
      %2030 = vrot.lane.b32.xlu0 %v1924, 12
      %v2031 = vpop.permute.xlu0 %2030
      %2032 = vrot.lane.b32.xlu0 %v1933, 12
      %v2033 = vpop.permute.xlu0 %2032
      %2034 = vrot.lane.b32.xlu0 %v1934, 12
      %v2035 = vpop.permute.xlu0 %2034
      %2036 = vrot.lane.b32.xlu0 %v1943, 12
      %v2037 = vpop.permute.xlu0 %2036
      %2038 = vrot.lane.b32.xlu0 %v1944, 12
      %v2039 = vpop.permute.xlu0 %2038
      %2040 = vrot.lane.b32.xlu0 %v1953, 12
      %v2041 = vpop.permute.xlu0 %2040
      %2042 = vrot.lane.b32.xlu0 %v1954, 12
      %v2043 = vpop.permute.xlu0 %2042
      %2044 = vrot.lane.b32.xlu0 %v1963, 12
      %v2045 = vpop.permute.xlu0 %2044
      %2046 = vrot.lane.b32.xlu0 %v1964, 12
      %v2047 = vpop.permute.xlu0 %2046
      %2048 = vrot.lane.b32.xlu0 %v1973, 12
      %v2049 = vpop.permute.xlu0 %2048
      %2050 = vrot.lane.b32.xlu0 %v1974, 12
      %v2051 = vpop.permute.xlu0 %2050
      %2052 = vrot.lane.b32.xlu0 %v1983, 12
      %v2053 = vpop.permute.xlu0 %2052
      %2054 = vrot.lane.b32.xlu0 %v1984, 12
      %v2055 = vpop.permute.xlu0 %2054
      %2056 = vrot.lane.b32.xlu0 %v1993, 12
      %v2057 = vpop.permute.xlu0 %2056
      %2058 = vrot.lane.b32.xlu0 %v1994, 12
      %v2059 = vpop.permute.xlu0 %2058
      %v2061 = vsel %vm979, %v306, %v1693
      %v2063 = vsel %vm979, %v354, %v1695
      %v2065 = vsel %vm979, %v307, %v1697
      %v2067 = vsel %vm979, %v355, %v1699
      %v2069 = vsel %vm979, %v308, %v1701
      %v2071 = vsel %vm979, %v356, %v1703
      %v2073 = vsel %vm979, %v309, %v1705
      %v2075 = vsel %vm979, %v357, %v1707
      %v2077 = vsel %vm979, %v310, %v1709
      %v2079 = vsel %vm979, %v358, %v1711
      %v2081 = vsel %vm979, %v311, %v1713
      %v2083 = vsel %vm979, %v359, %v1715
      %v2085 = vsel %vm979, %v312, %v1717
      %v2087 = vsel %vm979, %v360, %v1719
      %v2089 = vsel %vm979, %v313, %v1721
      %v2091 = vsel %vm979, %v361, %v1723
      %v2093 = vsel %vm979, %v314, %v1725
      %v2095 = vsel %vm979, %v362, %v1727
      %v2097 = vsel %vm979, %v315, %v1729
      %v2099 = vsel %vm979, %v363, %v1731
      %v2101 = vsel %vm979, %v316, %v1733
      %v2103 = vsel %vm979, %v364, %v1735
      %v2105 = vsel %vm979, %v317, %v1737
      %v2107 = vsel %vm979, %v365, %v1739
      %v2109 = vsel %vm979, %v318, %v1741
      %v2111 = vsel %vm979, %v366, %v1743
      %v2113 = vsel %vm979, %v319, %v1745
      %v2115 = vsel %vm979, %v367, %v1747
      %v2117 = vsel %vm979, %v320, %v1749
      %v2119 = vsel %vm979, %v368, %v1751
      %v2121 = vsel %vm979, %v321, %v1753
      %v2123 = vsel %vm979, %v369, %v1755
      %v2124 = vsel %vm1012, %v2061, %v676
      %v2126 = vsel %vm1012, %v2063, %v1757
      %v2127 = vsel %vm1012, %v2065, %v678
      %v2129 = vsel %vm1012, %v2067, %v1759
      %v2130 = vsel %vm1012, %v2069, %v680
      %v2132 = vsel %vm1012, %v2071, %v1761
      %v2133 = vsel %vm1012, %v2073, %v682
      %v2135 = vsel %vm1012, %v2075, %v1763
      %v2136 = vsel %vm1012, %v2077, %v684
      %v2138 = vsel %vm1012, %v2079, %v1765
      %v2139 = vsel %vm1012, %v2081, %v686
      %v2141 = vsel %vm1012, %v2083, %v1767
      %v2142 = vsel %vm1012, %v2085, %v688
      %v2144 = vsel %vm1012, %v2087, %v1769
      %v2145 = vsel %vm1012, %v2089, %v690
      %v2147 = vsel %vm1012, %v2091, %v1771
      %v2148 = vsel %vm1012, %v2093, %v692
      %v2150 = vsel %vm1012, %v2095, %v1773
      %v2151 = vsel %vm1012, %v2097, %v694
      %v2153 = vsel %vm1012, %v2099, %v1775
      %v2154 = vsel %vm1012, %v2101, %v696
      %v2156 = vsel %vm1012, %v2103, %v1777
      %v2157 = vsel %vm1012, %v2105, %v698
      %v2159 = vsel %vm1012, %v2107, %v1779
      %v2160 = vsel %vm1012, %v2109, %v700
      %v2162 = vsel %vm1012, %v2111, %v1781
      %v2163 = vsel %vm1012, %v2113, %v702
      %v2165 = vsel %vm1012, %v2115, %v1783
      %v2166 = vsel %vm1012, %v2117, %v704
      %v2168 = vsel %vm1012, %v2119, %v1785
      %v2169 = vsel %vm1012, %v2121, %v706
      %v2171 = vsel %vm1012, %v2123, %v1787
      %v2173 = vsel %vm1045, %v2124, %v1997
      %v2175 = vsel %vm1045, %v2126, %v1999
      %v2177 = vsel %vm1045, %v2127, %v2001
      %v2179 = vsel %vm1045, %v2129, %v2003
      %v2181 = vsel %vm1045, %v2130, %v2005
      %v2183 = vsel %vm1045, %v2132, %v2007
      %v2185 = vsel %vm1045, %v2133, %v2009
      %v2187 = vsel %vm1045, %v2135, %v2011
      %v2189 = vsel %vm1045, %v2136, %v2013
      %v2191 = vsel %vm1045, %v2138, %v2015
      %v2193 = vsel %vm1045, %v2139, %v2017
      %v2195 = vsel %vm1045, %v2141, %v2019
      %v2197 = vsel %vm1045, %v2142, %v2021
      %v2199 = vsel %vm1045, %v2144, %v2023
      %v2201 = vsel %vm1045, %v2145, %v2025
      %v2203 = vsel %vm1045, %v2147, %v2027
      %v2205 = vsel %vm1045, %v2148, %v2029
      %v2207 = vsel %vm1045, %v2150, %v2031
      %v2209 = vsel %vm1045, %v2151, %v2033
      %v2211 = vsel %vm1045, %v2153, %v2035
      %v2213 = vsel %vm1045, %v2154, %v2037
      %v2215 = vsel %vm1045, %v2156, %v2039
      %v2217 = vsel %vm1045, %v2157, %v2041
      %v2219 = vsel %vm1045, %v2159, %v2043
      %v2221 = vsel %vm1045, %v2160, %v2045
      %v2223 = vsel %vm1045, %v2162, %v2047
      %v2225 = vsel %vm1045, %v2163, %v2049
      %v2227 = vsel %vm1045, %v2165, %v2051
      %v2229 = vsel %vm1045, %v2166, %v2053
      %v2231 = vsel %vm1045, %v2168, %v2055
      %v2233 = vsel %vm1045, %v2169, %v2057
      %v2235 = vsel %vm1045, %v2171, %v2059
      %v2236 = vshrl.u32 %v2173, 16
      %v2238 = vshll.u32 %v2173, 16
      %v2240 = vrot.slane %v2238, 1
      %v2241 = vor.u32 %v2236, %v2240
      %v2242 = vshll.u32 %v2175, 16
      %v2244 = vrot.slane %v2242, 1
      %v2245 = vsel %vm370, %v2241, %v2244
      %v2246 = vshrl.u32 %v2177, 16
      %v2248 = vshll.u32 %v2177, 16
      %v2250 = vrot.slane %v2248, 1
      %v2251 = vor.u32 %v2246, %v2250
      %v2252 = vshll.u32 %v2179, 16
      %v2254 = vrot.slane %v2252, 1
      %v2255 = vsel %vm370, %v2251, %v2254
      %v2256 = vshrl.u32 %v2181, 16
      %v2258 = vshll.u32 %v2181, 16
      %v2260 = vrot.slane %v2258, 1
      %v2261 = vor.u32 %v2256, %v2260
      %v2262 = vshll.u32 %v2183, 16
      %v2264 = vrot.slane %v2262, 1
      %v2265 = vsel %vm370, %v2261, %v2264
      %v2266 = vshrl.u32 %v2185, 16
      %v2268 = vshll.u32 %v2185, 16
      %v2270 = vrot.slane %v2268, 1
      %v2271 = vor.u32 %v2266, %v2270
      %v2272 = vshll.u32 %v2187, 16
      %v2274 = vrot.slane %v2272, 1
      %v2275 = vsel %vm370, %v2271, %v2274
      %v2276 = vshrl.u32 %v2189, 16
      %v2278 = vshll.u32 %v2189, 16
      %v2280 = vrot.slane %v2278, 1
      %v2281 = vor.u32 %v2276, %v2280
      %v2282 = vshll.u32 %v2191, 16
      %v2284 = vrot.slane %v2282, 1
      %v2285 = vsel %vm370, %v2281, %v2284
      %v2286 = vshrl.u32 %v2193, 16
      %v2288 = vshll.u32 %v2193, 16
      %v2290 = vrot.slane %v2288, 1
      %v2291 = vor.u32 %v2286, %v2290
      %v2292 = vshll.u32 %v2195, 16
      %v2294 = vrot.slane %v2292, 1
      %v2295 = vsel %vm370, %v2291, %v2294
      %v2296 = vshrl.u32 %v2197, 16
      %v2298 = vshll.u32 %v2197, 16
      %v2300 = vrot.slane %v2298, 1
      %v2301 = vor.u32 %v2296, %v2300
      %v2302 = vshll.u32 %v2199, 16
      %v2304 = vrot.slane %v2302, 1
      %v2305 = vsel %vm370, %v2301, %v2304
      %v2306 = vshrl.u32 %v2201, 16
      %v2308 = vshll.u32 %v2201, 16
      %v2310 = vrot.slane %v2308, 1
      %v2311 = vor.u32 %v2306, %v2310
      %v2312 = vshll.u32 %v2203, 16
      %v2314 = vrot.slane %v2312, 1
      %v2315 = vsel %vm370, %v2311, %v2314
      %v2316 = vshrl.u32 %v2205, 16
      %v2318 = vshll.u32 %v2205, 16
      %v2320 = vrot.slane %v2318, 1
      %v2321 = vor.u32 %v2316, %v2320
      %v2322 = vshll.u32 %v2207, 16
      %v2324 = vrot.slane %v2322, 1
      %v2325 = vsel %vm370, %v2321, %v2324
      %v2326 = vshrl.u32 %v2209, 16
      %v2328 = vshll.u32 %v2209, 16
      %v2330 = vrot.slane %v2328, 1
      %v2331 = vor.u32 %v2326, %v2330
      %v2332 = vshll.u32 %v2211, 16
      %v2334 = vrot.slane %v2332, 1
      %v2335 = vsel %vm370, %v2331, %v2334
      %v2336 = vshrl.u32 %v2213, 16
      %v2338 = vshll.u32 %v2213, 16
      %v2340 = vrot.slane %v2338, 1
      %v2341 = vor.u32 %v2336, %v2340
      %v2342 = vshll.u32 %v2215, 16
      %v2344 = vrot.slane %v2342, 1
      %v2345 = vsel %vm370, %v2341, %v2344
      %v2346 = vshrl.u32 %v2217, 16
      %v2348 = vshll.u32 %v2217, 16
      %v2350 = vrot.slane %v2348, 1
      %v2351 = vor.u32 %v2346, %v2350
      %v2352 = vshll.u32 %v2219, 16
      %v2354 = vrot.slane %v2352, 1
      %v2355 = vsel %vm370, %v2351, %v2354
      %v2356 = vshrl.u32 %v2221, 16
      %v2358 = vshll.u32 %v2221, 16
      %v2360 = vrot.slane %v2358, 1
      %v2361 = vor.u32 %v2356, %v2360
      %v2362 = vshll.u32 %v2223, 16
      %v2364 = vrot.slane %v2362, 1
      %v2365 = vsel %vm370, %v2361, %v2364
      %v2366 = vshrl.u32 %v2225, 16
      %v2368 = vshll.u32 %v2225, 16
      %v2370 = vrot.slane %v2368, 1
      %v2371 = vor.u32 %v2366, %v2370
      %v2372 = vshll.u32 %v2227, 16
      %v2374 = vrot.slane %v2372, 1
      %v2375 = vsel %vm370, %v2371, %v2374
      %v2376 = vshrl.u32 %v2229, 16
      %v2378 = vshll.u32 %v2229, 16
      %v2380 = vrot.slane %v2378, 1
      %v2381 = vor.u32 %v2376, %v2380
      %v2382 = vshll.u32 %v2231, 16
      %v2384 = vrot.slane %v2382, 1
      %v2385 = vsel %vm370, %v2381, %v2384
      %v2386 = vshrl.u32 %v2233, 16
      %v2388 = vshll.u32 %v2233, 16
      %v2390 = vrot.slane %v2388, 1
      %v2391 = vor.u32 %v2386, %v2390
      %v2392 = vshll.u32 %v2235, 16
      %v2394 = vrot.slane %v2392, 1
      %v2395 = vsel %vm370, %v2391, %v2394
      %s2396 = scalar_lea.vmem %s1, 8
      %v2397 = vld [vmem:[%s2396] sm:$0xf]
      %v2398 = vld [vmem:[%s2396 + $0x4] sm:$0xf]
      %v2401 = vunpack.c.l.b16 %v2397
      %v2402 = vunpack.c.l.b16 %v2398
      %v2403 = vpack.c.b16 %v2402, %v2401
      %v2406 = vsel %vm1086, %v2245, 0
      %v2409 = vsel %vm1086, %v2255, 0
      %v2412 = vsel %vm1086, %v2265, 0
      %v2415 = vsel %vm1086, %v2275, 0
      %v2418 = vsel %vm1086, %v2285, 0
      %v2421 = vsel %vm1086, %v2295, 0
      %v2424 = vsel %vm1086, %v2305, 0
      %v2427 = vsel %vm1086, %v2315, 0
      %v2430 = vsel %vm1086, %v2325, 0
      %v2433 = vsel %vm1086, %v2335, 0
      %v2436 = vsel %vm1086, %v2345, 0
      %v2439 = vsel %vm1086, %v2355, 0
      %v2442 = vsel %vm1086, %v2365, 0
      %v2445 = vsel %vm1086, %v2375, 0
      %v2448 = vsel %vm1086, %v2385, 0
      %v2451 = vsel %vm1086, %v2395, 0
      %2453 = vmatprep.subr.bf16.mxu0 0
      %2454 = vmatpush1.bf16.msra.mxu0 %v2403
      %2455 = vmatprep.subr.bf16.mxu0 0
      %2456 = vmatpush1.bf16.msra.mxu0 0
      %2457 = vmatprep.subr.bf16.mxu0 0
      %2458 = vmatpush1.bf16.msra.mxu0 0
      %2459 = vmatprep.subr.bf16.mxu0 0
      %2460 = vmatpush1.bf16.msra.mxu0 0
      %2461 = vmatprep.subr.bf16.mxu0 0
      %2462 = vmatpush1.bf16.msra.mxu0 0
      %2463 = vmatprep.subr.bf16.mxu0 0
      %2464 = vmatpush1.bf16.msra.mxu0 0
      %2465 = vmatprep.subr.bf16.mxu0 0
      %2466 = vmatpush1.bf16.msra.mxu0 0
      %2467 = vmatprep.subr.bf16.mxu0 0
      %2468 = vmatpush1.bf16.msra.mxu0 0
      %2469 = vmatprep.subr.bf16.mxu0 0
      %2470 = vmatpush1.bf16.msra.mxu0 0
      %2471 = vmatprep.subr.bf16.mxu0 0
      %2472 = vmatpush1.bf16.msra.mxu0 0
      %2473 = vmatprep.subr.bf16.mxu0 0
      %2474 = vmatpush1.bf16.msra.mxu0 0
      %2475 = vmatprep.subr.bf16.mxu0 0
      %2476 = vmatpush1.bf16.msra.mxu0 0
      %2477 = vmatprep.subr.bf16.mxu0 0
      %2478 = vmatpush1.bf16.msra.mxu0 0
      %2479 = vmatprep.subr.bf16.mxu0 0
      %2480 = vmatpush1.bf16.msra.mxu0 0
      %2481 = vmatprep.subr.bf16.mxu0 0
      %2482 = vmatpush1.bf16.msra.mxu0 0
      %2483 = vmatprep.subr.bf16.mxu0 0
      %2484 = vmatpush1.bf16.msra.mxu0 0
      %2485 = vmatprep.mubr.bf16.mxu0 0
      %2486 = vmatmul.mubr.bf16.gmra.mrb[0].mxu0 %v2406
      %v2487 = vpop.f32.mrb[0].mxu0
      %v2488 = vadd.f32 0.0, %v2487
      %v2489 = vpop.f32.mrb[0].mxu0
      %v2490 = vpop.f32.mrb[0].mxu0
      %v2491 = vadd.f32 0.0, %v2490
      %v2492 = vpop.f32.mrb[0].mxu0
      %2493 = vmatprep.mubr.bf16.mxu0 0
      %2494 = vmatmul.mubr.bf16.gmra.mrb[0].mxu0 %v2409
      %v2495 = vpop.f32.mrb[0].mxu0
      %v2496 = vadd.f32 0.0, %v2495
      %v2497 = vpop.f32.mrb[0].mxu0
      %v2498 = vpop.f32.mrb[0].mxu0
      %v2499 = vadd.f32 0.0, %v2498
      %v2500 = vpop.f32.mrb[0].mxu0
      %2501 = vmatprep.mubr.bf16.mxu0 0
      %2502 = vmatmul.mubr.bf16.gmra.mrb[0].mxu0 %v2412
      %v2503 = vpop.f32.mrb[0].mxu0
      %v2504 = vadd.f32 0.0, %v2503
      %v2505 = vpop.f32.mrb[0].mxu0
      %v2506 = vpop.f32.mrb[0].mxu0
      %v2507 = vadd.f32 0.0, %v2506
      %v2508 = vpop.f32.mrb[0].mxu0
      %2509 = vmatprep.mubr.bf16.mxu0 0
      %2510 = vmatmul.mubr.bf16.gmra.mrb[0].mxu0 %v2415
      %v2511 = vpop.f32.mrb[0].mxu0
      %v2512 = vadd.f32 0.0, %v2511
      %v2513 = vpop.f32.mrb[0].mxu0
      %v2514 = vpop.f32.mrb[0].mxu0
      %v2515 = vadd.f32 0.0, %v2514
      %v2516 = vpop.f32.mrb[0].mxu0
      %2517 = vmatprep.mubr.bf16.mxu0 0
      %2518 = vmatmul.mubr.bf16.gmra.mrb[0].mxu0 %v2418
      %v2519 = vpop.f32.mrb[0].mxu0
      %v2520 = vadd.f32 0.0, %v2519
      %v2521 = vpop.f32.mrb[0].mxu0
      %v2522 = vpop.f32.mrb[0].mxu0
      %v2523 = vadd.f32 0.0, %v2522
      %v2524 = vpop.f32.mrb[0].mxu0
      %2525 = vmatprep.mubr.bf16.mxu0 0
      %2526 = vmatmul.mubr.bf16.gmra.mrb[0].mxu0 %v2421
      %v2527 = vpop.f32.mrb[0].mxu0
      %v2528 = vadd.f32 0.0, %v2527
      %v2529 = vpop.f32.mrb[0].mxu0
      %v2530 = vpop.f32.mrb[0].mxu0
      %v2531 = vadd.f32 0.0, %v2530
      %v2532 = vpop.f32.mrb[0].mxu0
      %2533 = vmatprep.mubr.bf16.mxu0 0
      %2534 = vmatmul.mubr.bf16.gmra.mrb[0].mxu0 %v2424
      %v2535 = vpop.f32.mrb[0].mxu0
      %v2536 = vadd.f32 0.0, %v2535
      %v2537 = vpop.f32.mrb[0].mxu0
      %v2538 = vpop.f32.mrb[0].mxu0
      %v2539 = vadd.f32 0.0, %v2538
      %v2540 = vpop.f32.mrb[0].mxu0
      %2541 = vmatprep.mubr.bf16.mxu0 0
      %2542 = vmatmul.mubr.bf16.gmra.mrb[0].mxu0 %v2427
      %v2543 = vpop.f32.mrb[0].mxu0
      %v2544 = vadd.f32 0.0, %v2543
      %v2545 = vpop.f32.mrb[0].mxu0
      %v2546 = vpop.f32.mrb[0].mxu0
      %v2547 = vadd.f32 0.0, %v2546
      %v2548 = vpop.f32.mrb[0].mxu0
      %2549 = vmatprep.mubr.bf16.mxu0 0
      %2550 = vmatmul.mubr.bf16.gmra.mrb[0].mxu0 %v2430
      %v2551 = vpop.f32.mrb[0].mxu0
      %v2552 = vadd.f32 0.0, %v2551
      %v2553 = vpop.f32.mrb[0].mxu0
      %v2554 = vpop.f32.mrb[0].mxu0
      %v2555 = vadd.f32 0.0, %v2554
      %v2556 = vpop.f32.mrb[0].mxu0
      %2557 = vmatprep.mubr.bf16.mxu0 0
      %2558 = vmatmul.mubr.bf16.gmra.mrb[0].mxu0 %v2433
      %v2559 = vpop.f32.mrb[0].mxu0
      %v2560 = vadd.f32 0.0, %v2559
      %v2561 = vpop.f32.mrb[0].mxu0
      %v2562 = vpop.f32.mrb[0].mxu0
      %v2563 = vadd.f32 0.0, %v2562
      %v2564 = vpop.f32.mrb[0].mxu0
      %2565 = vmatprep.mubr.bf16.mxu0 0
      %2566 = vmatmul.mubr.bf16.gmra.mrb[0].mxu0 %v2436
      %v2567 = vpop.f32.mrb[0].mxu0
      %v2568 = vadd.f32 0.0, %v2567
      %v2569 = vpop.f32.mrb[0].mxu0
      %v2570 = vpop.f32.mrb[0].mxu0
      %v2571 = vadd.f32 0.0, %v2570
      %v2572 = vpop.f32.mrb[0].mxu0
      %2573 = vmatprep.mubr.bf16.mxu0 0
      %2574 = vmatmul.mubr.bf16.gmra.mrb[0].mxu0 %v2439
      %v2575 = vpop.f32.mrb[0].mxu0
      %v2576 = vadd.f32 0.0, %v2575
      %v2577 = vpop.f32.mrb[0].mxu0
      %v2578 = vpop.f32.mrb[0].mxu0
      %v2579 = vadd.f32 0.0, %v2578
      %v2580 = vpop.f32.mrb[0].mxu0
      %2581 = vmatprep.mubr.bf16.mxu0 0
      %2582 = vmatmul.mubr.bf16.gmra.mrb[0].mxu0 %v2442
      %v2583 = vpop.f32.mrb[0].mxu0
      %v2584 = vadd.f32 0.0, %v2583
      %v2585 = vpop.f32.mrb[0].mxu0
      %v2586 = vpop.f32.mrb[0].mxu0
      %v2587 = vadd.f32 0.0, %v2586
      %v2588 = vpop.f32.mrb[0].mxu0
      %2589 = vmatprep.mubr.bf16.mxu0 0
      %2590 = vmatmul.mubr.bf16.gmra.mrb[0].mxu0 %v2445
      %v2591 = vpop.f32.mrb[0].mxu0
      %v2592 = vadd.f32 0.0, %v2591
      %v2593 = vpop.f32.mrb[0].mxu0
      %v2594 = vpop.f32.mrb[0].mxu0
      %v2595 = vadd.f32 0.0, %v2594
      %v2596 = vpop.f32.mrb[0].mxu0
      %2597 = vmatprep.mubr.bf16.mxu0 0
      %2598 = vmatmul.mubr.bf16.gmra.mrb[0].mxu0 %v2448
      %v2599 = vpop.f32.mrb[0].mxu0
      %v2600 = vadd.f32 0.0, %v2599
      %v2601 = vpop.f32.mrb[0].mxu0
      %v2602 = vpop.f32.mrb[0].mxu0
      %v2603 = vadd.f32 0.0, %v2602
      %v2604 = vpop.f32.mrb[0].mxu0
      %2605 = vmatprep.mubr.bf16.mxu0 0
      %2606 = vmatmul.mubr.bf16.gmra.mrb[0].mxu0 %v2451
      %v2607 = vpop.f32.mrb[0].mxu0
      %v2608 = vadd.f32 0.0, %v2607
      %v2609 = vpop.f32.mrb[0].mxu0
      %v2610 = vpop.f32.mrb[0].mxu0
      %v2611 = vadd.f32 0.0, %v2610
      %v2612 = vpop.f32.mrb[0].mxu0
      %2613 = vdwg.mxu0
      %v2614 = vsel %vm1012, %v2488, 0.0
      %v2615 = vsel %vm1012, %v2491, 0.0
      %v2616 = vadd.f32 %v2614, %v2615
      %v2617 = vsel %vm1012, %v2496, 0.0
      %v2618 = vadd.f32 %v2616, %v2617
      %v2619 = vsel %vm1012, %v2499, 0.0
      %v2620 = vadd.f32 %v2618, %v2619
      %v2621 = vsel %vm1012, %v2504, 0.0
      %v2622 = vadd.f32 %v2620, %v2621
      %v2623 = vsel %vm1012, %v2507, 0.0
      %v2624 = vadd.f32 %v2622, %v2623
      %v2625 = vsel %vm1012, %v2512, 0.0
      %v2626 = vadd.f32 %v2624, %v2625
      %v2627 = vsel %vm1012, %v2515, 0.0
      %v2628 = vadd.f32 %v2626, %v2627
      %v2629 = vsel %vm1012, %v2520, 0.0
      %v2630 = vadd.f32 %v2628, %v2629
      %v2631 = vsel %vm1012, %v2523, 0.0
      %v2632 = vadd.f32 %v2630, %v2631
      %v2633 = vsel %vm1012, %v2528, 0.0
      %v2634 = vadd.f32 %v2632, %v2633
      %v2635 = vsel %vm1012, %v2531, 0.0
      %v2636 = vadd.f32 %v2634, %v2635
      %v2637 = vsel %vm1012, %v2536, 0.0
      %v2638 = vadd.f32 %v2636, %v2637
      %v2639 = vsel %vm1012, %v2539, 0.0
      %v2640 = vadd.f32 %v2638, %v2639
      %v2641 = vsel %vm1012, %v2544, 0.0
      %v2642 = vadd.f32 %v2640, %v2641
      %v2643 = vsel %vm1012, %v2547, 0.0
      %v2644 = vadd.f32 %v2642, %v2643
      %v2645 = vsel %vm1012, %v2552, 0.0
      %v2646 = vadd.f32 %v2644, %v2645
      %v2647 = vsel %vm1012, %v2555, 0.0
      %v2648 = vadd.f32 %v2646, %v2647
      %v2649 = vsel %vm1012, %v2560, 0.0
      %v2650 = vadd.f32 %v2648, %v2649
      %v2651 = vsel %vm1012, %v2563, 0.0
      %v2652 = vadd.f32 %v2650, %v2651
      %v2653 = vsel %vm1012, %v2568, 0.0
      %v2654 = vadd.f32 %v2652, %v2653
      %v2655 = vsel %vm1012, %v2571, 0.0
      %v2656 = vadd.f32 %v2654, %v2655
      %v2657 = vsel %vm1012, %v2576, 0.0
      %v2658 = vadd.f32 %v2656, %v2657
      %v2659 = vsel %vm1012, %v2579, 0.0
      %v2660 = vadd.f32 %v2658, %v2659
      %v2661 = vsel %vm1012, %v2584, 0.0
      %v2662 = vadd.f32 %v2660, %v2661
      %v2663 = vsel %vm1012, %v2587, 0.0
      %v2664 = vadd.f32 %v2662, %v2663
      %v2665 = vsel %vm1012, %v2592, 0.0
      %v2666 = vadd.f32 %v2664, %v2665
      %v2667 = vsel %vm1012, %v2595, 0.0
      %v2668 = vadd.f32 %v2666, %v2667
      %v2669 = vsel %vm1012, %v2600, 0.0
      %v2670 = vadd.f32 %v2668, %v2669
      %v2671 = vsel %vm1012, %v2603, 0.0
      %v2672 = vadd.f32 %v2670, %v2671
      %v2673 = vsel %vm1012, %v2608, 0.0
      %v2674 = vadd.f32 %v2672, %v2673
      %v2675 = vsel %vm1012, %v2611, 0.0
      %v2676 = vadd.f32 %v2674, %v2675
      %v2677 = vrot.slane %v2676, 4
      %v2678 = vadd.f32 %v2676, %v2677
      %v2679 = vrot.slane %v2678, 2
      %v2680 = vadd.f32 %v2678, %v2679
      %v2681 = vrot.slane %v2680, 1
      %v2682 = vadd.f32 %v2680, %v2681
      %v2683 = vadd.f32 %v1349, %v2682
      %v2684 = vmul.f32 %v2488, %v2488
      %v2685 = vmul.f32 %v2491, %v2491
      %v2686 = vmul.f32 %v2496, %v2496
      %v2687 = vmul.f32 %v2499, %v2499
      %v2688 = vmul.f32 %v2504, %v2504
      %v2689 = vmul.f32 %v2507, %v2507
      %v2690 = vmul.f32 %v2512, %v2512
      %v2691 = vmul.f32 %v2515, %v2515
      %v2692 = vmul.f32 %v2520, %v2520
      %v2693 = vmul.f32 %v2523, %v2523
      %v2694 = vmul.f32 %v2528, %v2528
      %v2695 = vmul.f32 %v2531, %v2531
      %v2696 = vmul.f32 %v2536, %v2536
      %v2697 = vmul.f32 %v2539, %v2539
      %v2698 = vmul.f32 %v2544, %v2544
      %v2699 = vmul.f32 %v2547, %v2547
      %v2700 = vmul.f32 %v2552, %v2552
      %v2701 = vmul.f32 %v2555, %v2555
      %v2702 = vmul.f32 %v2560, %v2560
      %v2703 = vmul.f32 %v2563, %v2563
      %v2704 = vmul.f32 %v2568, %v2568
      %v2705 = vmul.f32 %v2571, %v2571
      %v2706 = vmul.f32 %v2576, %v2576
      %v2707 = vmul.f32 %v2579, %v2579
      %v2708 = vmul.f32 %v2584, %v2584
      %v2709 = vmul.f32 %v2587, %v2587
      %v2710 = vmul.f32 %v2592, %v2592
      %v2711 = vmul.f32 %v2595, %v2595
      %v2712 = vmul.f32 %v2600, %v2600
      %v2713 = vmul.f32 %v2603, %v2603
      %v2714 = vmul.f32 %v2608, %v2608
      %v2715 = vmul.f32 %v2611, %v2611
      %v2716 = vsel %vm1012, %v2684, 0.0
      %v2717 = vsel %vm1012, %v2685, 0.0
      %v2718 = vadd.f32 %v2716, %v2717
      %v2719 = vsel %vm1012, %v2686, 0.0
      %v2720 = vadd.f32 %v2718, %v2719
      %v2721 = vsel %vm1012, %v2687, 0.0
      %v2722 = vadd.f32 %v2720, %v2721
      %v2723 = vsel %vm1012, %v2688, 0.0
      %v2724 = vadd.f32 %v2722, %v2723
      %v2725 = vsel %vm1012, %v2689, 0.0
      %v2726 = vadd.f32 %v2724, %v2725
      %v2727 = vsel %vm1012, %v2690, 0.0
      %v2728 = vadd.f32 %v2726, %v2727
      %v2729 = vsel %vm1012, %v2691, 0.0
      %v2730 = vadd.f32 %v2728, %v2729
      %v2731 = vsel %vm1012, %v2692, 0.0
      %v2732 = vadd.f32 %v2730, %v2731
      %v2733 = vsel %vm1012, %v2693, 0.0
      %v2734 = vadd.f32 %v2732, %v2733
      %v2735 = vsel %vm1012, %v2694, 0.0
      %v2736 = vadd.f32 %v2734, %v2735
      %v2737 = vsel %vm1012, %v2695, 0.0
      %v2738 = vadd.f32 %v2736, %v2737
      %v2739 = vsel %vm1012, %v2696, 0.0
      %v2740 = vadd.f32 %v2738, %v2739
      %v2741 = vsel %vm1012, %v2697, 0.0
      %v2742 = vadd.f32 %v2740, %v2741
      %v2743 = vsel %vm1012, %v2698, 0.0
      %v2744 = vadd.f32 %v2742, %v2743
      %v2745 = vsel %vm1012, %v2699, 0.0
      %v2746 = vadd.f32 %v2744, %v2745
      %v2747 = vsel %vm1012, %v2700, 0.0
      %v2748 = vadd.f32 %v2746, %v2747
      %v2749 = vsel %vm1012, %v2701, 0.0
      %v2750 = vadd.f32 %v2748, %v2749
      %v2751 = vsel %vm1012, %v2702, 0.0
      %v2752 = vadd.f32 %v2750, %v2751
      %v2753 = vsel %vm1012, %v2703, 0.0
      %v2754 = vadd.f32 %v2752, %v2753
      %v2755 = vsel %vm1012, %v2704, 0.0
      %v2756 = vadd.f32 %v2754, %v2755
      %v2757 = vsel %vm1012, %v2705, 0.0
      %v2758 = vadd.f32 %v2756, %v2757
      %v2759 = vsel %vm1012, %v2706, 0.0
      %v2760 = vadd.f32 %v2758, %v2759
      %v2761 = vsel %vm1012, %v2707, 0.0
      %v2762 = vadd.f32 %v2760, %v2761
      %v2763 = vsel %vm1012, %v2708, 0.0
      %v2764 = vadd.f32 %v2762, %v2763
      %v2765 = vsel %vm1012, %v2709, 0.0
      %v2766 = vadd.f32 %v2764, %v2765
      %v2767 = vsel %vm1012, %v2710, 0.0
      %v2768 = vadd.f32 %v2766, %v2767
      %v2769 = vsel %vm1012, %v2711, 0.0
      %v2770 = vadd.f32 %v2768, %v2769
      %v2771 = vsel %vm1012, %v2712, 0.0
      %v2772 = vadd.f32 %v2770, %v2771
      %v2773 = vsel %vm1012, %v2713, 0.0
      %v2774 = vadd.f32 %v2772, %v2773
      %v2775 = vsel %vm1012, %v2714, 0.0
      %v2776 = vadd.f32 %v2774, %v2775
      %v2777 = vsel %vm1012, %v2715, 0.0
      %v2778 = vadd.f32 %v2776, %v2777
      %v2779 = vrot.slane %v2778, 4
      %v2780 = vadd.f32 %v2778, %v2779
      %v2781 = vrot.slane %v2780, 2
      %v2782 = vadd.f32 %v2780, %v2781
      %v2783 = vrot.slane %v2782, 1
      %v2784 = vadd.f32 %v2782, %v2783
      %v2785 = vadd.f32 %v1451, %v2784
      %2818 = vrot.lane.b32.xlu0 %v2488, 8
      %v2819 = vpop.permute.xlu0 %2818
      %2820 = vrot.lane.b32.xlu0 %v2491, 8
      %v2821 = vpop.permute.xlu0 %2820
      %2822 = vrot.lane.b32.xlu0 %v2496, 8
      %v2823 = vpop.permute.xlu0 %2822
      %2824 = vrot.lane.b32.xlu0 %v2499, 8
      %v2825 = vpop.permute.xlu0 %2824
      %2826 = vrot.lane.b32.xlu0 %v2504, 8
      %v2827 = vpop.permute.xlu0 %2826
      %2828 = vrot.lane.b32.xlu0 %v2507, 8
      %v2829 = vpop.permute.xlu0 %2828
      %2830 = vrot.lane.b32.xlu0 %v2512, 8
      %v2831 = vpop.permute.xlu0 %2830
      %2832 = vrot.lane.b32.xlu0 %v2515, 8
      %v2833 = vpop.permute.xlu0 %2832
      %2834 = vrot.lane.b32.xlu0 %v2520, 8
      %v2835 = vpop.permute.xlu0 %2834
      %2836 = vrot.lane.b32.xlu0 %v2523, 8
      %v2837 = vpop.permute.xlu0 %2836
      %2838 = vrot.lane.b32.xlu0 %v2528, 8
      %v2839 = vpop.permute.xlu0 %2838
      %2840 = vrot.lane.b32.xlu0 %v2531, 8
      %v2841 = vpop.permute.xlu0 %2840
      %2842 = vrot.lane.b32.xlu0 %v2536, 8
      %v2843 = vpop.permute.xlu0 %2842
      %2844 = vrot.lane.b32.xlu0 %v2539, 8
      %v2845 = vpop.permute.xlu0 %2844
      %2846 = vrot.lane.b32.xlu0 %v2544, 8
      %v2847 = vpop.permute.xlu0 %2846
      %2848 = vrot.lane.b32.xlu0 %v2547, 8
      %v2849 = vpop.permute.xlu0 %2848
      %2850 = vrot.lane.b32.xlu0 %v2552, 8
      %v2851 = vpop.permute.xlu0 %2850
      %2852 = vrot.lane.b32.xlu0 %v2555, 8
      %v2853 = vpop.permute.xlu0 %2852
      %2854 = vrot.lane.b32.xlu0 %v2560, 8
      %v2855 = vpop.permute.xlu0 %2854
      %2856 = vrot.lane.b32.xlu0 %v2563, 8
      %v2857 = vpop.permute.xlu0 %2856
      %2858 = vrot.lane.b32.xlu0 %v2568, 8
      %v2859 = vpop.permute.xlu0 %2858
      %2860 = vrot.lane.b32.xlu0 %v2571, 8
      %v2861 = vpop.permute.xlu0 %2860
      %2862 = vrot.lane.b32.xlu0 %v2576, 8
      %v2863 = vpop.permute.xlu0 %2862
      %2864 = vrot.lane.b32.xlu0 %v2579, 8
      %v2865 = vpop.permute.xlu0 %2864
      %2866 = vrot.lane.b32.xlu0 %v2584, 8
      %v2867 = vpop.permute.xlu0 %2866
      %2868 = vrot.lane.b32.xlu0 %v2587, 8
      %v2869 = vpop.permute.xlu0 %2868
      %2870 = vrot.lane.b32.xlu0 %v2592, 8
      %v2871 = vpop.permute.xlu0 %2870
      %2872 = vrot.lane.b32.xlu0 %v2595, 8
      %v2873 = vpop.permute.xlu0 %2872
      %2874 = vrot.lane.b32.xlu0 %v2600, 8
      %v2875 = vpop.permute.xlu0 %2874
      %2876 = vrot.lane.b32.xlu0 %v2603, 8
      %v2877 = vpop.permute.xlu0 %2876
      %2878 = vrot.lane.b32.xlu0 %v2608, 8
      %v2879 = vpop.permute.xlu0 %2878
      %2880 = vrot.lane.b32.xlu0 %v2611, 8
      %v2881 = vpop.permute.xlu0 %2880
      %v2914 = vsel %vm1012, %v1154, %v2819
      %v2915 = vsel %vm1012, %v1157, %v2821
      %v2916 = vsel %vm1012, %v1162, %v2823
      %v2917 = vsel %vm1012, %v1165, %v2825
      %v2918 = vsel %vm1012, %v1170, %v2827
      %v2919 = vsel %vm1012, %v1173, %v2829
      %v2920 = vsel %vm1012, %v1178, %v2831
      %v2921 = vsel %vm1012, %v1181, %v2833
      %v2922 = vsel %vm1012, %v1186, %v2835
      %v2923 = vsel %vm1012, %v1189, %v2837
      %v2924 = vsel %vm1012, %v1194, %v2839
      %v2925 = vsel %vm1012, %v1197, %v2841
      %v2926 = vsel %vm1012, %v1202, %v2843
      %v2927 = vsel %vm1012, %v1205, %v2845
      %v2928 = vsel %vm1012, %v1210, %v2847
      %v2929 = vsel %vm1012, %v1213, %v2849
      %v2930 = vsel %vm1012, %v1218, %v2851
      %v2931 = vsel %vm1012, %v1221, %v2853
      %v2932 = vsel %vm1012, %v1226, %v2855
      %v2933 = vsel %vm1012, %v1229, %v2857
      %v2934 = vsel %vm1012, %v1234, %v2859
      %v2935 = vsel %vm1012, %v1237, %v2861
      %v2936 = vsel %vm1012, %v1242, %v2863
      %v2937 = vsel %vm1012, %v1245, %v2865
      %v2938 = vsel %vm1012, %v1250, %v2867
      %v2939 = vsel %vm1012, %v1253, %v2869
      %v2940 = vsel %vm1012, %v1258, %v2871
      %v2941 = vsel %vm1012, %v1261, %v2873
      %v2942 = vsel %vm1012, %v1266, %v2875
      %v2943 = vsel %vm1012, %v1269, %v2877
      %v2944 = vsel %vm1012, %v1274, %v2879
      %v2945 = vsel %vm1012, %v1277, %v2881
      %2946 = vst.msk [vmem:[%s143] sm:$0xff] %vm1086, %v2914
      %2947 = vst.msk [vmem:[%s143 + $0x8] sm:$0xff] %vm1086, %v2915
      %2948 = vst.msk [vmem:[%s143 + $0x20] sm:$0xff] %vm1086, %v2916
      %2949 = vst.msk [vmem:[%s143 + $0x28] sm:$0xff] %vm1086, %v2917
      %2950 = vst.msk [vmem:[%s143 + $0x40] sm:$0xff] %vm1086, %v2918
      %2951 = vst.msk [vmem:[%s143 + $0x48] sm:$0xff] %vm1086, %v2919
      %2952 = vst.msk [vmem:[%s143 + $0x60] sm:$0xff] %vm1086, %v2920
      %2953 = vst.msk [vmem:[%s143 + $0x68] sm:$0xff] %vm1086, %v2921
      %2954 = vst.msk [vmem:[%s143 + $0x80] sm:$0xff] %vm1086, %v2922
      %2955 = vst.msk [vmem:[%s143 + $0x88] sm:$0xff] %vm1086, %v2923
      %2956 = vst.msk [vmem:[%s143 + $0xa0] sm:$0xff] %vm1086, %v2924
      %2957 = vst.msk [vmem:[%s143 + $0xa8] sm:$0xff] %vm1086, %v2925
      %2958 = vst.msk [vmem:[%s143 + $0xc0] sm:$0xff] %vm1086, %v2926
      %2959 = vst.msk [vmem:[%s143 + $0xc8] sm:$0xff] %vm1086, %v2927
      %2960 = vst.msk [vmem:[%s143 + $0xe0] sm:$0xff] %vm1086, %v2928
      %2961 = vst.msk [vmem:[%s143 + $0xe8] sm:$0xff] %vm1086, %v2929
      %2962 = vst.msk [vmem:[%s143 + $0x100] sm:$0xff] %vm1086, %v2930
      %2963 = vst.msk [vmem:[%s143 + $0x108] sm:$0xff] %vm1086, %v2931
      %2964 = vst.msk [vmem:[%s143 + $0x120] sm:$0xff] %vm1086, %v2932
      %2965 = vst.msk [vmem:[%s143 + $0x128] sm:$0xff] %vm1086, %v2933
      %2966 = vst.msk [vmem:[%s143 + $0x140] sm:$0xff] %vm1086, %v2934
      %2967 = vst.msk [vmem:[%s143 + $0x148] sm:$0xff] %vm1086, %v2935
      %2968 = vst.msk [vmem:[%s143 + $0x160] sm:$0xff] %vm1086, %v2936
      %2969 = vst.msk [vmem:[%s143 + $0x168] sm:$0xff] %vm1086, %v2937
      %2970 = vst.msk [vmem:[%s143 + $0x180] sm:$0xff] %vm1086, %v2938
      %2971 = vst.msk [vmem:[%s143 + $0x188] sm:$0xff] %vm1086, %v2939
      %2972 = vst.msk [vmem:[%s143 + $0x1a0] sm:$0xff] %vm1086, %v2940
      %2973 = vst.msk [vmem:[%s143 + $0x1a8] sm:$0xff] %vm1086, %v2941
      %2974 = vst.msk [vmem:[%s143 + $0x1c0] sm:$0xff] %vm1086, %v2942
      %2975 = vst.msk [vmem:[%s143 + $0x1c8] sm:$0xff] %vm1086, %v2943
      %2976 = vst.msk [vmem:[%s143 + $0x1e0] sm:$0xff] %vm1086, %v2944
      %2977 = vst.msk [vmem:[%s143 + $0x1e8] sm:$0xff] %vm1086, %v2945
      %v2978 = vld [vmem:[%s193] sm:$0xf]
      %v2979 = vld [vmem:[%s193 + $0x4] sm:$0xf]
      %v2980 = vld [vmem:[%s193 + $0xc] sm:$0xf]
      %v2981 = vld [vmem:[%s193 + $0x10] sm:$0xf]
      %v2982 = vld [vmem:[%s193 + $0x18] sm:$0xf]
      %v2983 = vld [vmem:[%s193 + $0x1c] sm:$0xf]
      %v2984 = vld [vmem:[%s193 + $0x24] sm:$0xf]
      %v2985 = vld [vmem:[%s193 + $0x28] sm:$0xf]
      %v2986 = vld [vmem:[%s193 + $0x30] sm:$0xf]
      %v2987 = vld [vmem:[%s193 + $0x34] sm:$0xf]
      %v2988 = vld [vmem:[%s193 + $0x3c] sm:$0xf]
      %v2989 = vld [vmem:[%s193 + $0x40] sm:$0xf]
      %v2990 = vld [vmem:[%s193 + $0x48] sm:$0xf]
      %v2991 = vld [vmem:[%s193 + $0x4c] sm:$0xf]
      %v2992 = vld [vmem:[%s193 + $0x54] sm:$0xf]
      %v2993 = vld [vmem:[%s193 + $0x58] sm:$0xf]
      %v2994 = vld [vmem:[%s193 + $0x60] sm:$0xf]
      %v2995 = vld [vmem:[%s193 + $0x64] sm:$0xf]
      %v2996 = vld [vmem:[%s193 + $0x6c] sm:$0xf]
      %v2997 = vld [vmem:[%s193 + $0x70] sm:$0xf]
      %v2998 = vld [vmem:[%s193 + $0x78] sm:$0xf]
      %v2999 = vld [vmem:[%s193 + $0x7c] sm:$0xf]
      %v3000 = vld [vmem:[%s193 + $0x84] sm:$0xf]
      %v3001 = vld [vmem:[%s193 + $0x88] sm:$0xf]
      %v3002 = vld [vmem:[%s193 + $0x90] sm:$0xf]
      %v3003 = vld [vmem:[%s193 + $0x94] sm:$0xf]
      %v3004 = vld [vmem:[%s193 + $0x9c] sm:$0xf]
      %v3005 = vld [vmem:[%s193 + $0xa0] sm:$0xf]
      %v3006 = vld [vmem:[%s193 + $0xa8] sm:$0xf]
      %v3007 = vld [vmem:[%s193 + $0xac] sm:$0xf]
      %v3008 = vld [vmem:[%s193 + $0xb4] sm:$0xf]
      %v3009 = vld [vmem:[%s193 + $0xb8] sm:$0xf]
      %v3010 = vld [vmem:[%s193 + $0x8] sm:$0x1]
      %v3011 = vld [vmem:[%s193 + $0x14] sm:$0x1]
      %v3012 = vld [vmem:[%s193 + $0x20] sm:$0x1]
      %v3013 = vld [vmem:[%s193 + $0x2c] sm:$0x1]
      %v3014 = vld [vmem:[%s193 + $0x38] sm:$0x1]
      %v3015 = vld [vmem:[%s193 + $0x44] sm:$0x1]
      %v3016 = vld [vmem:[%s193 + $0x50] sm:$0x1]
      %v3017 = vld [vmem:[%s193 + $0x5c] sm:$0x1]
      %v3018 = vld [vmem:[%s193 + $0x68] sm:$0x1]
      %v3019 = vld [vmem:[%s193 + $0x74] sm:$0x1]
      %v3020 = vld [vmem:[%s193 + $0x80] sm:$0x1]
      %v3021 = vld [vmem:[%s193 + $0x8c] sm:$0x1]
      %v3022 = vld [vmem:[%s193 + $0x98] sm:$0x1]
      %v3023 = vld [vmem:[%s193 + $0xa4] sm:$0x1]
      %v3024 = vld [vmem:[%s193 + $0xb0] sm:$0x1]
      %v3025 = vld [vmem:[%s193 + $0xbc] sm:$0x1]
      %s3026 = scalar_lea.vmem %s138, 24
      %v3027 = vld [vmem:[%s3026] sm:$0xf]
      %v3028 = vld [vmem:[%s3026 + $0x4] sm:$0xf]
      %v3029 = vld [vmem:[%s3026 + $0xc] sm:$0xf]
      %v3030 = vld [vmem:[%s3026 + $0x10] sm:$0xf]
      %v3031 = vld [vmem:[%s3026 + $0x18] sm:$0xf]
      %v3032 = vld [vmem:[%s3026 + $0x1c] sm:$0xf]
      %v3033 = vld [vmem:[%s3026 + $0x24] sm:$0xf]
      %v3034 = vld [vmem:[%s3026 + $0x28] sm:$0xf]
      %v3035 = vld [vmem:[%s3026 + $0x30] sm:$0xf]
      %v3036 = vld [vmem:[%s3026 + $0x34] sm:$0xf]
      %v3037 = vld [vmem:[%s3026 + $0x3c] sm:$0xf]
      %v3038 = vld [vmem:[%s3026 + $0x40] sm:$0xf]
      %v3039 = vld [vmem:[%s3026 + $0x48] sm:$0xf]
      %v3040 = vld [vmem:[%s3026 + $0x4c] sm:$0xf]
      %v3041 = vld [vmem:[%s3026 + $0x54] sm:$0xf]
      %v3042 = vld [vmem:[%s3026 + $0x58] sm:$0xf]
      %v3043 = vld [vmem:[%s3026 + $0x60] sm:$0xf]
      %v3044 = vld [vmem:[%s3026 + $0x64] sm:$0xf]
      %v3045 = vld [vmem:[%s3026 + $0x6c] sm:$0xf]
      %v3046 = vld [vmem:[%s3026 + $0x70] sm:$0xf]
      %v3047 = vld [vmem:[%s3026 + $0x78] sm:$0xf]
      %v3048 = vld [vmem:[%s3026 + $0x7c] sm:$0xf]
      %v3049 = vld [vmem:[%s3026 + $0x84] sm:$0xf]
      %v3050 = vld [vmem:[%s3026 + $0x88] sm:$0xf]
      %v3051 = vld [vmem:[%s3026 + $0x90] sm:$0xf]
      %v3052 = vld [vmem:[%s3026 + $0x94] sm:$0xf]
      %v3053 = vld [vmem:[%s3026 + $0x9c] sm:$0xf]
      %v3054 = vld [vmem:[%s3026 + $0xa0] sm:$0xf]
      %v3055 = vld [vmem:[%s3026 + $0xa8] sm:$0xf]
      %v3056 = vld [vmem:[%s3026 + $0xac] sm:$0xf]
      %v3057 = vld [vmem:[%s3026 + $0xb4] sm:$0xf]
      %v3058 = vld [vmem:[%s3026 + $0xb8] sm:$0xf]
      %v3059 = vld [vmem:[%s3026 + $0x8] sm:$0x1]
      %v3060 = vld [vmem:[%s3026 + $0x14] sm:$0x1]
      %v3061 = vld [vmem:[%s3026 + $0x20] sm:$0x1]
      %v3062 = vld [vmem:[%s3026 + $0x2c] sm:$0x1]
      %v3063 = vld [vmem:[%s3026 + $0x38] sm:$0x1]
      %v3064 = vld [vmem:[%s3026 + $0x44] sm:$0x1]
      %v3065 = vld [vmem:[%s3026 + $0x50] sm:$0x1]
      %v3066 = vld [vmem:[%s3026 + $0x5c] sm:$0x1]
      %v3067 = vld [vmem:[%s3026 + $0x68] sm:$0x1]
      %v3068 = vld [vmem:[%s3026 + $0x74] sm:$0x1]
      %v3069 = vld [vmem:[%s3026 + $0x80] sm:$0x1]
      %v3070 = vld [vmem:[%s3026 + $0x8c] sm:$0x1]
      %v3071 = vld [vmem:[%s3026 + $0x98] sm:$0x1]
      %v3072 = vld [vmem:[%s3026 + $0xa4] sm:$0x1]
      %v3073 = vld [vmem:[%s3026 + $0xb0] sm:$0x1]
      %v3074 = vld [vmem:[%s3026 + $0xbc] sm:$0x1]
      %v3107 = vunpack.c.l.b16 %v2978
      %v3108 = vunpack.c.l.b16 %v2979
      %v3109 = vunpack.c.l.b16 %v2980
      %v3110 = vunpack.c.l.b16 %v2981
      %v3111 = vunpack.c.l.b16 %v2982
      %v3112 = vunpack.c.l.b16 %v2983
      %v3113 = vunpack.c.l.b16 %v2984
      %v3114 = vunpack.c.l.b16 %v2985
      %v3115 = vunpack.c.l.b16 %v2986
      %v3116 = vunpack.c.l.b16 %v2987
      %v3117 = vunpack.c.l.b16 %v2988
      %v3118 = vunpack.c.l.b16 %v2989
      %v3119 = vunpack.c.l.b16 %v2990
      %v3120 = vunpack.c.l.b16 %v2991
      %v3121 = vunpack.c.l.b16 %v2992
      %v3122 = vunpack.c.l.b16 %v2993
      %v3123 = vunpack.c.l.b16 %v2994
      %v3124 = vunpack.c.l.b16 %v2995
      %v3125 = vunpack.c.l.b16 %v2996
      %v3126 = vunpack.c.l.b16 %v2997
      %v3127 = vunpack.c.l.b16 %v2998
      %v3128 = vunpack.c.l.b16 %v2999
      %v3129 = vunpack.c.l.b16 %v3000
      %v3130 = vunpack.c.l.b16 %v3001
      %v3131 = vunpack.c.l.b16 %v3002
      %v3132 = vunpack.c.l.b16 %v3003
      %v3133 = vunpack.c.l.b16 %v3004
      %v3134 = vunpack.c.l.b16 %v3005
      %v3135 = vunpack.c.l.b16 %v3006
      %v3136 = vunpack.c.l.b16 %v3007
      %v3137 = vunpack.c.l.b16 %v3008
      %v3138 = vunpack.c.l.b16 %v3009
      %v3139 = vpack.c.b16 %v3108, %v3107
      %v3140 = vpack.c.b16 %v3110, %v3109
      %v3141 = vpack.c.b16 %v3112, %v3111
      %v3142 = vpack.c.b16 %v3114, %v3113
      %v3143 = vpack.c.b16 %v3116, %v3115
      %v3144 = vpack.c.b16 %v3118, %v3117
      %v3145 = vpack.c.b16 %v3120, %v3119
      %v3146 = vpack.c.b16 %v3122, %v3121
      %v3147 = vpack.c.b16 %v3124, %v3123
      %v3148 = vpack.c.b16 %v3126, %v3125
      %v3149 = vpack.c.b16 %v3128, %v3127
      %v3150 = vpack.c.b16 %v3130, %v3129
      %v3151 = vpack.c.b16 %v3132, %v3131
      %v3152 = vpack.c.b16 %v3134, %v3133
      %v3153 = vpack.c.b16 %v3136, %v3135
      %v3154 = vpack.c.b16 %v3138, %v3137
      %v3171 = vunpack.c.l.b16 %v3010
      %v3172 = vunpack.c.l.b16 %v3011
      %v3173 = vunpack.c.l.b16 %v3012
      %v3174 = vunpack.c.l.b16 %v3013
      %v3175 = vunpack.c.l.b16 %v3014
      %v3176 = vunpack.c.l.b16 %v3015
      %v3177 = vunpack.c.l.b16 %v3016
      %v3178 = vunpack.c.l.b16 %v3017
      %v3179 = vunpack.c.l.b16 %v3018
      %v3180 = vunpack.c.l.b16 %v3019
      %v3181 = vunpack.c.l.b16 %v3020
      %v3182 = vunpack.c.l.b16 %v3021
      %v3183 = vunpack.c.l.b16 %v3022
      %v3184 = vunpack.c.l.b16 %v3023
      %v3185 = vunpack.c.l.b16 %v3024
      %v3186 = vunpack.c.l.b16 %v3025
      %v3187 = vpack.c.b16 %v3171, %v3171
      %v3188 = vpack.c.b16 %v3172, %v3172
      %v3189 = vpack.c.b16 %v3173, %v3173
      %v3190 = vpack.c.b16 %v3174, %v3174
      %v3191 = vpack.c.b16 %v3175, %v3175
      %v3192 = vpack.c.b16 %v3176, %v3176
      %v3193 = vpack.c.b16 %v3177, %v3177
      %v3194 = vpack.c.b16 %v3178, %v3178
      %v3195 = vpack.c.b16 %v3179, %v3179
      %v3196 = vpack.c.b16 %v3180, %v3180
      %v3197 = vpack.c.b16 %v3181, %v3181
      %v3198 = vpack.c.b16 %v3182, %v3182
      %v3199 = vpack.c.b16 %v3183, %v3183
      %v3200 = vpack.c.b16 %v3184, %v3184
      %v3201 = vpack.c.b16 %v3185, %v3185
      %v3202 = vpack.c.b16 %v3186, %v3186
      %v3204 = vshrl.u32 %v3139, 16
      %v3206 = vshll.u32 %v3139, 16
      %v3208 = vrot.slane %v3206, 1
      %v3209 = vor.u32 %v3204, %v3208
      %v3211 = vshll.u32 %v3187, 16
      %v3213 = vrot.slane %v3211, 1
      %v3214 = vsel %vm370, %v3209, %v3213
      %v3216 = vshrl.u32 %v3140, 16
      %v3218 = vshll.u32 %v3140, 16
      %v3220 = vrot.slane %v3218, 1
      %v3221 = vor.u32 %v3216, %v3220
      %v3223 = vshll.u32 %v3188, 16
      %v3225 = vrot.slane %v3223, 1
      %v3226 = vsel %vm370, %v3221, %v3225
      %v3228 = vshrl.u32 %v3141, 16
      %v3230 = vshll.u32 %v3141, 16
      %v3232 = vrot.slane %v3230, 1
      %v3233 = vor.u32 %v3228, %v3232
      %v3235 = vshll.u32 %v3189, 16
      %v3237 = vrot.slane %v3235, 1
      %v3238 = vsel %vm370, %v3233, %v3237
      %v3240 = vshrl.u32 %v3142, 16
      %v3242 = vshll.u32 %v3142, 16
      %v3244 = vrot.slane %v3242, 1
      %v3245 = vor.u32 %v3240, %v3244
      %v3247 = vshll.u32 %v3190, 16
      %v3249 = vrot.slane %v3247, 1
      %v3250 = vsel %vm370, %v3245, %v3249
      %v3252 = vshrl.u32 %v3143, 16
      %v3254 = vshll.u32 %v3143, 16
      %v3256 = vrot.slane %v3254, 1
      %v3257 = vor.u32 %v3252, %v3256
      %v3259 = vshll.u32 %v3191, 16
      %v3261 = vrot.slane %v3259, 1
      %v3262 = vsel %vm370, %v3257, %v3261
      %v3264 = vshrl.u32 %v3144, 16
      %v3266 = vshll.u32 %v3144, 16
      %v3268 = vrot.slane %v3266, 1
      %v3269 = vor.u32 %v3264, %v3268
      %v3271 = vshll.u32 %v3192, 16
      %v3273 = vrot.slane %v3271, 1
      %v3274 = vsel %vm370, %v3269, %v3273
      %v3276 = vshrl.u32 %v3145, 16
      %v3278 = vshll.u32 %v3145, 16
      %v3280 = vrot.slane %v3278, 1
      %v3281 = vor.u32 %v3276, %v3280
      %v3283 = vshll.u32 %v3193, 16
      %v3285 = vrot.slane %v3283, 1
      %v3286 = vsel %vm370, %v3281, %v3285
      %v3288 = vshrl.u32 %v3146, 16
      %v3290 = vshll.u32 %v3146, 16
      %v3292 = vrot.slane %v3290, 1
      %v3293 = vor.u32 %v3288, %v3292
      %v3295 = vshll.u32 %v3194, 16
      %v3297 = vrot.slane %v3295, 1
      %v3298 = vsel %vm370, %v3293, %v3297
      %v3300 = vshrl.u32 %v3147, 16
      %v3302 = vshll.u32 %v3147, 16
      %v3304 = vrot.slane %v3302, 1
      %v3305 = vor.u32 %v3300, %v3304
      %v3307 = vshll.u32 %v3195, 16
      %v3309 = vrot.slane %v3307, 1
      %v3310 = vsel %vm370, %v3305, %v3309
      %v3312 = vshrl.u32 %v3148, 16
      %v3314 = vshll.u32 %v3148, 16
      %v3316 = vrot.slane %v3314, 1
      %v3317 = vor.u32 %v3312, %v3316
      %v3319 = vshll.u32 %v3196, 16
      %v3321 = vrot.slane %v3319, 1
      %v3322 = vsel %vm370, %v3317, %v3321
      %v3324 = vshrl.u32 %v3149, 16
      %v3326 = vshll.u32 %v3149, 16
      %v3328 = vrot.slane %v3326, 1
      %v3329 = vor.u32 %v3324, %v3328
      %v3331 = vshll.u32 %v3197, 16
      %v3333 = vrot.slane %v3331, 1
      %v3334 = vsel %vm370, %v3329, %v3333
      %v3336 = vshrl.u32 %v3150, 16
      %v3338 = vshll.u32 %v3150, 16
      %v3340 = vrot.slane %v3338, 1
      %v3341 = vor.u32 %v3336, %v3340
      %v3343 = vshll.u32 %v3198, 16
      %v3345 = vrot.slane %v3343, 1
      %v3346 = vsel %vm370, %v3341, %v3345
      %v3348 = vshrl.u32 %v3151, 16
      %v3350 = vshll.u32 %v3151, 16
      %v3352 = vrot.slane %v3350, 1
      %v3353 = vor.u32 %v3348, %v3352
      %v3355 = vshll.u32 %v3199, 16
      %v3357 = vrot.slane %v3355, 1
      %v3358 = vsel %vm370, %v3353, %v3357
      %v3360 = vshrl.u32 %v3152, 16
      %v3362 = vshll.u32 %v3152, 16
      %v3364 = vrot.slane %v3362, 1
      %v3365 = vor.u32 %v3360, %v3364
      %v3367 = vshll.u32 %v3200, 16
      %v3369 = vrot.slane %v3367, 1
      %v3370 = vsel %vm370, %v3365, %v3369
      %v3372 = vshrl.u32 %v3153, 16
      %v3374 = vshll.u32 %v3153, 16
      %v3376 = vrot.slane %v3374, 1
      %v3377 = vor.u32 %v3372, %v3376
      %v3379 = vshll.u32 %v3201, 16
      %v3381 = vrot.slane %v3379, 1
      %v3382 = vsel %vm370, %v3377, %v3381
      %v3384 = vshrl.u32 %v3154, 16
      %v3386 = vshll.u32 %v3154, 16
      %v3388 = vrot.slane %v3386, 1
      %v3389 = vor.u32 %v3384, %v3388
      %v3391 = vshll.u32 %v3202, 16
      %v3393 = vrot.slane %v3391, 1
      %v3394 = vsel %vm370, %v3389, %v3393
      %3395 = vrot.lane.b32.xlu0 %v3214, 4
      %v3396 = vpop.permute.xlu0 %3395
      %3397 = vrot.lane.b32.xlu0 %v3226, 4
      %v3398 = vpop.permute.xlu0 %3397
      %3399 = vrot.lane.b32.xlu0 %v3238, 4
      %v3400 = vpop.permute.xlu0 %3399
      %3401 = vrot.lane.b32.xlu0 %v3250, 4
      %v3402 = vpop.permute.xlu0 %3401
      %3403 = vrot.lane.b32.xlu0 %v3262, 4
      %v3404 = vpop.permute.xlu0 %3403
      %3405 = vrot.lane.b32.xlu0 %v3274, 4
      %v3406 = vpop.permute.xlu0 %3405
      %3407 = vrot.lane.b32.xlu0 %v3286, 4
      %v3408 = vpop.permute.xlu0 %3407
      %3409 = vrot.lane.b32.xlu0 %v3298, 4
      %v3410 = vpop.permute.xlu0 %3409
      %3411 = vrot.lane.b32.xlu0 %v3310, 4
      %v3412 = vpop.permute.xlu0 %3411
      %3413 = vrot.lane.b32.xlu0 %v3322, 4
      %v3414 = vpop.permute.xlu0 %3413
      %3415 = vrot.lane.b32.xlu0 %v3334, 4
      %v3416 = vpop.permute.xlu0 %3415
      %3417 = vrot.lane.b32.xlu0 %v3346, 4
      %v3418 = vpop.permute.xlu0 %3417
      %3419 = vrot.lane.b32.xlu0 %v3358, 4
      %v3420 = vpop.permute.xlu0 %3419
      %3421 = vrot.lane.b32.xlu0 %v3370, 4
      %v3422 = vpop.permute.xlu0 %3421
      %3423 = vrot.lane.b32.xlu0 %v3382, 4
      %v3424 = vpop.permute.xlu0 %3423
      %3425 = vrot.lane.b32.xlu0 %v3394, 4
      %v3426 = vpop.permute.xlu0 %3425
      %v3459 = vunpack.c.l.b16 %v3027
      %v3460 = vunpack.c.l.b16 %v3028
      %v3461 = vunpack.c.l.b16 %v3029
      %v3462 = vunpack.c.l.b16 %v3030
      %v3463 = vunpack.c.l.b16 %v3031
      %v3464 = vunpack.c.l.b16 %v3032
      %v3465 = vunpack.c.l.b16 %v3033
      %v3466 = vunpack.c.l.b16 %v3034
      %v3467 = vunpack.c.l.b16 %v3035
      %v3468 = vunpack.c.l.b16 %v3036
      %v3469 = vunpack.c.l.b16 %v3037
      %v3470 = vunpack.c.l.b16 %v3038
      %v3471 = vunpack.c.l.b16 %v3039
      %v3472 = vunpack.c.l.b16 %v3040
      %v3473 = vunpack.c.l.b16 %v3041
      %v3474 = vunpack.c.l.b16 %v3042
      %v3475 = vunpack.c.l.b16 %v3043
      %v3476 = vunpack.c.l.b16 %v3044
      %v3477 = vunpack.c.l.b16 %v3045
      %v3478 = vunpack.c.l.b16 %v3046
      %v3479 = vunpack.c.l.b16 %v3047
      %v3480 = vunpack.c.l.b16 %v3048
      %v3481 = vunpack.c.l.b16 %v3049
      %v3482 = vunpack.c.l.b16 %v3050
      %v3483 = vunpack.c.l.b16 %v3051
      %v3484 = vunpack.c.l.b16 %v3052
      %v3485 = vunpack.c.l.b16 %v3053
      %v3486 = vunpack.c.l.b16 %v3054
      %v3487 = vunpack.c.l.b16 %v3055
      %v3488 = vunpack.c.l.b16 %v3056
      %v3489 = vunpack.c.l.b16 %v3057
      %v3490 = vunpack.c.l.b16 %v3058
      %v3491 = vpack.c.b16 %v3460, %v3459
      %v3492 = vpack.c.b16 %v3462, %v3461
      %v3493 = vpack.c.b16 %v3464, %v3463
      %v3494 = vpack.c.b16 %v3466, %v3465
      %v3495 = vpack.c.b16 %v3468, %v3467
      %v3496 = vpack.c.b16 %v3470, %v3469
      %v3497 = vpack.c.b16 %v3472, %v3471
      %v3498 = vpack.c.b16 %v3474, %v3473
      %v3499 = vpack.c.b16 %v3476, %v3475
      %v3500 = vpack.c.b16 %v3478, %v3477
      %v3501 = vpack.c.b16 %v3480, %v3479
      %v3502 = vpack.c.b16 %v3482, %v3481
      %v3503 = vpack.c.b16 %v3484, %v3483
      %v3504 = vpack.c.b16 %v3486, %v3485
      %v3505 = vpack.c.b16 %v3488, %v3487
      %v3506 = vpack.c.b16 %v3490, %v3489
      %3507 = vrot.lane.b32.xlu0 %v3491, 8
      %v3508 = vpop.permute.xlu0 %3507
      %3509 = vrot.lane.b32.xlu0 %v3492, 8
      %v3510 = vpop.permute.xlu0 %3509
      %3511 = vrot.lane.b32.xlu0 %v3493, 8
      %v3512 = vpop.permute.xlu0 %3511
      %3513 = vrot.lane.b32.xlu0 %v3494, 8
      %v3514 = vpop.permute.xlu0 %3513
      %3515 = vrot.lane.b32.xlu0 %v3495, 8
      %v3516 = vpop.permute.xlu0 %3515
      %3517 = vrot.lane.b32.xlu0 %v3496, 8
      %v3518 = vpop.permute.xlu0 %3517
      %3519 = vrot.lane.b32.xlu0 %v3497, 8
      %v3520 = vpop.permute.xlu0 %3519
      %3521 = vrot.lane.b32.xlu0 %v3498, 8
      %v3522 = vpop.permute.xlu0 %3521
      %3523 = vrot.lane.b32.xlu0 %v3499, 8
      %v3524 = vpop.permute.xlu0 %3523
      %3525 = vrot.lane.b32.xlu0 %v3500, 8
      %v3526 = vpop.permute.xlu0 %3525
      %3527 = vrot.lane.b32.xlu0 %v3501, 8
      %v3528 = vpop.permute.xlu0 %3527
      %3529 = vrot.lane.b32.xlu0 %v3502, 8
      %v3530 = vpop.permute.xlu0 %3529
      %3531 = vrot.lane.b32.xlu0 %v3503, 8
      %v3532 = vpop.permute.xlu0 %3531
      %3533 = vrot.lane.b32.xlu0 %v3504, 8
      %v3534 = vpop.permute.xlu0 %3533
      %3535 = vrot.lane.b32.xlu0 %v3505, 8
      %v3536 = vpop.permute.xlu0 %3535
      %3537 = vrot.lane.b32.xlu0 %v3506, 8
      %v3538 = vpop.permute.xlu0 %3537
      %v3555 = vunpack.c.l.b16 %v3059
      %v3556 = vunpack.c.l.b16 %v3060
      %v3557 = vunpack.c.l.b16 %v3061
      %v3558 = vunpack.c.l.b16 %v3062
      %v3559 = vunpack.c.l.b16 %v3063
      %v3560 = vunpack.c.l.b16 %v3064
      %v3561 = vunpack.c.l.b16 %v3065
      %v3562 = vunpack.c.l.b16 %v3066
      %v3563 = vunpack.c.l.b16 %v3067
      %v3564 = vunpack.c.l.b16 %v3068
      %v3565 = vunpack.c.l.b16 %v3069
      %v3566 = vunpack.c.l.b16 %v3070
      %v3567 = vunpack.c.l.b16 %v3071
      %v3568 = vunpack.c.l.b16 %v3072
      %v3569 = vunpack.c.l.b16 %v3073
      %v3570 = vunpack.c.l.b16 %v3074
      %v3571 = vpack.c.b16 %v3555, %v3555
      %v3572 = vpack.c.b16 %v3556, %v3556
      %v3573 = vpack.c.b16 %v3557, %v3557
      %v3574 = vpack.c.b16 %v3558, %v3558
      %v3575 = vpack.c.b16 %v3559, %v3559
      %v3576 = vpack.c.b16 %v3560, %v3560
      %v3577 = vpack.c.b16 %v3561, %v3561
      %v3578 = vpack.c.b16 %v3562, %v3562
      %v3579 = vpack.c.b16 %v3563, %v3563
      %v3580 = vpack.c.b16 %v3564, %v3564
      %v3581 = vpack.c.b16 %v3565, %v3565
      %v3582 = vpack.c.b16 %v3566, %v3566
      %v3583 = vpack.c.b16 %v3567, %v3567
      %v3584 = vpack.c.b16 %v3568, %v3568
      %v3585 = vpack.c.b16 %v3569, %v3569
      %v3586 = vpack.c.b16 %v3570, %v3570
      %v3588 = vshrl.u32 %v3491, 16
      %v3590 = vshll.u32 %v3491, 16
      %v3592 = vrot.slane %v3590, 1
      %v3593 = vor.u32 %v3588, %v3592
      %v3595 = vshll.u32 %v3571, 16
      %v3597 = vrot.slane %v3595, 1
      %v3598 = vsel %vm370, %v3593, %v3597
      %v3600 = vshrl.u32 %v3492, 16
      %v3602 = vshll.u32 %v3492, 16
      %v3604 = vrot.slane %v3602, 1
      %v3605 = vor.u32 %v3600, %v3604
      %v3607 = vshll.u32 %v3572, 16
      %v3609 = vrot.slane %v3607, 1
      %v3610 = vsel %vm370, %v3605, %v3609
      %v3612 = vshrl.u32 %v3493, 16
      %v3614 = vshll.u32 %v3493, 16
      %v3616 = vrot.slane %v3614, 1
      %v3617 = vor.u32 %v3612, %v3616
      %v3619 = vshll.u32 %v3573, 16
      %v3621 = vrot.slane %v3619, 1
      %v3622 = vsel %vm370, %v3617, %v3621
      %v3624 = vshrl.u32 %v3494, 16
      %v3626 = vshll.u32 %v3494, 16
      %v3628 = vrot.slane %v3626, 1
      %v3629 = vor.u32 %v3624, %v3628
      %v3631 = vshll.u32 %v3574, 16
      %v3633 = vrot.slane %v3631, 1
      %v3634 = vsel %vm370, %v3629, %v3633
      %v3636 = vshrl.u32 %v3495, 16
      %v3638 = vshll.u32 %v3495, 16
      %v3640 = vrot.slane %v3638, 1
      %v3641 = vor.u32 %v3636, %v3640
      %v3643 = vshll.u32 %v3575, 16
      %v3645 = vrot.slane %v3643, 1
      %v3646 = vsel %vm370, %v3641, %v3645
      %v3648 = vshrl.u32 %v3496, 16
      %v3650 = vshll.u32 %v3496, 16
      %v3652 = vrot.slane %v3650, 1
      %v3653 = vor.u32 %v3648, %v3652
      %v3655 = vshll.u32 %v3576, 16
      %v3657 = vrot.slane %v3655, 1
      %v3658 = vsel %vm370, %v3653, %v3657
      %v3660 = vshrl.u32 %v3497, 16
      %v3662 = vshll.u32 %v3497, 16
      %v3664 = vrot.slane %v3662, 1
      %v3665 = vor.u32 %v3660, %v3664
      %v3667 = vshll.u32 %v3577, 16
      %v3669 = vrot.slane %v3667, 1
      %v3670 = vsel %vm370, %v3665, %v3669
      %v3672 = vshrl.u32 %v3498, 16
      %v3674 = vshll.u32 %v3498, 16
      %v3676 = vrot.slane %v3674, 1
      %v3677 = vor.u32 %v3672, %v3676
      %v3679 = vshll.u32 %v3578, 16
      %v3681 = vrot.slane %v3679, 1
      %v3682 = vsel %vm370, %v3677, %v3681
      %v3684 = vshrl.u32 %v3499, 16
      %v3686 = vshll.u32 %v3499, 16
      %v3688 = vrot.slane %v3686, 1
      %v3689 = vor.u32 %v3684, %v3688
      %v3691 = vshll.u32 %v3579, 16
      %v3693 = vrot.slane %v3691, 1
      %v3694 = vsel %vm370, %v3689, %v3693
      %v3696 = vshrl.u32 %v3500, 16
      %v3698 = vshll.u32 %v3500, 16
      %v3700 = vrot.slane %v3698, 1
      %v3701 = vor.u32 %v3696, %v3700
      %v3703 = vshll.u32 %v3580, 16
      %v3705 = vrot.slane %v3703, 1
      %v3706 = vsel %vm370, %v3701, %v3705
      %v3708 = vshrl.u32 %v3501, 16
      %v3710 = vshll.u32 %v3501, 16
      %v3712 = vrot.slane %v3710, 1
      %v3713 = vor.u32 %v3708, %v3712
      %v3715 = vshll.u32 %v3581, 16
      %v3717 = vrot.slane %v3715, 1
      %v3718 = vsel %vm370, %v3713, %v3717
      %v3720 = vshrl.u32 %v3502, 16
      %v3722 = vshll.u32 %v3502, 16
      %v3724 = vrot.slane %v3722, 1
      %v3725 = vor.u32 %v3720, %v3724
      %v3727 = vshll.u32 %v3582, 16
      %v3729 = vrot.slane %v3727, 1
      %v3730 = vsel %vm370, %v3725, %v3729
      %v3732 = vshrl.u32 %v3503, 16
      %v3734 = vshll.u32 %v3503, 16
      %v3736 = vrot.slane %v3734, 1
      %v3737 = vor.u32 %v3732, %v3736
      %v3739 = vshll.u32 %v3583, 16
      %v3741 = vrot.slane %v3739, 1
      %v3742 = vsel %vm370, %v3737, %v3741
      %v3744 = vshrl.u32 %v3504, 16
      %v3746 = vshll.u32 %v3504, 16
      %v3748 = vrot.slane %v3746, 1
      %v3749 = vor.u32 %v3744, %v3748
      %v3751 = vshll.u32 %v3584, 16
      %v3753 = vrot.slane %v3751, 1
      %v3754 = vsel %vm370, %v3749, %v3753
      %v3756 = vshrl.u32 %v3505, 16
      %v3758 = vshll.u32 %v3505, 16
      %v3760 = vrot.slane %v3758, 1
      %v3761 = vor.u32 %v3756, %v3760
      %v3763 = vshll.u32 %v3585, 16
      %v3765 = vrot.slane %v3763, 1
      %v3766 = vsel %vm370, %v3761, %v3765
      %v3768 = vshrl.u32 %v3506, 16
      %v3770 = vshll.u32 %v3506, 16
      %v3772 = vrot.slane %v3770, 1
      %v3773 = vor.u32 %v3768, %v3772
      %v3775 = vshll.u32 %v3586, 16
      %v3777 = vrot.slane %v3775, 1
      %v3778 = vsel %vm370, %v3773, %v3777
      %3779 = vrot.lane.b32.xlu0 %v3598, 12
      %v3780 = vpop.permute.xlu0 %3779
      %3781 = vrot.lane.b32.xlu0 %v3610, 12
      %v3782 = vpop.permute.xlu0 %3781
      %3783 = vrot.lane.b32.xlu0 %v3622, 12
      %v3784 = vpop.permute.xlu0 %3783
      %3785 = vrot.lane.b32.xlu0 %v3634, 12
      %v3786 = vpop.permute.xlu0 %3785
      %3787 = vrot.lane.b32.xlu0 %v3646, 12
      %v3788 = vpop.permute.xlu0 %3787
      %3789 = vrot.lane.b32.xlu0 %v3658, 12
      %v3790 = vpop.permute.xlu0 %3789
      %3791 = vrot.lane.b32.xlu0 %v3670, 12
      %v3792 = vpop.permute.xlu0 %3791
      %3793 = vrot.lane.b32.xlu0 %v3682, 12
      %v3794 = vpop.permute.xlu0 %3793
      %3795 = vrot.lane.b32.xlu0 %v3694, 12
      %v3796 = vpop.permute.xlu0 %3795
      %3797 = vrot.lane.b32.xlu0 %v3706, 12
      %v3798 = vpop.permute.xlu0 %3797
      %3799 = vrot.lane.b32.xlu0 %v3718, 12
      %v3800 = vpop.permute.xlu0 %3799
      %3801 = vrot.lane.b32.xlu0 %v3730, 12
      %v3802 = vpop.permute.xlu0 %3801
      %3803 = vrot.lane.b32.xlu0 %v3742, 12
      %v3804 = vpop.permute.xlu0 %3803
      %3805 = vrot.lane.b32.xlu0 %v3754, 12
      %v3806 = vpop.permute.xlu0 %3805
      %3807 = vrot.lane.b32.xlu0 %v3766, 12
      %v3808 = vpop.permute.xlu0 %3807
      %3809 = vrot.lane.b32.xlu0 %v3778, 12
      %v3810 = vpop.permute.xlu0 %3809
      %v3812 = vsel %vm979, %v3139, %v3396
      %v3814 = vsel %vm979, %v3140, %v3398
      %v3816 = vsel %vm979, %v3141, %v3400
      %v3818 = vsel %vm979, %v3142, %v3402
      %v3820 = vsel %vm979, %v3143, %v3404
      %v3822 = vsel %vm979, %v3144, %v3406
      %v3824 = vsel %vm979, %v3145, %v3408
      %v3826 = vsel %vm979, %v3146, %v3410
      %v3828 = vsel %vm979, %v3147, %v3412
      %v3830 = vsel %vm979, %v3148, %v3414
      %v3832 = vsel %vm979, %v3149, %v3416
      %v3834 = vsel %vm979, %v3150, %v3418
      %v3836 = vsel %vm979, %v3151, %v3420
      %v3838 = vsel %vm979, %v3152, %v3422
      %v3840 = vsel %vm979, %v3153, %v3424
      %v3842 = vsel %vm979, %v3154, %v3426
      %v3844 = vsel %vm1012, %v3812, %v3508
      %v3846 = vsel %vm1012, %v3814, %v3510
      %v3848 = vsel %vm1012, %v3816, %v3512
      %v3850 = vsel %vm1012, %v3818, %v3514
      %v3852 = vsel %vm1012, %v3820, %v3516
      %v3854 = vsel %vm1012, %v3822, %v3518
      %v3856 = vsel %vm1012, %v3824, %v3520
      %v3858 = vsel %vm1012, %v3826, %v3522
      %v3860 = vsel %vm1012, %v3828, %v3524
      %v3862 = vsel %vm1012, %v3830, %v3526
      %v3864 = vsel %vm1012, %v3832, %v3528
      %v3866 = vsel %vm1012, %v3834, %v3530
      %v3868 = vsel %vm1012, %v3836, %v3532
      %v3870 = vsel %vm1012, %v3838, %v3534
      %v3872 = vsel %vm1012, %v3840, %v3536
      %v3874 = vsel %vm1012, %v3842, %v3538
      %v3876 = vsel %vm1045, %v3844, %v3780
      %v3878 = vsel %vm1045, %v3846, %v3782
      %v3880 = vsel %vm1045, %v3848, %v3784
      %v3882 = vsel %vm1045, %v3850, %v3786
      %v3884 = vsel %vm1045, %v3852, %v3788
      %v3886 = vsel %vm1045, %v3854, %v3790
      %v3888 = vsel %vm1045, %v3856, %v3792
      %v3890 = vsel %vm1045, %v3858, %v3794
      %v3892 = vsel %vm1045, %v3860, %v3796
      %v3894 = vsel %vm1045, %v3862, %v3798
      %v3896 = vsel %vm1045, %v3864, %v3800
      %v3898 = vsel %vm1045, %v3866, %v3802
      %v3900 = vsel %vm1045, %v3868, %v3804
      %v3902 = vsel %vm1045, %v3870, %v3806
      %v3904 = vsel %vm1045, %v3872, %v3808
      %v3906 = vsel %vm1045, %v3874, %v3810
      %s3907 = scalar_lea.vmem %s1, 16
      %v3908 = vld [vmem:[%s3907] sm:$0xf]
      %v3909 = vld [vmem:[%s3907 + $0x4] sm:$0xf]
      %v3912 = vunpack.c.l.b16 %v3908
      %v3913 = vunpack.c.l.b16 %v3909
      %v3914 = vpack.c.b16 %v3913, %v3912
      %v3916 = vsel %vm1086, %v3876, 0
      %v3918 = vsel %vm1086, %v3878, 0
      %v3920 = vsel %vm1086, %v3880, 0
      %v3922 = vsel %vm1086, %v3882, 0
      %v3924 = vsel %vm1086, %v3884, 0
      %v3926 = vsel %vm1086, %v3886, 0
      %v3928 = vsel %vm1086, %v3888, 0
      %v3930 = vsel %vm1086, %v3890, 0
      %v3932 = vsel %vm1086, %v3892, 0
      %v3934 = vsel %vm1086, %v3894, 0
      %v3936 = vsel %vm1086, %v3896, 0
      %v3938 = vsel %vm1086, %v3898, 0
      %v3940 = vsel %vm1086, %v3900, 0
      %v3942 = vsel %vm1086, %v3902, 0
      %v3944 = vsel %vm1086, %v3904, 0
      %v3946 = vsel %vm1086, %v3906, 0
      %3948 = vmatprep.subr.bf16.mxu0 0
      %3949 = vmatpush1.bf16.msra.mxu0 %v3914
      %3950 = vmatprep.subr.bf16.mxu0 0
      %3951 = vmatpush1.bf16.msra.mxu0 0
      %3952 = vmatprep.subr.bf16.mxu0 0
      %3953 = vmatpush1.bf16.msra.mxu0 0
      %3954 = vmatprep.subr.bf16.mxu0 0
      %3955 = vmatpush1.bf16.msra.mxu0 0
      %3956 = vmatprep.subr.bf16.mxu0 0
      %3957 = vmatpush1.bf16.msra.mxu0 0
      %3958 = vmatprep.subr.bf16.mxu0 0
      %3959 = vmatpush1.bf16.msra.mxu0 0
      %3960 = vmatprep.subr.bf16.mxu0 0
      %3961 = vmatpush1.bf16.msra.mxu0 0
      %3962 = vmatprep.subr.bf16.mxu0 0
      %3963 = vmatpush1.bf16.msra.mxu0 0
      %3964 = vmatprep.subr.bf16.mxu0 0
      %3965 = vmatpush1.bf16.msra.mxu0 0
      %3966 = vmatprep.subr.bf16.mxu0 0
      %3967 = vmatpush1.bf16.msra.mxu0 0
      %3968 = vmatprep.subr.bf16.mxu0 0
      %3969 = vmatpush1.bf16.msra.mxu0 0
      %3970 = vmatprep.subr.bf16.mxu0 0
      %3971 = vmatpush1.bf16.msra.mxu0 0
      %3972 = vmatprep.subr.bf16.mxu0 0
      %3973 = vmatpush1.bf16.msra.mxu0 0
      %3974 = vmatprep.subr.bf16.mxu0 0
      %3975 = vmatpush1.bf16.msra.mxu0 0
      %3976 = vmatprep.subr.bf16.mxu0 0
      %3977 = vmatpush1.bf16.msra.mxu0 0
      %3978 = vmatprep.subr.bf16.mxu0 0
      %3979 = vmatpush1.bf16.msra.mxu0 0
      %3980 = vmatprep.mubr.bf16.mxu0 0
      %3981 = vmatmul.mubr.bf16.gmra.mrb[0].mxu0 %v3916
      %v3982 = vpop.f32.mrb[0].mxu0
      %v3983 = vadd.f32 0.0, %v3982
      %v3984 = vpop.f32.mrb[0].mxu0
      %v3985 = vpop.f32.mrb[0].mxu0
      %v3986 = vadd.f32 0.0, %v3985
      %v3987 = vpop.f32.mrb[0].mxu0
      %3988 = vmatprep.mubr.bf16.mxu0 0
      %3989 = vmatmul.mubr.bf16.gmra.mrb[0].mxu0 %v3918
      %v3990 = vpop.f32.mrb[0].mxu0
      %v3991 = vadd.f32 0.0, %v3990
      %v3992 = vpop.f32.mrb[0].mxu0
      %v3993 = vpop.f32.mrb[0].mxu0
      %v3994 = vadd.f32 0.0, %v3993
      %v3995 = vpop.f32.mrb[0].mxu0
      %3996 = vmatprep.mubr.bf16.mxu0 0
      %3997 = vmatmul.mubr.bf16.gmra.mrb[0].mxu0 %v3920
      %v3998 = vpop.f32.mrb[0].mxu0
      %v3999 = vadd.f32 0.0, %v3998
      %v4000 = vpop.f32.mrb[0].mxu0
      %v4001 = vpop.f32.mrb[0].mxu0
      %v4002 = vadd.f32 0.0, %v4001
      %v4003 = vpop.f32.mrb[0].mxu0
      %4004 = vmatprep.mubr.bf16.mxu0 0
      %4005 = vmatmul.mubr.bf16.gmra.mrb[0].mxu0 %v3922
      %v4006 = vpop.f32.mrb[0].mxu0
      %v4007 = vadd.f32 0.0, %v4006
      %v4008 = vpop.f32.mrb[0].mxu0
      %v4009 = vpop.f32.mrb[0].mxu0
      %v4010 = vadd.f32 0.0, %v4009
      %v4011 = vpop.f32.mrb[0].mxu0
      %4012 = vmatprep.mubr.bf16.mxu0 0
      %4013 = vmatmul.mubr.bf16.gmra.mrb[0].mxu0 %v3924
      %v4014 = vpop.f32.mrb[0].mxu0
      %v4015 = vadd.f32 0.0, %v4014
      %v4016 = vpop.f32.mrb[0].mxu0
      %v4017 = vpop.f32.mrb[0].mxu0
      %v4018 = vadd.f32 0.0, %v4017
      %v4019 = vpop.f32.mrb[0].mxu0
      %4020 = vmatprep.mubr.bf16.mxu0 0
      %4021 = vmatmul.mubr.bf16.gmra.mrb[0].mxu0 %v3926
      %v4022 = vpop.f32.mrb[0].mxu0
      %v4023 = vadd.f32 0.0, %v4022
      %v4024 = vpop.f32.mrb[0].mxu0
      %v4025 = vpop.f32.mrb[0].mxu0
      %v4026 = vadd.f32 0.0, %v4025
      %v4027 = vpop.f32.mrb[0].mxu0
      %4028 = vmatprep.mubr.bf16.mxu0 0
      %4029 = vmatmul.mubr.bf16.gmra.mrb[0].mxu0 %v3928
      %v4030 = vpop.f32.mrb[0].mxu0
      %v4031 = vadd.f32 0.0, %v4030
      %v4032 = vpop.f32.mrb[0].mxu0
      %v4033 = vpop.f32.mrb[0].mxu0
      %v4034 = vadd.f32 0.0, %v4033
      %v4035 = vpop.f32.mrb[0].mxu0
      %4036 = vmatprep.mubr.bf16.mxu0 0
      %4037 = vmatmul.mubr.bf16.gmra.mrb[0].mxu0 %v3930
      %v4038 = vpop.f32.mrb[0].mxu0
      %v4039 = vadd.f32 0.0, %v4038
      %v4040 = vpop.f32.mrb[0].mxu0
      %v4041 = vpop.f32.mrb[0].mxu0
      %v4042 = vadd.f32 0.0, %v4041
      %v4043 = vpop.f32.mrb[0].mxu0
      %4044 = vmatprep.mubr.bf16.mxu0 0
      %4045 = vmatmul.mubr.bf16.gmra.mrb[0].mxu0 %v3932
      %v4046 = vpop.f32.mrb[0].mxu0
      %v4047 = vadd.f32 0.0, %v4046
      %v4048 = vpop.f32.mrb[0].mxu0
      %v4049 = vpop.f32.mrb[0].mxu0
      %v4050 = vadd.f32 0.0, %v4049
      %v4051 = vpop.f32.mrb[0].mxu0
      %4052 = vmatprep.mubr.bf16.mxu0 0
      %4053 = vmatmul.mubr.bf16.gmra.mrb[0].mxu0 %v3934
      %v4054 = vpop.f32.mrb[0].mxu0
      %v4055 = vadd.f32 0.0, %v4054
      %v4056 = vpop.f32.mrb[0].mxu0
      %v4057 = vpop.f32.mrb[0].mxu0
      %v4058 = vadd.f32 0.0, %v4057
      %v4059 = vpop.f32.mrb[0].mxu0
      %4060 = vmatprep.mubr.bf16.mxu0 0
      %4061 = vmatmul.mubr.bf16.gmra.mrb[0].mxu0 %v3936
      %v4062 = vpop.f32.mrb[0].mxu0
      %v4063 = vadd.f32 0.0, %v4062
      %v4064 = vpop.f32.mrb[0].mxu0
      %v4065 = vpop.f32.mrb[0].mxu0
      %v4066 = vadd.f32 0.0, %v4065
      %v4067 = vpop.f32.mrb[0].mxu0
      %4068 = vmatprep.mubr.bf16.mxu0 0
      %4069 = vmatmul.mubr.bf16.gmra.mrb[0].mxu0 %v3938
      %v4070 = vpop.f32.mrb[0].mxu0
      %v4071 = vadd.f32 0.0, %v4070
      %v4072 = vpop.f32.mrb[0].mxu0
      %v4073 = vpop.f32.mrb[0].mxu0
      %v4074 = vadd.f32 0.0, %v4073
      %v4075 = vpop.f32.mrb[0].mxu0
      %4076 = vmatprep.mubr.bf16.mxu0 0
      %4077 = vmatmul.mubr.bf16.gmra.mrb[0].mxu0 %v3940
      %v4078 = vpop.f32.mrb[0].mxu0
      %v4079 = vadd.f32 0.0, %v4078
      %v4080 = vpop.f32.mrb[0].mxu0
      %v4081 = vpop.f32.mrb[0].mxu0
      %v4082 = vadd.f32 0.0, %v4081
      %v4083 = vpop.f32.mrb[0].mxu0
      %4084 = vmatprep.mubr.bf16.mxu0 0
      %4085 = vmatmul.mubr.bf16.gmra.mrb[0].mxu0 %v3942
      %v4086 = vpop.f32.mrb[0].mxu0
      %v4087 = vadd.f32 0.0, %v4086
      %v4088 = vpop.f32.mrb[0].mxu0
      %v4089 = vpop.f32.mrb[0].mxu0
      %v4090 = vadd.f32 0.0, %v4089
      %v4091 = vpop.f32.mrb[0].mxu0
      %4092 = vmatprep.mubr.bf16.mxu0 0
      %4093 = vmatmul.mubr.bf16.gmra.mrb[0].mxu0 %v3944
      %v4094 = vpop.f32.mrb[0].mxu0
      %v4095 = vadd.f32 0.0, %v4094
      %v4096 = vpop.f32.mrb[0].mxu0
      %v4097 = vpop.f32.mrb[0].mxu0
      %v4098 = vadd.f32 0.0, %v4097
      %v4099 = vpop.f32.mrb[0].mxu0
      %4100 = vmatprep.mubr.bf16.mxu0 0
      %4101 = vmatmul.mubr.bf16.gmra.mrb[0].mxu0 %v3946
      %v4102 = vpop.f32.mrb[0].mxu0
      %v4103 = vadd.f32 0.0, %v4102
      %v4104 = vpop.f32.mrb[0].mxu0
      %v4105 = vpop.f32.mrb[0].mxu0
      %v4106 = vadd.f32 0.0, %v4105
      %v4107 = vpop.f32.mrb[0].mxu0
      %4108 = vdwg.mxu0
      %v4109 = vsel %vm1012, %v3983, 0.0
      %v4110 = vsel %vm1012, %v3986, 0.0
      %v4111 = vadd.f32 %v4109, %v4110
      %v4112 = vsel %vm1012, %v3991, 0.0
      %v4113 = vadd.f32 %v4111, %v4112
      %v4114 = vsel %vm1012, %v3994, 0.0
      %v4115 = vadd.f32 %v4113, %v4114
      %v4116 = vsel %vm1012, %v3999, 0.0
      %v4117 = vadd.f32 %v4115, %v4116
      %v4118 = vsel %vm1012, %v4002, 0.0
      %v4119 = vadd.f32 %v4117, %v4118
      %v4120 = vsel %vm1012, %v4007, 0.0
      %v4121 = vadd.f32 %v4119, %v4120
      %v4122 = vsel %vm1012, %v4010, 0.0
      %v4123 = vadd.f32 %v4121, %v4122
      %v4124 = vsel %vm1012, %v4015, 0.0
      %v4125 = vadd.f32 %v4123, %v4124
      %v4126 = vsel %vm1012, %v4018, 0.0
      %v4127 = vadd.f32 %v4125, %v4126
      %v4128 = vsel %vm1012, %v4023, 0.0
      %v4129 = vadd.f32 %v4127, %v4128
      %v4130 = vsel %vm1012, %v4026, 0.0
      %v4131 = vadd.f32 %v4129, %v4130
      %v4132 = vsel %vm1012, %v4031, 0.0
      %v4133 = vadd.f32 %v4131, %v4132
      %v4134 = vsel %vm1012, %v4034, 0.0
      %v4135 = vadd.f32 %v4133, %v4134
      %v4136 = vsel %vm1012, %v4039, 0.0
      %v4137 = vadd.f32 %v4135, %v4136
      %v4138 = vsel %vm1012, %v4042, 0.0
      %v4139 = vadd.f32 %v4137, %v4138
      %v4140 = vsel %vm1012, %v4047, 0.0
      %v4141 = vadd.f32 %v4139, %v4140
      %v4142 = vsel %vm1012, %v4050, 0.0
      %v4143 = vadd.f32 %v4141, %v4142
      %v4144 = vsel %vm1012, %v4055, 0.0
      %v4145 = vadd.f32 %v4143, %v4144
      %v4146 = vsel %vm1012, %v4058, 0.0
      %v4147 = vadd.f32 %v4145, %v4146
      %v4148 = vsel %vm1012, %v4063, 0.0
      %v4149 = vadd.f32 %v4147, %v4148
      %v4150 = vsel %vm1012, %v4066, 0.0
      %v4151 = vadd.f32 %v4149, %v4150
      %v4152 = vsel %vm1012, %v4071, 0.0
      %v4153 = vadd.f32 %v4151, %v4152
      %v4154 = vsel %vm1012, %v4074, 0.0
      %v4155 = vadd.f32 %v4153, %v4154
      %v4156 = vsel %vm1012, %v4079, 0.0
      %v4157 = vadd.f32 %v4155, %v4156
      %v4158 = vsel %vm1012, %v4082, 0.0
      %v4159 = vadd.f32 %v4157, %v4158
      %v4160 = vsel %vm1012, %v4087, 0.0
      %v4161 = vadd.f32 %v4159, %v4160
      %v4162 = vsel %vm1012, %v4090, 0.0
      %v4163 = vadd.f32 %v4161, %v4162
      %v4164 = vsel %vm1012, %v4095, 0.0
      %v4165 = vadd.f32 %v4163, %v4164
      %v4166 = vsel %vm1012, %v4098, 0.0
      %v4167 = vadd.f32 %v4165, %v4166
      %v4168 = vsel %vm1012, %v4103, 0.0
      %v4169 = vadd.f32 %v4167, %v4168
      %v4170 = vsel %vm1012, %v4106, 0.0
      %v4171 = vadd.f32 %v4169, %v4170
      %v4172 = vrot.slane %v4171, 4
      %v4173 = vadd.f32 %v4171, %v4172
      %v4174 = vrot.slane %v4173, 2
      %v4175 = vadd.f32 %v4173, %v4174
      %v4176 = vrot.slane %v4175, 1
      %v4177 = vadd.f32 %v4175, %v4176
      %v4178 = vadd.f32 %v2683, %v4177
      %v4179 = vmul.f32 %v3983, %v3983
      %v4180 = vmul.f32 %v3986, %v3986
      %v4181 = vmul.f32 %v3991, %v3991
      %v4182 = vmul.f32 %v3994, %v3994
      %v4183 = vmul.f32 %v3999, %v3999
      %v4184 = vmul.f32 %v4002, %v4002
      %v4185 = vmul.f32 %v4007, %v4007
      %v4186 = vmul.f32 %v4010, %v4010
      %v4187 = vmul.f32 %v4015, %v4015
      %v4188 = vmul.f32 %v4018, %v4018
      %v4189 = vmul.f32 %v4023, %v4023
      %v4190 = vmul.f32 %v4026, %v4026
      %v4191 = vmul.f32 %v4031, %v4031
      %v4192 = vmul.f32 %v4034, %v4034
      %v4193 = vmul.f32 %v4039, %v4039
      %v4194 = vmul.f32 %v4042, %v4042
      %v4195 = vmul.f32 %v4047, %v4047
      %v4196 = vmul.f32 %v4050, %v4050
      %v4197 = vmul.f32 %v4055, %v4055
      %v4198 = vmul.f32 %v4058, %v4058
      %v4199 = vmul.f32 %v4063, %v4063
      %v4200 = vmul.f32 %v4066, %v4066
      %v4201 = vmul.f32 %v4071, %v4071
      %v4202 = vmul.f32 %v4074, %v4074
      %v4203 = vmul.f32 %v4079, %v4079
      %v4204 = vmul.f32 %v4082, %v4082
      %v4205 = vmul.f32 %v4087, %v4087
      %v4206 = vmul.f32 %v4090, %v4090
      %v4207 = vmul.f32 %v4095, %v4095
      %v4208 = vmul.f32 %v4098, %v4098
      %v4209 = vmul.f32 %v4103, %v4103
      %v4210 = vmul.f32 %v4106, %v4106
      %v4211 = vsel %vm1012, %v4179, 0.0
      %v4212 = vsel %vm1012, %v4180, 0.0
      %v4213 = vadd.f32 %v4211, %v4212
      %v4214 = vsel %vm1012, %v4181, 0.0
      %v4215 = vadd.f32 %v4213, %v4214
      %v4216 = vsel %vm1012, %v4182, 0.0
      %v4217 = vadd.f32 %v4215, %v4216
      %v4218 = vsel %vm1012, %v4183, 0.0
      %v4219 = vadd.f32 %v4217, %v4218
      %v4220 = vsel %vm1012, %v4184, 0.0
      %v4221 = vadd.f32 %v4219, %v4220
      %v4222 = vsel %vm1012, %v4185, 0.0
      %v4223 = vadd.f32 %v4221, %v4222
      %v4224 = vsel %vm1012, %v4186, 0.0
      %v4225 = vadd.f32 %v4223, %v4224
      %v4226 = vsel %vm1012, %v4187, 0.0
      %v4227 = vadd.f32 %v4225, %v4226
      %v4228 = vsel %vm1012, %v4188, 0.0
      %v4229 = vadd.f32 %v4227, %v4228
      %v4230 = vsel %vm1012, %v4189, 0.0
      %v4231 = vadd.f32 %v4229, %v4230
      %v4232 = vsel %vm1012, %v4190, 0.0
      %v4233 = vadd.f32 %v4231, %v4232
      %v4234 = vsel %vm1012, %v4191, 0.0
      %v4235 = vadd.f32 %v4233, %v4234
      %v4236 = vsel %vm1012, %v4192, 0.0
      %v4237 = vadd.f32 %v4235, %v4236
      %v4238 = vsel %vm1012, %v4193, 0.0
      %v4239 = vadd.f32 %v4237, %v4238
      %v4240 = vsel %vm1012, %v4194, 0.0
      %v4241 = vadd.f32 %v4239, %v4240
      %v4242 = vsel %vm1012, %v4195, 0.0
      %v4243 = vadd.f32 %v4241, %v4242
      %v4244 = vsel %vm1012, %v4196, 0.0
      %v4245 = vadd.f32 %v4243, %v4244
      %v4246 = vsel %vm1012, %v4197, 0.0
      %v4247 = vadd.f32 %v4245, %v4246
      %v4248 = vsel %vm1012, %v4198, 0.0
      %v4249 = vadd.f32 %v4247, %v4248
      %v4250 = vsel %vm1012, %v4199, 0.0
      %v4251 = vadd.f32 %v4249, %v4250
      %v4252 = vsel %vm1012, %v4200, 0.0
      %v4253 = vadd.f32 %v4251, %v4252
      %v4254 = vsel %vm1012, %v4201, 0.0
      %v4255 = vadd.f32 %v4253, %v4254
      %v4256 = vsel %vm1012, %v4202, 0.0
      %v4257 = vadd.f32 %v4255, %v4256
      %v4258 = vsel %vm1012, %v4203, 0.0
      %v4259 = vadd.f32 %v4257, %v4258
      %v4260 = vsel %vm1012, %v4204, 0.0
      %v4261 = vadd.f32 %v4259, %v4260
      %v4262 = vsel %vm1012, %v4205, 0.0
      %v4263 = vadd.f32 %v4261, %v4262
      %v4264 = vsel %vm1012, %v4206, 0.0
      %v4265 = vadd.f32 %v4263, %v4264
      %v4266 = vsel %vm1012, %v4207, 0.0
      %v4267 = vadd.f32 %v4265, %v4266
      %v4268 = vsel %vm1012, %v4208, 0.0
      %v4269 = vadd.f32 %v4267, %v4268
      %v4270 = vsel %vm1012, %v4209, 0.0
      %v4271 = vadd.f32 %v4269, %v4270
      %v4272 = vsel %vm1012, %v4210, 0.0
      %v4273 = vadd.f32 %v4271, %v4272
      %v4274 = vrot.slane %v4273, 4
      %v4275 = vadd.f32 %v4273, %v4274
      %v4276 = vrot.slane %v4275, 2
      %v4277 = vadd.f32 %v4275, %v4276
      %v4278 = vrot.slane %v4277, 1
      %v4279 = vadd.f32 %v4277, %v4278
      %v4280 = vadd.f32 %v2785, %v4279
      %v4281 = vld [vmem:[%s193] sm:$0xe]
      %v4282 = vld [vmem:[%s193 + $0xc] sm:$0xe]
      %v4283 = vld [vmem:[%s193 + $0x18] sm:$0xe]
      %v4284 = vld [vmem:[%s193 + $0x24] sm:$0xe]
      %v4285 = vld [vmem:[%s193 + $0x30] sm:$0xe]
      %v4286 = vld [vmem:[%s193 + $0x3c] sm:$0xe]
      %v4287 = vld [vmem:[%s193 + $0x48] sm:$0xe]
      %v4288 = vld [vmem:[%s193 + $0x54] sm:$0xe]
      %v4289 = vld [vmem:[%s193 + $0x60] sm:$0xe]
      %v4290 = vld [vmem:[%s193 + $0x6c] sm:$0xe]
      %v4291 = vld [vmem:[%s193 + $0x78] sm:$0xe]
      %v4292 = vld [vmem:[%s193 + $0x84] sm:$0xe]
      %v4293 = vld [vmem:[%s193 + $0x90] sm:$0xe]
      %v4294 = vld [vmem:[%s193 + $0x9c] sm:$0xe]
      %v4295 = vld [vmem:[%s193 + $0xa8] sm:$0xe]
      %v4296 = vld [vmem:[%s193 + $0xb4] sm:$0xe]
      %v4297 = vld [vmem:[%s3026] sm:$0xe]
      %v4298 = vld [vmem:[%s3026 + $0xc] sm:$0xe]
      %v4299 = vld [vmem:[%s3026 + $0x18] sm:$0xe]
      %v4300 = vld [vmem:[%s3026 + $0x24] sm:$0xe]
      %v4301 = vld [vmem:[%s3026 + $0x30] sm:$0xe]
      %v4302 = vld [vmem:[%s3026 + $0x3c] sm:$0xe]
      %v4303 = vld [vmem:[%s3026 + $0x48] sm:$0xe]
      %v4304 = vld [vmem:[%s3026 + $0x54] sm:$0xe]
      %v4305 = vld [vmem:[%s3026 + $0x60] sm:$0xe]
      %v4306 = vld [vmem:[%s3026 + $0x6c] sm:$0xe]
      %v4307 = vld [vmem:[%s3026 + $0x78] sm:$0xe]
      %v4308 = vld [vmem:[%s3026 + $0x84] sm:$0xe]
      %v4309 = vld [vmem:[%s3026 + $0x90] sm:$0xe]
      %v4310 = vld [vmem:[%s3026 + $0x9c] sm:$0xe]
      %v4311 = vld [vmem:[%s3026 + $0xa8] sm:$0xe]
      %v4312 = vld [vmem:[%s3026 + $0xb4] sm:$0xe]
      %v4329 = vunpack.c.l.b16 %v4281
      %v4330 = vunpack.c.l.b16 %v4282
      %v4331 = vunpack.c.l.b16 %v4283
      %v4332 = vunpack.c.l.b16 %v4284
      %v4333 = vunpack.c.l.b16 %v4285
      %v4334 = vunpack.c.l.b16 %v4286
      %v4335 = vunpack.c.l.b16 %v4287
      %v4336 = vunpack.c.l.b16 %v4288
      %v4337 = vunpack.c.l.b16 %v4289
      %v4338 = vunpack.c.l.b16 %v4290
      %v4339 = vunpack.c.l.b16 %v4291
      %v4340 = vunpack.c.l.b16 %v4292
      %v4341 = vunpack.c.l.b16 %v4293
      %v4342 = vunpack.c.l.b16 %v4294
      %v4343 = vunpack.c.l.b16 %v4295
      %v4344 = vunpack.c.l.b16 %v4296
      %v4345 = vpack.c.b16 %v3108, %v4329
      %v4346 = vpack.c.b16 %v3110, %v4330
      %v4347 = vpack.c.b16 %v3112, %v4331
      %v4348 = vpack.c.b16 %v3114, %v4332
      %v4349 = vpack.c.b16 %v3116, %v4333
      %v4350 = vpack.c.b16 %v3118, %v4334
      %v4351 = vpack.c.b16 %v3120, %v4335
      %v4352 = vpack.c.b16 %v3122, %v4336
      %v4353 = vpack.c.b16 %v3124, %v4337
      %v4354 = vpack.c.b16 %v3126, %v4338
      %v4355 = vpack.c.b16 %v3128, %v4339
      %v4356 = vpack.c.b16 %v3130, %v4340
      %v4357 = vpack.c.b16 %v3132, %v4341
      %v4358 = vpack.c.b16 %v3134, %v4342
      %v4359 = vpack.c.b16 %v3136, %v4343
      %v4360 = vpack.c.b16 %v3138, %v4344
      %v4362 = vshrl.u32 %v4345, 16
      %v4364 = vshll.u32 %v4345, 16
      %v4366 = vrot.slane %v4364, 1
      %v4367 = vor.u32 %v4362, %v4366
      %v4368 = vsel %vm370, %v4367, %v3213
      %v4369 = vshrl.u32 %v3187, 16
      %v4372 = vshrl.u32 %v4346, 16
      %v4374 = vshll.u32 %v4346, 16
      %v4376 = vrot.slane %v4374, 1
      %v4377 = vor.u32 %v4372, %v4376
      %v4378 = vsel %vm370, %v4377, %v3225
      %v4379 = vshrl.u32 %v3188, 16
      %v4382 = vshrl.u32 %v4347, 16
      %v4384 = vshll.u32 %v4347, 16
      %v4386 = vrot.slane %v4384, 1
      %v4387 = vor.u32 %v4382, %v4386
      %v4388 = vsel %vm370, %v4387, %v3237
      %v4389 = vshrl.u32 %v3189, 16
      %v4392 = vshrl.u32 %v4348, 16
      %v4394 = vshll.u32 %v4348, 16
      %v4396 = vrot.slane %v4394, 1
      %v4397 = vor.u32 %v4392, %v4396
      %v4398 = vsel %vm370, %v4397, %v3249
      %v4399 = vshrl.u32 %v3190, 16
      %v4402 = vshrl.u32 %v4349, 16
      %v4404 = vshll.u32 %v4349, 16
      %v4406 = vrot.slane %v4404, 1
      %v4407 = vor.u32 %v4402, %v4406
      %v4408 = vsel %vm370, %v4407, %v3261
      %v4409 = vshrl.u32 %v3191, 16
      %v4412 = vshrl.u32 %v4350, 16
      %v4414 = vshll.u32 %v4350, 16
      %v4416 = vrot.slane %v4414, 1
      %v4417 = vor.u32 %v4412, %v4416
      %v4418 = vsel %vm370, %v4417, %v3273
      %v4419 = vshrl.u32 %v3192, 16
      %v4422 = vshrl.u32 %v4351, 16
      %v4424 = vshll.u32 %v4351, 16
      %v4426 = vrot.slane %v4424, 1
      %v4427 = vor.u32 %v4422, %v4426
      %v4428 = vsel %vm370, %v4427, %v3285
      %v4429 = vshrl.u32 %v3193, 16
      %v4432 = vshrl.u32 %v4352, 16
      %v4434 = vshll.u32 %v4352, 16
      %v4436 = vrot.slane %v4434, 1
      %v4437 = vor.u32 %v4432, %v4436
      %v4438 = vsel %vm370, %v4437, %v3297
      %v4439 = vshrl.u32 %v3194, 16
      %v4442 = vshrl.u32 %v4353, 16
      %v4444 = vshll.u32 %v4353, 16
      %v4446 = vrot.slane %v4444, 1
      %v4447 = vor.u32 %v4442, %v4446
      %v4448 = vsel %vm370, %v4447, %v3309
      %v4449 = vshrl.u32 %v3195, 16
      %v4452 = vshrl.u32 %v4354, 16
      %v4454 = vshll.u32 %v4354, 16
      %v4456 = vrot.slane %v4454, 1
      %v4457 = vor.u32 %v4452, %v4456
      %v4458 = vsel %vm370, %v4457, %v3321
      %v4459 = vshrl.u32 %v3196, 16
      %v4462 = vshrl.u32 %v4355, 16
      %v4464 = vshll.u32 %v4355, 16
      %v4466 = vrot.slane %v4464, 1
      %v4467 = vor.u32 %v4462, %v4466
      %v4468 = vsel %vm370, %v4467, %v3333
      %v4469 = vshrl.u32 %v3197, 16
      %v4472 = vshrl.u32 %v4356, 16
      %v4474 = vshll.u32 %v4356, 16
      %v4476 = vrot.slane %v4474, 1
      %v4477 = vor.u32 %v4472, %v4476
      %v4478 = vsel %vm370, %v4477, %v3345
      %v4479 = vshrl.u32 %v3198, 16
      %v4482 = vshrl.u32 %v4357, 16
      %v4484 = vshll.u32 %v4357, 16
      %v4486 = vrot.slane %v4484, 1
      %v4487 = vor.u32 %v4482, %v4486
      %v4488 = vsel %vm370, %v4487, %v3357
      %v4489 = vshrl.u32 %v3199, 16
      %v4492 = vshrl.u32 %v4358, 16
      %v4494 = vshll.u32 %v4358, 16
      %v4496 = vrot.slane %v4494, 1
      %v4497 = vor.u32 %v4492, %v4496
      %v4498 = vsel %vm370, %v4497, %v3369
      %v4499 = vshrl.u32 %v3200, 16
      %v4502 = vshrl.u32 %v4359, 16
      %v4504 = vshll.u32 %v4359, 16
      %v4506 = vrot.slane %v4504, 1
      %v4507 = vor.u32 %v4502, %v4506
      %v4508 = vsel %vm370, %v4507, %v3381
      %v4509 = vshrl.u32 %v3201, 16
      %v4512 = vshrl.u32 %v4360, 16
      %v4514 = vshll.u32 %v4360, 16
      %v4516 = vrot.slane %v4514, 1
      %v4517 = vor.u32 %v4512, %v4516
      %v4518 = vsel %vm370, %v4517, %v3393
      %v4519 = vshrl.u32 %v3202, 16
      %4521 = vrot.lane.b32.xlu0 %v4368, 4
      %v4522 = vpop.permute.xlu0 %4521
      %4523 = vrot.lane.b32.xlu0 %v4369, 4
      %v4524 = vpop.permute.xlu0 %4523
      %4525 = vrot.lane.b32.xlu0 %v4378, 4
      %v4526 = vpop.permute.xlu0 %4525
      %4527 = vrot.lane.b32.xlu0 %v4379, 4
      %v4528 = vpop.permute.xlu0 %4527
      %4529 = vrot.lane.b32.xlu0 %v4388, 4
      %v4530 = vpop.permute.xlu0 %4529
      %4531 = vrot.lane.b32.xlu0 %v4389, 4
      %v4532 = vpop.permute.xlu0 %4531
      %4533 = vrot.lane.b32.xlu0 %v4398, 4
      %v4534 = vpop.permute.xlu0 %4533
      %4535 = vrot.lane.b32.xlu0 %v4399, 4
      %v4536 = vpop.permute.xlu0 %4535
      %4537 = vrot.lane.b32.xlu0 %v4408, 4
      %v4538 = vpop.permute.xlu0 %4537
      %4539 = vrot.lane.b32.xlu0 %v4409, 4
      %v4540 = vpop.permute.xlu0 %4539
      %4541 = vrot.lane.b32.xlu0 %v4418, 4
      %v4542 = vpop.permute.xlu0 %4541
      %4543 = vrot.lane.b32.xlu0 %v4419, 4
      %v4544 = vpop.permute.xlu0 %4543
      %4545 = vrot.lane.b32.xlu0 %v4428, 4
      %v4546 = vpop.permute.xlu0 %4545
      %4547 = vrot.lane.b32.xlu0 %v4429, 4
      %v4548 = vpop.permute.xlu0 %4547
      %4549 = vrot.lane.b32.xlu0 %v4438, 4
      %v4550 = vpop.permute.xlu0 %4549
      %4551 = vrot.lane.b32.xlu0 %v4439, 4
      %v4552 = vpop.permute.xlu0 %4551
      %4553 = vrot.lane.b32.xlu0 %v4448, 4
      %v4554 = vpop.permute.xlu0 %4553
      %4555 = vrot.lane.b32.xlu0 %v4449, 4
      %v4556 = vpop.permute.xlu0 %4555
      %4557 = vrot.lane.b32.xlu0 %v4458, 4
      %v4558 = vpop.permute.xlu0 %4557
      %4559 = vrot.lane.b32.xlu0 %v4459, 4
      %v4560 = vpop.permute.xlu0 %4559
      %4561 = vrot.lane.b32.xlu0 %v4468, 4
      %v4562 = vpop.permute.xlu0 %4561
      %4563 = vrot.lane.b32.xlu0 %v4469, 4
      %v4564 = vpop.permute.xlu0 %4563
      %4565 = vrot.lane.b32.xlu0 %v4478, 4
      %v4566 = vpop.permute.xlu0 %4565
      %4567 = vrot.lane.b32.xlu0 %v4479, 4
      %v4568 = vpop.permute.xlu0 %4567
      %4569 = vrot.lane.b32.xlu0 %v4488, 4
      %v4570 = vpop.permute.xlu0 %4569
      %4571 = vrot.lane.b32.xlu0 %v4489, 4
      %v4572 = vpop.permute.xlu0 %4571
      %4573 = vrot.lane.b32.xlu0 %v4498, 4
      %v4574 = vpop.permute.xlu0 %4573
      %4575 = vrot.lane.b32.xlu0 %v4499, 4
      %v4576 = vpop.permute.xlu0 %4575
      %4577 = vrot.lane.b32.xlu0 %v4508, 4
      %v4578 = vpop.permute.xlu0 %4577
      %4579 = vrot.lane.b32.xlu0 %v4509, 4
      %v4580 = vpop.permute.xlu0 %4579
      %4581 = vrot.lane.b32.xlu0 %v4518, 4
      %v4582 = vpop.permute.xlu0 %4581
      %4583 = vrot.lane.b32.xlu0 %v4519, 4
      %v4584 = vpop.permute.xlu0 %4583
      %4585 = vrot.lane.b32.xlu0 %v3571, 8
      %v4586 = vpop.permute.xlu0 %4585
      %4587 = vrot.lane.b32.xlu0 %v3572, 8
      %v4588 = vpop.permute.xlu0 %4587
      %4589 = vrot.lane.b32.xlu0 %v3573, 8
      %v4590 = vpop.permute.xlu0 %4589
      %4591 = vrot.lane.b32.xlu0 %v3574, 8
      %v4592 = vpop.permute.xlu0 %4591
      %4593 = vrot.lane.b32.xlu0 %v3575, 8
      %v4594 = vpop.permute.xlu0 %4593
      %4595 = vrot.lane.b32.xlu0 %v3576, 8
      %v4596 = vpop.permute.xlu0 %4595
      %4597 = vrot.lane.b32.xlu0 %v3577, 8
      %v4598 = vpop.permute.xlu0 %4597
      %4599 = vrot.lane.b32.xlu0 %v3578, 8
      %v4600 = vpop.permute.xlu0 %4599
      %4601 = vrot.lane.b32.xlu0 %v3579, 8
      %v4602 = vpop.permute.xlu0 %4601
      %4603 = vrot.lane.b32.xlu0 %v3580, 8
      %v4604 = vpop.permute.xlu0 %4603
      %4605 = vrot.lane.b32.xlu0 %v3581, 8
      %v4606 = vpop.permute.xlu0 %4605
      %4607 = vrot.lane.b32.xlu0 %v3582, 8
      %v4608 = vpop.permute.xlu0 %4607
      %4609 = vrot.lane.b32.xlu0 %v3583, 8
      %v4610 = vpop.permute.xlu0 %4609
      %4611 = vrot.lane.b32.xlu0 %v3584, 8
      %v4612 = vpop.permute.xlu0 %4611
      %4613 = vrot.lane.b32.xlu0 %v3585, 8
      %v4614 = vpop.permute.xlu0 %4613
      %4615 = vrot.lane.b32.xlu0 %v3586, 8
      %v4616 = vpop.permute.xlu0 %4615
      %v4633 = vunpack.c.l.b16 %v4297
      %v4634 = vunpack.c.l.b16 %v4298
      %v4635 = vunpack.c.l.b16 %v4299
      %v4636 = vunpack.c.l.b16 %v4300
      %v4637 = vunpack.c.l.b16 %v4301
      %v4638 = vunpack.c.l.b16 %v4302
      %v4639 = vunpack.c.l.b16 %v4303
      %v4640 = vunpack.c.l.b16 %v4304
      %v4641 = vunpack.c.l.b16 %v4305
      %v4642 = vunpack.c.l.b16 %v4306
      %v4643 = vunpack.c.l.b16 %v4307
      %v4644 = vunpack.c.l.b16 %v4308
      %v4645 = vunpack.c.l.b16 %v4309
      %v4646 = vunpack.c.l.b16 %v4310
      %v4647 = vunpack.c.l.b16 %v4311
      %v4648 = vunpack.c.l.b16 %v4312
      %v4649 = vpack.c.b16 %v3460, %v4633
      %v4650 = vpack.c.b16 %v3462, %v4634
      %v4651 = vpack.c.b16 %v3464, %v4635
      %v4652 = vpack.c.b16 %v3466, %v4636
      %v4653 = vpack.c.b16 %v3468, %v4637
      %v4654 = vpack.c.b16 %v3470, %v4638
      %v4655 = vpack.c.b16 %v3472, %v4639
      %v4656 = vpack.c.b16 %v3474, %v4640
      %v4657 = vpack.c.b16 %v3476, %v4641
      %v4658 = vpack.c.b16 %v3478, %v4642
      %v4659 = vpack.c.b16 %v3480, %v4643
      %v4660 = vpack.c.b16 %v3482, %v4644
      %v4661 = vpack.c.b16 %v3484, %v4645
      %v4662 = vpack.c.b16 %v3486, %v4646
      %v4663 = vpack.c.b16 %v3488, %v4647
      %v4664 = vpack.c.b16 %v3490, %v4648
      %v4666 = vshrl.u32 %v4649, 16
      %v4668 = vshll.u32 %v4649, 16
      %v4670 = vrot.slane %v4668, 1
      %v4671 = vor.u32 %v4666, %v4670
      %v4672 = vsel %vm370, %v4671, %v3597
      %v4673 = vshrl.u32 %v3571, 16
      %v4676 = vshrl.u32 %v4650, 16
      %v4678 = vshll.u32 %v4650, 16
      %v4680 = vrot.slane %v4678, 1
      %v4681 = vor.u32 %v4676, %v4680
      %v4682 = vsel %vm370, %v4681, %v3609
      %v4683 = vshrl.u32 %v3572, 16
      %v4686 = vshrl.u32 %v4651, 16
      %v4688 = vshll.u32 %v4651, 16
      %v4690 = vrot.slane %v4688, 1
      %v4691 = vor.u32 %v4686, %v4690
      %v4692 = vsel %vm370, %v4691, %v3621
      %v4693 = vshrl.u32 %v3573, 16
      %v4696 = vshrl.u32 %v4652, 16
      %v4698 = vshll.u32 %v4652, 16
      %v4700 = vrot.slane %v4698, 1
      %v4701 = vor.u32 %v4696, %v4700
      %v4702 = vsel %vm370, %v4701, %v3633
      %v4703 = vshrl.u32 %v3574, 16
      %v4706 = vshrl.u32 %v4653, 16
      %v4708 = vshll.u32 %v4653, 16
      %v4710 = vrot.slane %v4708, 1
      %v4711 = vor.u32 %v4706, %v4710
      %v4712 = vsel %vm370, %v4711, %v3645
      %v4713 = vshrl.u32 %v3575, 16
      %v4716 = vshrl.u32 %v4654, 16
      %v4718 = vshll.u32 %v4654, 16
      %v4720 = vrot.slane %v4718, 1
      %v4721 = vor.u32 %v4716, %v4720
      %v4722 = vsel %vm370, %v4721, %v3657
      %v4723 = vshrl.u32 %v3576, 16
      %v4726 = vshrl.u32 %v4655, 16
      %v4728 = vshll.u32 %v4655, 16
      %v4730 = vrot.slane %v4728, 1
      %v4731 = vor.u32 %v4726, %v4730
      %v4732 = vsel %vm370, %v4731, %v3669
      %v4733 = vshrl.u32 %v3577, 16
      %v4736 = vshrl.u32 %v4656, 16
      %v4738 = vshll.u32 %v4656, 16
      %v4740 = vrot.slane %v4738, 1
      %v4741 = vor.u32 %v4736, %v4740
      %v4742 = vsel %vm370, %v4741, %v3681
      %v4743 = vshrl.u32 %v3578, 16
      %v4746 = vshrl.u32 %v4657, 16
      %v4748 = vshll.u32 %v4657, 16
      %v4750 = vrot.slane %v4748, 1
      %v4751 = vor.u32 %v4746, %v4750
      %v4752 = vsel %vm370, %v4751, %v3693
      %v4753 = vshrl.u32 %v3579, 16
      %v4756 = vshrl.u32 %v4658, 16
      %v4758 = vshll.u32 %v4658, 16
      %v4760 = vrot.slane %v4758, 1
      %v4761 = vor.u32 %v4756, %v4760
      %v4762 = vsel %vm370, %v4761, %v3705
      %v4763 = vshrl.u32 %v3580, 16
      %v4766 = vshrl.u32 %v4659, 16
      %v4768 = vshll.u32 %v4659, 16
      %v4770 = vrot.slane %v4768, 1
      %v4771 = vor.u32 %v4766, %v4770
      %v4772 = vsel %vm370, %v4771, %v3717
      %v4773 = vshrl.u32 %v3581, 16
      %v4776 = vshrl.u32 %v4660, 16
      %v4778 = vshll.u32 %v4660, 16
      %v4780 = vrot.slane %v4778, 1
      %v4781 = vor.u32 %v4776, %v4780
      %v4782 = vsel %vm370, %v4781, %v3729
      %v4783 = vshrl.u32 %v3582, 16
      %v4786 = vshrl.u32 %v4661, 16
      %v4788 = vshll.u32 %v4661, 16
      %v4790 = vrot.slane %v4788, 1
      %v4791 = vor.u32 %v4786, %v4790
      %v4792 = vsel %vm370, %v4791, %v3741
      %v4793 = vshrl.u32 %v3583, 16
      %v4796 = vshrl.u32 %v4662, 16
      %v4798 = vshll.u32 %v4662, 16
      %v4800 = vrot.slane %v4798, 1
      %v4801 = vor.u32 %v4796, %v4800
      %v4802 = vsel %vm370, %v4801, %v3753
      %v4803 = vshrl.u32 %v3584, 16
      %v4806 = vshrl.u32 %v4663, 16
      %v4808 = vshll.u32 %v4663, 16
      %v4810 = vrot.slane %v4808, 1
      %v4811 = vor.u32 %v4806, %v4810
      %v4812 = vsel %vm370, %v4811, %v3765
      %v4813 = vshrl.u32 %v3585, 16
      %v4816 = vshrl.u32 %v4664, 16
      %v4818 = vshll.u32 %v4664, 16
      %v4820 = vrot.slane %v4818, 1
      %v4821 = vor.u32 %v4816, %v4820
      %v4822 = vsel %vm370, %v4821, %v3777
      %v4823 = vshrl.u32 %v3586, 16
      %4825 = vrot.lane.b32.xlu0 %v4672, 12
      %v4826 = vpop.permute.xlu0 %4825
      %4827 = vrot.lane.b32.xlu0 %v4673, 12
      %v4828 = vpop.permute.xlu0 %4827
      %4829 = vrot.lane.b32.xlu0 %v4682, 12
      %v4830 = vpop.permute.xlu0 %4829
      %4831 = vrot.lane.b32.xlu0 %v4683, 12
      %v4832 = vpop.permute.xlu0 %4831
      %4833 = vrot.lane.b32.xlu0 %v4692, 12
      %v4834 = vpop.permute.xlu0 %4833
      %4835 = vrot.lane.b32.xlu0 %v4693, 12
      %v4836 = vpop.permute.xlu0 %4835
      %4837 = vrot.lane.b32.xlu0 %v4702, 12
      %v4838 = vpop.permute.xlu0 %4837
      %4839 = vrot.lane.b32.xlu0 %v4703, 12
      %v4840 = vpop.permute.xlu0 %4839
      %4841 = vrot.lane.b32.xlu0 %v4712, 12
      %v4842 = vpop.permute.xlu0 %4841
      %4843 = vrot.lane.b32.xlu0 %v4713, 12
      %v4844 = vpop.permute.xlu0 %4843
      %4845 = vrot.lane.b32.xlu0 %v4722, 12
      %v4846 = vpop.permute.xlu0 %4845
      %4847 = vrot.lane.b32.xlu0 %v4723, 12
      %v4848 = vpop.permute.xlu0 %4847
      %4849 = vrot.lane.b32.xlu0 %v4732, 12
      %v4850 = vpop.permute.xlu0 %4849
      %4851 = vrot.lane.b32.xlu0 %v4733, 12
      %v4852 = vpop.permute.xlu0 %4851
      %4853 = vrot.lane.b32.xlu0 %v4742, 12
      %v4854 = vpop.permute.xlu0 %4853
      %4855 = vrot.lane.b32.xlu0 %v4743, 12
      %v4856 = vpop.permute.xlu0 %4855
      %4857 = vrot.lane.b32.xlu0 %v4752, 12
      %v4858 = vpop.permute.xlu0 %4857
      %4859 = vrot.lane.b32.xlu0 %v4753, 12
      %v4860 = vpop.permute.xlu0 %4859
      %4861 = vrot.lane.b32.xlu0 %v4762, 12
      %v4862 = vpop.permute.xlu0 %4861
      %4863 = vrot.lane.b32.xlu0 %v4763, 12
      %v4864 = vpop.permute.xlu0 %4863
      %4865 = vrot.lane.b32.xlu0 %v4772, 12
      %v4866 = vpop.permute.xlu0 %4865
      %4867 = vrot.lane.b32.xlu0 %v4773, 12
      %v4868 = vpop.permute.xlu0 %4867
      %4869 = vrot.lane.b32.xlu0 %v4782, 12
      %v4870 = vpop.permute.xlu0 %4869
      %4871 = vrot.lane.b32.xlu0 %v4783, 12
      %v4872 = vpop.permute.xlu0 %4871
      %4873 = vrot.lane.b32.xlu0 %v4792, 12
      %v4874 = vpop.permute.xlu0 %4873
      %4875 = vrot.lane.b32.xlu0 %v4793, 12
      %v4876 = vpop.permute.xlu0 %4875
      %4877 = vrot.lane.b32.xlu0 %v4802, 12
      %v4878 = vpop.permute.xlu0 %4877
      %4879 = vrot.lane.b32.xlu0 %v4803, 12
      %v4880 = vpop.permute.xlu0 %4879
      %4881 = vrot.lane.b32.xlu0 %v4812, 12
      %v4882 = vpop.permute.xlu0 %4881
      %4883 = vrot.lane.b32.xlu0 %v4813, 12
      %v4884 = vpop.permute.xlu0 %4883
      %4885 = vrot.lane.b32.xlu0 %v4822, 12
      %v4886 = vpop.permute.xlu0 %4885
      %4887 = vrot.lane.b32.xlu0 %v4823, 12
      %v4888 = vpop.permute.xlu0 %4887
      %v4890 = vsel %vm979, %v3139, %v4522
      %v4892 = vsel %vm979, %v3187, %v4524
      %v4894 = vsel %vm979, %v3140, %v4526
      %v4896 = vsel %vm979, %v3188, %v4528
      %v4898 = vsel %vm979, %v3141, %v4530
      %v4900 = vsel %vm979, %v3189, %v4532
      %v4902 = vsel %vm979, %v3142, %v4534
      %v4904 = vsel %vm979, %v3190, %v4536
      %v4906 = vsel %vm979, %v3143, %v4538
      %v4908 = vsel %vm979, %v3191, %v4540
      %v4910 = vsel %vm979, %v3144, %v4542
      %v4912 = vsel %vm979, %v3192, %v4544
      %v4914 = vsel %vm979, %v3145, %v4546
      %v4916 = vsel %vm979, %v3193, %v4548
      %v4918 = vsel %vm979, %v3146, %v4550
      %v4920 = vsel %vm979, %v3194, %v4552
      %v4922 = vsel %vm979, %v3147, %v4554
      %v4924 = vsel %vm979, %v3195, %v4556
      %v4926 = vsel %vm979, %v3148, %v4558
      %v4928 = vsel %vm979, %v3196, %v4560
      %v4930 = vsel %vm979, %v3149, %v4562
      %v4932 = vsel %vm979, %v3197, %v4564
      %v4934 = vsel %vm979, %v3150, %v4566
      %v4936 = vsel %vm979, %v3198, %v4568
      %v4938 = vsel %vm979, %v3151, %v4570
      %v4940 = vsel %vm979, %v3199, %v4572
      %v4942 = vsel %vm979, %v3152, %v4574
      %v4944 = vsel %vm979, %v3200, %v4576
      %v4946 = vsel %vm979, %v3153, %v4578
      %v4948 = vsel %vm979, %v3201, %v4580
      %v4950 = vsel %vm979, %v3154, %v4582
      %v4952 = vsel %vm979, %v3202, %v4584
      %v4953 = vsel %vm1012, %v4890, %v3508
      %v4955 = vsel %vm1012, %v4892, %v4586
      %v4956 = vsel %vm1012, %v4894, %v3510
      %v4958 = vsel %vm1012, %v4896, %v4588
      %v4959 = vsel %vm1012, %v4898, %v3512
      %v4961 = vsel %vm1012, %v4900, %v4590
      %v4962 = vsel %vm1012, %v4902, %v3514
      %v4964 = vsel %vm1012, %v4904, %v4592
      %v4965 = vsel %vm1012, %v4906, %v3516
      %v4967 = vsel %vm1012, %v4908, %v4594
      %v4968 = vsel %vm1012, %v4910, %v3518
      %v4970 = vsel %vm1012, %v4912, %v4596
      %v4971 = vsel %vm1012, %v4914, %v3520
      %v4973 = vsel %vm1012, %v4916, %v4598
      %v4974 = vsel %vm1012, %v4918, %v3522
      %v4976 = vsel %vm1012, %v4920, %v4600
      %v4977 = vsel %vm1012, %v4922, %v3524
      %v4979 = vsel %vm1012, %v4924, %v4602
      %v4980 = vsel %vm1012, %v4926, %v3526
      %v4982 = vsel %vm1012, %v4928, %v4604
      %v4983 = vsel %vm1012, %v4930, %v3528
      %v4985 = vsel %vm1012, %v4932, %v4606
      %v4986 = vsel %vm1012, %v4934, %v3530
      %v4988 = vsel %vm1012, %v4936, %v4608
      %v4989 = vsel %vm1012, %v4938, %v3532
      %v4991 = vsel %vm1012, %v4940, %v4610
      %v4992 = vsel %vm1012, %v4942, %v3534
      %v4994 = vsel %vm1012, %v4944, %v4612
      %v4995 = vsel %vm1012, %v4946, %v3536
      %v4997 = vsel %vm1012, %v4948, %v4614
      %v4998 = vsel %vm1012, %v4950, %v3538
      %v5000 = vsel %vm1012, %v4952, %v4616
      %v5002 = vsel %vm1045, %v4953, %v4826
      %v5004 = vsel %vm1045, %v4955, %v4828
      %v5006 = vsel %vm1045, %v4956, %v4830
      %v5008 = vsel %vm1045, %v4958, %v4832
      %v5010 = vsel %vm1045, %v4959, %v4834
      %v5012 = vsel %vm1045, %v4961, %v4836
      %v5014 = vsel %vm1045, %v4962, %v4838
      %v5016 = vsel %vm1045, %v4964, %v4840
      %v5018 = vsel %vm1045, %v4965, %v4842
      %v5020 = vsel %vm1045, %v4967, %v4844
      %v5022 = vsel %vm1045, %v4968, %v4846
      %v5024 = vsel %vm1045, %v4970, %v4848
      %v5026 = vsel %vm1045, %v4971, %v4850
      %v5028 = vsel %vm1045, %v4973, %v4852
      %v5030 = vsel %vm1045, %v4974, %v4854
      %v5032 = vsel %vm1045, %v4976, %v4856
      %v5034 = vsel %vm1045, %v4977, %v4858
      %v5036 = vsel %vm1045, %v4979, %v4860
      %v5038 = vsel %vm1045, %v4980, %v4862
      %v5040 = vsel %vm1045, %v4982, %v4864
      %v5042 = vsel %vm1045, %v4983, %v4866
      %v5044 = vsel %vm1045, %v4985, %v4868
      %v5046 = vsel %vm1045, %v4986, %v4870
      %v5048 = vsel %vm1045, %v4988, %v4872
      %v5050 = vsel %vm1045, %v4989, %v4874
      %v5052 = vsel %vm1045, %v4991, %v4876
      %v5054 = vsel %vm1045, %v4992, %v4878
      %v5056 = vsel %vm1045, %v4994, %v4880
      %v5058 = vsel %vm1045, %v4995, %v4882
      %v5060 = vsel %vm1045, %v4997, %v4884
      %v5062 = vsel %vm1045, %v4998, %v4886
      %v5064 = vsel %vm1045, %v5000, %v4888
      %v5065 = vshrl.u32 %v5002, 16
      %v5067 = vshll.u32 %v5002, 16
      %v5069 = vrot.slane %v5067, 1
      %v5070 = vor.u32 %v5065, %v5069
      %v5071 = vshll.u32 %v5004, 16
      %v5073 = vrot.slane %v5071, 1
      %v5074 = vsel %vm370, %v5070, %v5073
      %v5075 = vshrl.u32 %v5006, 16
      %v5077 = vshll.u32 %v5006, 16
      %v5079 = vrot.slane %v5077, 1
      %v5080 = vor.u32 %v5075, %v5079
      %v5081 = vshll.u32 %v5008, 16
      %v5083 = vrot.slane %v5081, 1
      %v5084 = vsel %vm370, %v5080, %v5083
      %v5085 = vshrl.u32 %v5010, 16
      %v5087 = vshll.u32 %v5010, 16
      %v5089 = vrot.slane %v5087, 1
      %v5090 = vor.u32 %v5085, %v5089
      %v5091 = vshll.u32 %v5012, 16
      %v5093 = vrot.slane %v5091, 1
      %v5094 = vsel %vm370, %v5090, %v5093
      %v5095 = vshrl.u32 %v5014, 16
      %v5097 = vshll.u32 %v5014, 16
      %v5099 = vrot.slane %v5097, 1
      %v5100 = vor.u32 %v5095, %v5099
      %v5101 = vshll.u32 %v5016, 16
      %v5103 = vrot.slane %v5101, 1
      %v5104 = vsel %vm370, %v5100, %v5103
      %v5105 = vshrl.u32 %v5018, 16
      %v5107 = vshll.u32 %v5018, 16
      %v5109 = vrot.slane %v5107, 1
      %v5110 = vor.u32 %v5105, %v5109
      %v5111 = vshll.u32 %v5020, 16
      %v5113 = vrot.slane %v5111, 1
      %v5114 = vsel %vm370, %v5110, %v5113
      %v5115 = vshrl.u32 %v5022, 16
      %v5117 = vshll.u32 %v5022, 16
      %v5119 = vrot.slane %v5117, 1
      %v5120 = vor.u32 %v5115, %v5119
      %v5121 = vshll.u32 %v5024, 16
      %v5123 = vrot.slane %v5121, 1
      %v5124 = vsel %vm370, %v5120, %v5123
      %v5125 = vshrl.u32 %v5026, 16
      %v5127 = vshll.u32 %v5026, 16
      %v5129 = vrot.slane %v5127, 1
      %v5130 = vor.u32 %v5125, %v5129
      %v5131 = vshll.u32 %v5028, 16
      %v5133 = vrot.slane %v5131, 1
      %v5134 = vsel %vm370, %v5130, %v5133
      %v5135 = vshrl.u32 %v5030, 16
      %v5137 = vshll.u32 %v5030, 16
      %v5139 = vrot.slane %v5137, 1
      %v5140 = vor.u32 %v5135, %v5139
      %v5141 = vshll.u32 %v5032, 16
      %v5143 = vrot.slane %v5141, 1
      %v5144 = vsel %vm370, %v5140, %v5143
      %v5145 = vshrl.u32 %v5034, 16
      %v5147 = vshll.u32 %v5034, 16
      %v5149 = vrot.slane %v5147, 1
      %v5150 = vor.u32 %v5145, %v5149
      %v5151 = vshll.u32 %v5036, 16
      %v5153 = vrot.slane %v5151, 1
      %v5154 = vsel %vm370, %v5150, %v5153
      %v5155 = vshrl.u32 %v5038, 16
      %v5157 = vshll.u32 %v5038, 16
      %v5159 = vrot.slane %v5157, 1
      %v5160 = vor.u32 %v5155, %v5159
      %v5161 = vshll.u32 %v5040, 16
      %v5163 = vrot.slane %v5161, 1
      %v5164 = vsel %vm370, %v5160, %v5163
      %v5165 = vshrl.u32 %v5042, 16
      %v5167 = vshll.u32 %v5042, 16
      %v5169 = vrot.slane %v5167, 1
      %v5170 = vor.u32 %v5165, %v5169
      %v5171 = vshll.u32 %v5044, 16
      %v5173 = vrot.slane %v5171, 1
      %v5174 = vsel %vm370, %v5170, %v5173
      %v5175 = vshrl.u32 %v5046, 16
      %v5177 = vshll.u32 %v5046, 16
      %v5179 = vrot.slane %v5177, 1
      %v5180 = vor.u32 %v5175, %v5179
      %v5181 = vshll.u32 %v5048, 16
      %v5183 = vrot.slane %v5181, 1
      %v5184 = vsel %vm370, %v5180, %v5183
      %v5185 = vshrl.u32 %v5050, 16
      %v5187 = vshll.u32 %v5050, 16
      %v5189 = vrot.slane %v5187, 1
      %v5190 = vor.u32 %v5185, %v5189
      %v5191 = vshll.u32 %v5052, 16
      %v5193 = vrot.slane %v5191, 1
      %v5194 = vsel %vm370, %v5190, %v5193
      %v5195 = vshrl.u32 %v5054, 16
      %v5197 = vshll.u32 %v5054, 16
      %v5199 = vrot.slane %v5197, 1
      %v5200 = vor.u32 %v5195, %v5199
      %v5201 = vshll.u32 %v5056, 16
      %v5203 = vrot.slane %v5201, 1
      %v5204 = vsel %vm370, %v5200, %v5203
      %v5205 = vshrl.u32 %v5058, 16
      %v5207 = vshll.u32 %v5058, 16
      %v5209 = vrot.slane %v5207, 1
      %v5210 = vor.u32 %v5205, %v5209
      %v5211 = vshll.u32 %v5060, 16
      %v5213 = vrot.slane %v5211, 1
      %v5214 = vsel %vm370, %v5210, %v5213
      %v5215 = vshrl.u32 %v5062, 16
      %v5217 = vshll.u32 %v5062, 16
      %v5219 = vrot.slane %v5217, 1
      %v5220 = vor.u32 %v5215, %v5219
      %v5221 = vshll.u32 %v5064, 16
      %v5223 = vrot.slane %v5221, 1
      %v5224 = vsel %vm370, %v5220, %v5223
      %s5225 = scalar_lea.vmem %s1, 24
      %v5226 = vld [vmem:[%s5225] sm:$0xf]
      %v5227 = vld [vmem:[%s5225 + $0x4] sm:$0xf]
      %v5230 = vunpack.c.l.b16 %v5226
      %v5231 = vunpack.c.l.b16 %v5227
      %v5232 = vpack.c.b16 %v5231, %v5230
      %v5235 = vsel %vm1086, %v5074, 0
      %v5238 = vsel %vm1086, %v5084, 0
      %v5241 = vsel %vm1086, %v5094, 0
      %v5244 = vsel %vm1086, %v5104, 0
      %v5247 = vsel %vm1086, %v5114, 0
      %v5250 = vsel %vm1086, %v5124, 0
      %v5253 = vsel %vm1086, %v5134, 0
      %v5256 = vsel %vm1086, %v5144, 0
      %v5259 = vsel %vm1086, %v5154, 0
      %v5262 = vsel %vm1086, %v5164, 0
      %v5265 = vsel %vm1086, %v5174, 0
      %v5268 = vsel %vm1086, %v5184, 0
      %v5271 = vsel %vm1086, %v5194, 0
      %v5274 = vsel %vm1086, %v5204, 0
      %v5277 = vsel %vm1086, %v5214, 0
      %v5280 = vsel %vm1086, %v5224, 0
      %5282 = vmatprep.subr.bf16.mxu0 0
      %5283 = vmatpush1.bf16.msra.mxu0 %v5232
      %5284 = vmatprep.subr.bf16.mxu0 0
      %5285 = vmatpush1.bf16.msra.mxu0 0
      %5286 = vmatprep.subr.bf16.mxu0 0
      %5287 = vmatpush1.bf16.msra.mxu0 0
      %5288 = vmatprep.subr.bf16.mxu0 0
      %5289 = vmatpush1.bf16.msra.mxu0 0
      %5290 = vmatprep.subr.bf16.mxu0 0
      %5291 = vmatpush1.bf16.msra.mxu0 0
      %5292 = vmatprep.subr.bf16.mxu0 0
      %5293 = vmatpush1.bf16.msra.mxu0 0
      %5294 = vmatprep.subr.bf16.mxu0 0
      %5295 = vmatpush1.bf16.msra.mxu0 0
      %5296 = vmatprep.subr.bf16.mxu0 0
      %5297 = vmatpush1.bf16.msra.mxu0 0
      %5298 = vmatprep.subr.bf16.mxu0 0
      %5299 = vmatpush1.bf16.msra.mxu0 0
      %5300 = vmatprep.subr.bf16.mxu0 0
      %5301 = vmatpush1.bf16.msra.mxu0 0
      %5302 = vmatprep.subr.bf16.mxu0 0
      %5303 = vmatpush1.bf16.msra.mxu0 0
      %5304 = vmatprep.subr.bf16.mxu0 0
      %5305 = vmatpush1.bf16.msra.mxu0 0
      %5306 = vmatprep.subr.bf16.mxu0 0
      %5307 = vmatpush1.bf16.msra.mxu0 0
      %5308 = vmatprep.subr.bf16.mxu0 0
      %5309 = vmatpush1.bf16.msra.mxu0 0
      %5310 = vmatprep.subr.bf16.mxu0 0
      %5311 = vmatpush1.bf16.msra.mxu0 0
      %5312 = vmatprep.subr.bf16.mxu0 0
      %5313 = vmatpush1.bf16.msra.mxu0 0
      %5314 = vmatprep.mubr.bf16.mxu0 0
      %5315 = vmatmul.mubr.bf16.gmra.mrb[0].mxu0 %v5235
      %v5316 = vpop.f32.mrb[0].mxu0
      %v5317 = vadd.f32 0.0, %v5316
      %v5318 = vpop.f32.mrb[0].mxu0
      %v5319 = vpop.f32.mrb[0].mxu0
      %v5320 = vadd.f32 0.0, %v5319
      %v5321 = vpop.f32.mrb[0].mxu0
      %5322 = vmatprep.mubr.bf16.mxu0 0
      %5323 = vmatmul.mubr.bf16.gmra.mrb[0].mxu0 %v5238
      %v5324 = vpop.f32.mrb[0].mxu0
      %v5325 = vadd.f32 0.0, %v5324
      %v5326 = vpop.f32.mrb[0].mxu0
      %v5327 = vpop.f32.mrb[0].mxu0
      %v5328 = vadd.f32 0.0, %v5327
      %v5329 = vpop.f32.mrb[0].mxu0
      %5330 = vmatprep.mubr.bf16.mxu0 0
      %5331 = vmatmul.mubr.bf16.gmra.mrb[0].mxu0 %v5241
      %v5332 = vpop.f32.mrb[0].mxu0
      %v5333 = vadd.f32 0.0, %v5332
      %v5334 = vpop.f32.mrb[0].mxu0
      %v5335 = vpop.f32.mrb[0].mxu0
      %v5336 = vadd.f32 0.0, %v5335
      %v5337 = vpop.f32.mrb[0].mxu0
      %5338 = vmatprep.mubr.bf16.mxu0 0
      %5339 = vmatmul.mubr.bf16.gmra.mrb[0].mxu0 %v5244
      %v5340 = vpop.f32.mrb[0].mxu0
      %v5341 = vadd.f32 0.0, %v5340
      %v5342 = vpop.f32.mrb[0].mxu0
      %v5343 = vpop.f32.mrb[0].mxu0
      %v5344 = vadd.f32 0.0, %v5343
      %v5345 = vpop.f32.mrb[0].mxu0
      %5346 = vmatprep.mubr.bf16.mxu0 0
      %5347 = vmatmul.mubr.bf16.gmra.mrb[0].mxu0 %v5247
      %v5348 = vpop.f32.mrb[0].mxu0
      %v5349 = vadd.f32 0.0, %v5348
      %v5350 = vpop.f32.mrb[0].mxu0
      %v5351 = vpop.f32.mrb[0].mxu0
      %v5352 = vadd.f32 0.0, %v5351
      %v5353 = vpop.f32.mrb[0].mxu0
      %5354 = vmatprep.mubr.bf16.mxu0 0
      %5355 = vmatmul.mubr.bf16.gmra.mrb[0].mxu0 %v5250
      %v5356 = vpop.f32.mrb[0].mxu0
      %v5357 = vadd.f32 0.0, %v5356
      %v5358 = vpop.f32.mrb[0].mxu0
      %v5359 = vpop.f32.mrb[0].mxu0
      %v5360 = vadd.f32 0.0, %v5359
      %v5361 = vpop.f32.mrb[0].mxu0
      %5362 = vmatprep.mubr.bf16.mxu0 0
      %5363 = vmatmul.mubr.bf16.gmra.mrb[0].mxu0 %v5253
      %v5364 = vpop.f32.mrb[0].mxu0
      %v5365 = vadd.f32 0.0, %v5364
      %v5366 = vpop.f32.mrb[0].mxu0
      %v5367 = vpop.f32.mrb[0].mxu0
      %v5368 = vadd.f32 0.0, %v5367
      %v5369 = vpop.f32.mrb[0].mxu0
      %5370 = vmatprep.mubr.bf16.mxu0 0
      %5371 = vmatmul.mubr.bf16.gmra.mrb[0].mxu0 %v5256
      %v5372 = vpop.f32.mrb[0].mxu0
      %v5373 = vadd.f32 0.0, %v5372
      %v5374 = vpop.f32.mrb[0].mxu0
      %v5375 = vpop.f32.mrb[0].mxu0
      %v5376 = vadd.f32 0.0, %v5375
      %v5377 = vpop.f32.mrb[0].mxu0
      %5378 = vmatprep.mubr.bf16.mxu0 0
      %5379 = vmatmul.mubr.bf16.gmra.mrb[0].mxu0 %v5259
      %v5380 = vpop.f32.mrb[0].mxu0
      %v5381 = vadd.f32 0.0, %v5380
      %v5382 = vpop.f32.mrb[0].mxu0
      %v5383 = vpop.f32.mrb[0].mxu0
      %v5384 = vadd.f32 0.0, %v5383
      %v5385 = vpop.f32.mrb[0].mxu0
      %5386 = vmatprep.mubr.bf16.mxu0 0
      %5387 = vmatmul.mubr.bf16.gmra.mrb[0].mxu0 %v5262
      %v5388 = vpop.f32.mrb[0].mxu0
      %v5389 = vadd.f32 0.0, %v5388
      %v5390 = vpop.f32.mrb[0].mxu0
      %v5391 = vpop.f32.mrb[0].mxu0
      %v5392 = vadd.f32 0.0, %v5391
      %v5393 = vpop.f32.mrb[0].mxu0
      %5394 = vmatprep.mubr.bf16.mxu0 0
      %5395 = vmatmul.mubr.bf16.gmra.mrb[0].mxu0 %v5265
      %v5396 = vpop.f32.mrb[0].mxu0
      %v5397 = vadd.f32 0.0, %v5396
      %v5398 = vpop.f32.mrb[0].mxu0
      %v5399 = vpop.f32.mrb[0].mxu0
      %v5400 = vadd.f32 0.0, %v5399
      %v5401 = vpop.f32.mrb[0].mxu0
      %5402 = vmatprep.mubr.bf16.mxu0 0
      %5403 = vmatmul.mubr.bf16.gmra.mrb[0].mxu0 %v5268
      %v5404 = vpop.f32.mrb[0].mxu0
      %v5405 = vadd.f32 0.0, %v5404
      %v5406 = vpop.f32.mrb[0].mxu0
      %v5407 = vpop.f32.mrb[0].mxu0
      %v5408 = vadd.f32 0.0, %v5407
      %v5409 = vpop.f32.mrb[0].mxu0
      %5410 = vmatprep.mubr.bf16.mxu0 0
      %5411 = vmatmul.mubr.bf16.gmra.mrb[0].mxu0 %v5271
      %v5412 = vpop.f32.mrb[0].mxu0
      %v5413 = vadd.f32 0.0, %v5412
      %v5414 = vpop.f32.mrb[0].mxu0
      %v5415 = vpop.f32.mrb[0].mxu0
      %v5416 = vadd.f32 0.0, %v5415
      %v5417 = vpop.f32.mrb[0].mxu0
      %5418 = vmatprep.mubr.bf16.mxu0 0
      %5419 = vmatmul.mubr.bf16.gmra.mrb[0].mxu0 %v5274
      %v5420 = vpop.f32.mrb[0].mxu0
      %v5421 = vadd.f32 0.0, %v5420
      %v5422 = vpop.f32.mrb[0].mxu0
      %v5423 = vpop.f32.mrb[0].mxu0
      %v5424 = vadd.f32 0.0, %v5423
      %v5425 = vpop.f32.mrb[0].mxu0
      %5426 = vmatprep.mubr.bf16.mxu0 0
      %5427 = vmatmul.mubr.bf16.gmra.mrb[0].mxu0 %v5277
      %v5428 = vpop.f32.mrb[0].mxu0
      %v5429 = vadd.f32 0.0, %v5428
      %v5430 = vpop.f32.mrb[0].mxu0
      %v5431 = vpop.f32.mrb[0].mxu0
      %v5432 = vadd.f32 0.0, %v5431
      %v5433 = vpop.f32.mrb[0].mxu0
      %5434 = vmatprep.mubr.bf16.mxu0 0
      %5435 = vmatmul.mubr.bf16.gmra.mrb[0].mxu0 %v5280
      %v5436 = vpop.f32.mrb[0].mxu0
      %v5437 = vadd.f32 0.0, %v5436
      %v5438 = vpop.f32.mrb[0].mxu0
      %v5439 = vpop.f32.mrb[0].mxu0
      %v5440 = vadd.f32 0.0, %v5439
      %v5441 = vpop.f32.mrb[0].mxu0
      %5442 = vdwg.mxu0
      %v5443 = vsel %vm1012, %v5317, 0.0
      %v5444 = vsel %vm1012, %v5320, 0.0
      %v5445 = vadd.f32 %v5443, %v5444
      %v5446 = vsel %vm1012, %v5325, 0.0
      %v5447 = vadd.f32 %v5445, %v5446
      %v5448 = vsel %vm1012, %v5328, 0.0
      %v5449 = vadd.f32 %v5447, %v5448
      %v5450 = vsel %vm1012, %v5333, 0.0
      %v5451 = vadd.f32 %v5449, %v5450
      %v5452 = vsel %vm1012, %v5336, 0.0
      %v5453 = vadd.f32 %v5451, %v5452
      %v5454 = vsel %vm1012, %v5341, 0.0
      %v5455 = vadd.f32 %v5453, %v5454
      %v5456 = vsel %vm1012, %v5344, 0.0
      %v5457 = vadd.f32 %v5455, %v5456
      %v5458 = vsel %vm1012, %v5349, 0.0
      %v5459 = vadd.f32 %v5457, %v5458
      %v5460 = vsel %vm1012, %v5352, 0.0
      %v5461 = vadd.f32 %v5459, %v5460
      %v5462 = vsel %vm1012, %v5357, 0.0
      %v5463 = vadd.f32 %v5461, %v5462
      %v5464 = vsel %vm1012, %v5360, 0.0
      %v5465 = vadd.f32 %v5463, %v5464
      %v5466 = vsel %vm1012, %v5365, 0.0
      %v5467 = vadd.f32 %v5465, %v5466
      %v5468 = vsel %vm1012, %v5368, 0.0
      %v5469 = vadd.f32 %v5467, %v5468
      %v5470 = vsel %vm1012, %v5373, 0.0
      %v5471 = vadd.f32 %v5469, %v5470
      %v5472 = vsel %vm1012, %v5376, 0.0
      %v5473 = vadd.f32 %v5471, %v5472
      %v5474 = vsel %vm1012, %v5381, 0.0
      %v5475 = vadd.f32 %v5473, %v5474
      %v5476 = vsel %vm1012, %v5384, 0.0
      %v5477 = vadd.f32 %v5475, %v5476
      %v5478 = vsel %vm1012, %v5389, 0.0
      %v5479 = vadd.f32 %v5477, %v5478
      %v5480 = vsel %vm1012, %v5392, 0.0
      %v5481 = vadd.f32 %v5479, %v5480
      %v5482 = vsel %vm1012, %v5397, 0.0
      %v5483 = vadd.f32 %v5481, %v5482
      %v5484 = vsel %vm1012, %v5400, 0.0
      %v5485 = vadd.f32 %v5483, %v5484
      %v5486 = vsel %vm1012, %v5405, 0.0
      %v5487 = vadd.f32 %v5485, %v5486
      %v5488 = vsel %vm1012, %v5408, 0.0
      %v5489 = vadd.f32 %v5487, %v5488
      %v5490 = vsel %vm1012, %v5413, 0.0
      %v5491 = vadd.f32 %v5489, %v5490
      %v5492 = vsel %vm1012, %v5416, 0.0
      %v5493 = vadd.f32 %v5491, %v5492
      %v5494 = vsel %vm1012, %v5421, 0.0
      %v5495 = vadd.f32 %v5493, %v5494
      %v5496 = vsel %vm1012, %v5424, 0.0
      %v5497 = vadd.f32 %v5495, %v5496
      %v5498 = vsel %vm1012, %v5429, 0.0
      %v5499 = vadd.f32 %v5497, %v5498
      %v5500 = vsel %vm1012, %v5432, 0.0
      %v5501 = vadd.f32 %v5499, %v5500
      %v5502 = vsel %vm1012, %v5437, 0.0
      %v5503 = vadd.f32 %v5501, %v5502
      %v5504 = vsel %vm1012, %v5440, 0.0
      %v5505 = vadd.f32 %v5503, %v5504
      %v5506 = vrot.slane %v5505, 4
      %v5507 = vadd.f32 %v5505, %v5506
      %v5508 = vrot.slane %v5507, 2
      %v5509 = vadd.f32 %v5507, %v5508
      %v5510 = vrot.slane %v5509, 1
      %v5511 = vadd.f32 %v5509, %v5510
      %v5512 = vadd.f32 %v4178, %v5511
      %v5513 = vmul.f32 %v5317, %v5317
      %v5514 = vmul.f32 %v5320, %v5320
      %v5515 = vmul.f32 %v5325, %v5325
      %v5516 = vmul.f32 %v5328, %v5328
      %v5517 = vmul.f32 %v5333, %v5333
      %v5518 = vmul.f32 %v5336, %v5336
      %v5519 = vmul.f32 %v5341, %v5341
      %v5520 = vmul.f32 %v5344, %v5344
      %v5521 = vmul.f32 %v5349, %v5349
      %v5522 = vmul.f32 %v5352, %v5352
      %v5523 = vmul.f32 %v5357, %v5357
      %v5524 = vmul.f32 %v5360, %v5360
      %v5525 = vmul.f32 %v5365, %v5365
      %v5526 = vmul.f32 %v5368, %v5368
      %v5527 = vmul.f32 %v5373, %v5373
      %v5528 = vmul.f32 %v5376, %v5376
      %v5529 = vmul.f32 %v5381, %v5381
      %v5530 = vmul.f32 %v5384, %v5384
      %v5531 = vmul.f32 %v5389, %v5389
      %v5532 = vmul.f32 %v5392, %v5392
      %v5533 = vmul.f32 %v5397, %v5397
      %v5534 = vmul.f32 %v5400, %v5400
      %v5535 = vmul.f32 %v5405, %v5405
      %v5536 = vmul.f32 %v5408, %v5408
      %v5537 = vmul.f32 %v5413, %v5413
      %v5538 = vmul.f32 %v5416, %v5416
      %v5539 = vmul.f32 %v5421, %v5421
      %v5540 = vmul.f32 %v5424, %v5424
      %v5541 = vmul.f32 %v5429, %v5429
      %v5542 = vmul.f32 %v5432, %v5432
      %v5543 = vmul.f32 %v5437, %v5437
      %v5544 = vmul.f32 %v5440, %v5440
      %v5545 = vsel %vm1012, %v5513, 0.0
      %v5546 = vsel %vm1012, %v5514, 0.0
      %v5547 = vadd.f32 %v5545, %v5546
      %v5548 = vsel %vm1012, %v5515, 0.0
      %v5549 = vadd.f32 %v5547, %v5548
      %v5550 = vsel %vm1012, %v5516, 0.0
      %v5551 = vadd.f32 %v5549, %v5550
      %v5552 = vsel %vm1012, %v5517, 0.0
      %v5553 = vadd.f32 %v5551, %v5552
      %v5554 = vsel %vm1012, %v5518, 0.0
      %v5555 = vadd.f32 %v5553, %v5554
      %v5556 = vsel %vm1012, %v5519, 0.0
      %v5557 = vadd.f32 %v5555, %v5556
      %v5558 = vsel %vm1012, %v5520, 0.0
      %v5559 = vadd.f32 %v5557, %v5558
      %v5560 = vsel %vm1012, %v5521, 0.0
      %v5561 = vadd.f32 %v5559, %v5560
      %v5562 = vsel %vm1012, %v5522, 0.0
      %v5563 = vadd.f32 %v5561, %v5562
      %v5564 = vsel %vm1012, %v5523, 0.0
      %v5565 = vadd.f32 %v5563, %v5564
      %v5566 = vsel %vm1012, %v5524, 0.0
      %v5567 = vadd.f32 %v5565, %v5566
      %v5568 = vsel %vm1012, %v5525, 0.0
      %v5569 = vadd.f32 %v5567, %v5568
      %v5570 = vsel %vm1012, %v5526, 0.0
      %v5571 = vadd.f32 %v5569, %v5570
      %v5572 = vsel %vm1012, %v5527, 0.0
      %v5573 = vadd.f32 %v5571, %v5572
      %v5574 = vsel %vm1012, %v5528, 0.0
      %v5575 = vadd.f32 %v5573, %v5574
      %v5576 = vsel %vm1012, %v5529, 0.0
      %v5577 = vadd.f32 %v5575, %v5576
      %v5578 = vsel %vm1012, %v5530, 0.0
      %v5579 = vadd.f32 %v5577, %v5578
      %v5580 = vsel %vm1012, %v5531, 0.0
      %v5581 = vadd.f32 %v5579, %v5580
      %v5582 = vsel %vm1012, %v5532, 0.0
      %v5583 = vadd.f32 %v5581, %v5582
      %v5584 = vsel %vm1012, %v5533, 0.0
      %v5585 = vadd.f32 %v5583, %v5584
      %v5586 = vsel %vm1012, %v5534, 0.0
      %v5587 = vadd.f32 %v5585, %v5586
      %v5588 = vsel %vm1012, %v5535, 0.0
      %v5589 = vadd.f32 %v5587, %v5588
      %v5590 = vsel %vm1012, %v5536, 0.0
      %v5591 = vadd.f32 %v5589, %v5590
      %v5592 = vsel %vm1012, %v5537, 0.0
      %v5593 = vadd.f32 %v5591, %v5592
      %v5594 = vsel %vm1012, %v5538, 0.0
      %v5595 = vadd.f32 %v5593, %v5594
      %v5596 = vsel %vm1012, %v5539, 0.0
      %v5597 = vadd.f32 %v5595, %v5596
      %v5598 = vsel %vm1012, %v5540, 0.0
      %v5599 = vadd.f32 %v5597, %v5598
      %v5600 = vsel %vm1012, %v5541, 0.0
      %v5601 = vadd.f32 %v5599, %v5600
      %v5602 = vsel %vm1012, %v5542, 0.0
      %v5603 = vadd.f32 %v5601, %v5602
      %v5604 = vsel %vm1012, %v5543, 0.0
      %v5605 = vadd.f32 %v5603, %v5604
      %v5606 = vsel %vm1012, %v5544, 0.0
      %v5607 = vadd.f32 %v5605, %v5606
      %v5608 = vrot.slane %v5607, 4
      %v5609 = vadd.f32 %v5607, %v5608
      %v5610 = vrot.slane %v5609, 2
      %v5611 = vadd.f32 %v5609, %v5610
      %v5612 = vrot.slane %v5611, 1
      %v5613 = vadd.f32 %v5611, %v5612
      %v5614 = vadd.f32 %v4280, %v5613
      %5647 = vrot.lane.b32.xlu0 %v5317, 8
      %v5648 = vpop.permute.xlu0 %5647
      %5649 = vrot.lane.b32.xlu0 %v5320, 8
      %v5650 = vpop.permute.xlu0 %5649
      %5651 = vrot.lane.b32.xlu0 %v5325, 8
      %v5652 = vpop.permute.xlu0 %5651
      %5653 = vrot.lane.b32.xlu0 %v5328, 8
      %v5654 = vpop.permute.xlu0 %5653
      %5655 = vrot.lane.b32.xlu0 %v5333, 8
      %v5656 = vpop.permute.xlu0 %5655
      %5657 = vrot.lane.b32.xlu0 %v5336, 8
      %v5658 = vpop.permute.xlu0 %5657
      %5659 = vrot.lane.b32.xlu0 %v5341, 8
      %v5660 = vpop.permute.xlu0 %5659
      %5661 = vrot.lane.b32.xlu0 %v5344, 8
      %v5662 = vpop.permute.xlu0 %5661
      %5663 = vrot.lane.b32.xlu0 %v5349, 8
      %v5664 = vpop.permute.xlu0 %5663
      %5665 = vrot.lane.b32.xlu0 %v5352, 8
      %v5666 = vpop.permute.xlu0 %5665
      %5667 = vrot.lane.b32.xlu0 %v5357, 8
      %v5668 = vpop.permute.xlu0 %5667
      %5669 = vrot.lane.b32.xlu0 %v5360, 8
      %v5670 = vpop.permute.xlu0 %5669
      %5671 = vrot.lane.b32.xlu0 %v5365, 8
      %v5672 = vpop.permute.xlu0 %5671
      %5673 = vrot.lane.b32.xlu0 %v5368, 8
      %v5674 = vpop.permute.xlu0 %5673
      %5675 = vrot.lane.b32.xlu0 %v5373, 8
      %v5676 = vpop.permute.xlu0 %5675
      %5677 = vrot.lane.b32.xlu0 %v5376, 8
      %v5678 = vpop.permute.xlu0 %5677
      %5679 = vrot.lane.b32.xlu0 %v5381, 8
      %v5680 = vpop.permute.xlu0 %5679
      %5681 = vrot.lane.b32.xlu0 %v5384, 8
      %v5682 = vpop.permute.xlu0 %5681
      %5683 = vrot.lane.b32.xlu0 %v5389, 8
      %v5684 = vpop.permute.xlu0 %5683
      %5685 = vrot.lane.b32.xlu0 %v5392, 8
      %v5686 = vpop.permute.xlu0 %5685
      %5687 = vrot.lane.b32.xlu0 %v5397, 8
      %v5688 = vpop.permute.xlu0 %5687
      %5689 = vrot.lane.b32.xlu0 %v5400, 8
      %v5690 = vpop.permute.xlu0 %5689
      %5691 = vrot.lane.b32.xlu0 %v5405, 8
      %v5692 = vpop.permute.xlu0 %5691
      %5693 = vrot.lane.b32.xlu0 %v5408, 8
      %v5694 = vpop.permute.xlu0 %5693
      %5695 = vrot.lane.b32.xlu0 %v5413, 8
      %v5696 = vpop.permute.xlu0 %5695
      %5697 = vrot.lane.b32.xlu0 %v5416, 8
      %v5698 = vpop.permute.xlu0 %5697
      %5699 = vrot.lane.b32.xlu0 %v5421, 8
      %v5700 = vpop.permute.xlu0 %5699
      %5701 = vrot.lane.b32.xlu0 %v5424, 8
      %v5702 = vpop.permute.xlu0 %5701
      %5703 = vrot.lane.b32.xlu0 %v5429, 8
      %v5704 = vpop.permute.xlu0 %5703
      %5705 = vrot.lane.b32.xlu0 %v5432, 8
      %v5706 = vpop.permute.xlu0 %5705
      %5707 = vrot.lane.b32.xlu0 %v5437, 8
      %v5708 = vpop.permute.xlu0 %5707
      %5709 = vrot.lane.b32.xlu0 %v5440, 8
      %v5710 = vpop.permute.xlu0 %5709
      %v5743 = vsel %vm1012, %v3983, %v5648
      %v5744 = vsel %vm1012, %v3986, %v5650
      %v5745 = vsel %vm1012, %v3991, %v5652
      %v5746 = vsel %vm1012, %v3994, %v5654
      %v5747 = vsel %vm1012, %v3999, %v5656
      %v5748 = vsel %vm1012, %v4002, %v5658
      %v5749 = vsel %vm1012, %v4007, %v5660
      %v5750 = vsel %vm1012, %v4010, %v5662
      %v5751 = vsel %vm1012, %v4015, %v5664
      %v5752 = vsel %vm1012, %v4018, %v5666
      %v5753 = vsel %vm1012, %v4023, %v5668
      %v5754 = vsel %vm1012, %v4026, %v5670
      %v5755 = vsel %vm1012, %v4031, %v5672
      %v5756 = vsel %vm1012, %v4034, %v5674
      %v5757 = vsel %vm1012, %v4039, %v5676
      %v5758 = vsel %vm1012, %v4042, %v5678
      %v5759 = vsel %vm1012, %v4047, %v5680
      %v5760 = vsel %vm1012, %v4050, %v5682
      %v5761 = vsel %vm1012, %v4055, %v5684
      %v5762 = vsel %vm1012, %v4058, %v5686
      %v5763 = vsel %vm1012, %v4063, %v5688
      %v5764 = vsel %vm1012, %v4066, %v5690
      %v5765 = vsel %vm1012, %v4071, %v5692
      %v5766 = vsel %vm1012, %v4074, %v5694
      %v5767 = vsel %vm1012, %v4079, %v5696
      %v5768 = vsel %vm1012, %v4082, %v5698
      %v5769 = vsel %vm1012, %v4087, %v5700
      %v5770 = vsel %vm1012, %v4090, %v5702
      %v5771 = vsel %vm1012, %v4095, %v5704
      %v5772 = vsel %vm1012, %v4098, %v5706
      %v5773 = vsel %vm1012, %v4103, %v5708
      %v5774 = vsel %vm1012, %v4106, %v5710
      %s5775 = scalar_lea.vmem %s143, 16
      %5776 = vst.msk [vmem:[%s5775] sm:$0xff] %vm1086, %v5743
      %5777 = vst.msk [vmem:[%s5775 + $0x8] sm:$0xff] %vm1086, %v5744
      %5778 = vst.msk [vmem:[%s5775 + $0x20] sm:$0xff] %vm1086, %v5745
      %5779 = vst.msk [vmem:[%s5775 + $0x28] sm:$0xff] %vm1086, %v5746
      %5780 = vst.msk [vmem:[%s5775 + $0x40] sm:$0xff] %vm1086, %v5747
      %5781 = vst.msk [vmem:[%s5775 + $0x48] sm:$0xff] %vm1086, %v5748
      %5782 = vst.msk [vmem:[%s5775 + $0x60] sm:$0xff] %vm1086, %v5749
      %5783 = vst.msk [vmem:[%s5775 + $0x68] sm:$0xff] %vm1086, %v5750
      %5784 = vst.msk [vmem:[%s5775 + $0x80] sm:$0xff] %vm1086, %v5751
      %5785 = vst.msk [vmem:[%s5775 + $0x88] sm:$0xff] %vm1086, %v5752
      %5786 = vst.msk [vmem:[%s5775 + $0xa0] sm:$0xff] %vm1086, %v5753
      %5787 = vst.msk [vmem:[%s5775 + $0xa8] sm:$0xff] %vm1086, %v5754
      %5788 = vst.msk [vmem:[%s5775 + $0xc0] sm:$0xff] %vm1086, %v5755
      %5789 = vst.msk [vmem:[%s5775 + $0xc8] sm:$0xff] %vm1086, %v5756
      %5790 = vst.msk [vmem:[%s5775 + $0xe0] sm:$0xff] %vm1086, %v5757
      %5791 = vst.msk [vmem:[%s5775 + $0xe8] sm:$0xff] %vm1086, %v5758
      %5792 = vst.msk [vmem:[%s5775 + $0x100] sm:$0xff] %vm1086, %v5759
      %5793 = vst.msk [vmem:[%s5775 + $0x108] sm:$0xff] %vm1086, %v5760
      %5794 = vst.msk [vmem:[%s5775 + $0x120] sm:$0xff] %vm1086, %v5761
      %5795 = vst.msk [vmem:[%s5775 + $0x128] sm:$0xff] %vm1086, %v5762
      %5796 = vst.msk [vmem:[%s5775 + $0x140] sm:$0xff] %vm1086, %v5763
      %5797 = vst.msk [vmem:[%s5775 + $0x148] sm:$0xff] %vm1086, %v5764
      %5798 = vst.msk [vmem:[%s5775 + $0x160] sm:$0xff] %vm1086, %v5765
      %5799 = vst.msk [vmem:[%s5775 + $0x168] sm:$0xff] %vm1086, %v5766
      %5800 = vst.msk [vmem:[%s5775 + $0x180] sm:$0xff] %vm1086, %v5767
      %5801 = vst.msk [vmem:[%s5775 + $0x188] sm:$0xff] %vm1086, %v5768
      %5802 = vst.msk [vmem:[%s5775 + $0x1a0] sm:$0xff] %vm1086, %v5769
      %5803 = vst.msk [vmem:[%s5775 + $0x1a8] sm:$0xff] %vm1086, %v5770
      %5804 = vst.msk [vmem:[%s5775 + $0x1c0] sm:$0xff] %vm1086, %v5771
      %5805 = vst.msk [vmem:[%s5775 + $0x1c8] sm:$0xff] %vm1086, %v5772
      %5806 = vst.msk [vmem:[%s5775 + $0x1e0] sm:$0xff] %vm1086, %v5773
      %5807 = vst.msk [vmem:[%s5775 + $0x1e8] sm:$0xff] %vm1086, %v5774
      %v5808 = vmul.f32 %v5512, 0.0009765625
      %v5809 = vmul.f32 %v5614, 0.0009765625
      %v5810 = vmul.f32 %v5808, %v5808
      %v5811 = vsub.f32 %v5809, %v5810
      %v5812 = vadd.f32 %v5811, 1e-05
      %v5813 = vrsqrt.pop %v5812
      %5815 = vrot.lane.b32.xlu0 %v5813, 8
      %v5816 = vpop.permute.xlu0 %5815
      %v5818 = vsel %vm1012, %v5813, %v5816
      %v5819 = vmul.f32 %v5808, %v5813
      %5821 = vrot.lane.b32.xlu0 %v5819, 8
      %v5822 = vpop.permute.xlu0 %5821
      %v5824 = vsel %vm1012, %v5819, %v5822
      %v5825 = vld [vmem:[%s143] sm:$0xff]
      %v5826 = vld [vmem:[%s143 + $0x8] sm:$0xff]
      %v5827 = vld [vmem:[%s143 + $0x20] sm:$0xff]
      %v5828 = vld [vmem:[%s143 + $0x28] sm:$0xff]
      %v5829 = vld [vmem:[%s143 + $0x40] sm:$0xff]
      %v5830 = vld [vmem:[%s143 + $0x48] sm:$0xff]
      %v5831 = vld [vmem:[%s143 + $0x60] sm:$0xff]
      %v5832 = vld [vmem:[%s143 + $0x68] sm:$0xff]
      %v5833 = vld [vmem:[%s143 + $0x80] sm:$0xff]
      %v5834 = vld [vmem:[%s143 + $0x88] sm:$0xff]
      %v5835 = vld [vmem:[%s143 + $0xa0] sm:$0xff]
      %v5836 = vld [vmem:[%s143 + $0xa8] sm:$0xff]
      %v5837 = vld [vmem:[%s143 + $0xc0] sm:$0xff]
      %v5838 = vld [vmem:[%s143 + $0xc8] sm:$0xff]
      %v5839 = vld [vmem:[%s143 + $0xe0] sm:$0xff]
      %v5840 = vld [vmem:[%s143 + $0xe8] sm:$0xff]
      %v5841 = vld [vmem:[%s143 + $0x100] sm:$0xff]
      %v5842 = vld [vmem:[%s143 + $0x108] sm:$0xff]
      %v5843 = vld [vmem:[%s143 + $0x120] sm:$0xff]
      %v5844 = vld [vmem:[%s143 + $0x128] sm:$0xff]
      %v5845 = vld [vmem:[%s143 + $0x140] sm:$0xff]
      %v5846 = vld [vmem:[%s143 + $0x148] sm:$0xff]
      %v5847 = vld [vmem:[%s143 + $0x160] sm:$0xff]
      %v5848 = vld [vmem:[%s143 + $0x168] sm:$0xff]
      %v5849 = vld [vmem:[%s143 + $0x180] sm:$0xff]
      %v5850 = vld [vmem:[%s143 + $0x188] sm:$0xff]
      %v5851 = vld [vmem:[%s143 + $0x1a0] sm:$0xff]
      %v5852 = vld [vmem:[%s143 + $0x1a8] sm:$0xff]
      %v5853 = vld [vmem:[%s143 + $0x1c0] sm:$0xff]
      %v5854 = vld [vmem:[%s143 + $0x1c8] sm:$0xff]
      %v5855 = vld [vmem:[%s143 + $0x1e0] sm:$0xff]
      %v5856 = vld [vmem:[%s143 + $0x1e8] sm:$0xff]
      %v5857 = vlaneseq
      %v5858 = vshrl.u32 %v5857, 7
      %v5859 = vsub.s32 0, %v5858
      %v5860 = vrot.slane %v5818, %v5859
      %v5861 = vmul.f32 %v5825, %v5860
      %v5862 = vmul.f32 %v5826, %v5860
      %v5863 = vmul.f32 %v5827, %v5860
      %v5864 = vmul.f32 %v5828, %v5860
      %v5865 = vmul.f32 %v5829, %v5860
      %v5866 = vmul.f32 %v5830, %v5860
      %v5867 = vmul.f32 %v5831, %v5860
      %v5868 = vmul.f32 %v5832, %v5860
      %v5869 = vmul.f32 %v5833, %v5860
      %v5870 = vmul.f32 %v5834, %v5860
      %v5871 = vmul.f32 %v5835, %v5860
      %v5872 = vmul.f32 %v5836, %v5860
      %v5873 = vmul.f32 %v5837, %v5860
      %v5874 = vmul.f32 %v5838, %v5860
      %v5875 = vmul.f32 %v5839, %v5860
      %v5876 = vmul.f32 %v5840, %v5860
      %v5877 = vmul.f32 %v5841, %v5860
      %v5878 = vmul.f32 %v5842, %v5860
      %v5879 = vmul.f32 %v5843, %v5860
      %v5880 = vmul.f32 %v5844, %v5860
      %v5881 = vmul.f32 %v5845, %v5860
      %v5882 = vmul.f32 %v5846, %v5860
      %v5883 = vmul.f32 %v5847, %v5860
      %v5884 = vmul.f32 %v5848, %v5860
      %v5885 = vmul.f32 %v5849, %v5860
      %v5886 = vmul.f32 %v5850, %v5860
      %v5887 = vmul.f32 %v5851, %v5860
      %v5888 = vmul.f32 %v5852, %v5860
      %v5889 = vmul.f32 %v5853, %v5860
      %v5890 = vmul.f32 %v5854, %v5860
      %v5891 = vmul.f32 %v5855, %v5860
      %v5892 = vmul.f32 %v5856, %v5860
      %v5893 = vlaneseq
      %v5894 = vshrl.u32 %v5893, 7
      %v5895 = vsub.s32 0, %v5894
      %v5896 = vrot.slane %v5824, %v5895
      %v5897 = vsub.f32 %v5861, %v5896
      %v5898 = vsub.f32 %v5862, %v5896
      %v5899 = vsub.f32 %v5863, %v5896
      %v5900 = vsub.f32 %v5864, %v5896
      %v5901 = vsub.f32 %v5865, %v5896
      %v5902 = vsub.f32 %v5866, %v5896
      %v5903 = vsub.f32 %v5867, %v5896
      %v5904 = vsub.f32 %v5868, %v5896
      %v5905 = vsub.f32 %v5869, %v5896
      %v5906 = vsub.f32 %v5870, %v5896
      %v5907 = vsub.f32 %v5871, %v5896
      %v5908 = vsub.f32 %v5872, %v5896
      %v5909 = vsub.f32 %v5873, %v5896
      %v5910 = vsub.f32 %v5874, %v5896
      %v5911 = vsub.f32 %v5875, %v5896
      %v5912 = vsub.f32 %v5876, %v5896
      %v5913 = vsub.f32 %v5877, %v5896
      %v5914 = vsub.f32 %v5878, %v5896
      %v5915 = vsub.f32 %v5879, %v5896
      %v5916 = vsub.f32 %v5880, %v5896
      %v5917 = vsub.f32 %v5881, %v5896
      %v5918 = vsub.f32 %v5882, %v5896
      %v5919 = vsub.f32 %v5883, %v5896
      %v5920 = vsub.f32 %v5884, %v5896
      %v5921 = vsub.f32 %v5885, %v5896
      %v5922 = vsub.f32 %v5886, %v5896
      %v5923 = vsub.f32 %v5887, %v5896
      %v5924 = vsub.f32 %v5888, %v5896
      %v5925 = vsub.f32 %v5889, %v5896
      %v5926 = vsub.f32 %v5890, %v5896
      %v5927 = vsub.f32 %v5891, %v5896
      %v5928 = vsub.f32 %v5892, %v5896
      %v5929 = vmax.f32 %v5897, 0.0
      %v5930 = vmax.f32 %v5898, 0.0
      %v5931 = vmax.f32 %v5899, 0.0
      %v5932 = vmax.f32 %v5900, 0.0
      %v5933 = vmax.f32 %v5901, 0.0
      %v5934 = vmax.f32 %v5902, 0.0
      %v5935 = vmax.f32 %v5903, 0.0
      %v5936 = vmax.f32 %v5904, 0.0
      %v5937 = vmax.f32 %v5905, 0.0
      %v5938 = vmax.f32 %v5906, 0.0
      %v5939 = vmax.f32 %v5907, 0.0
      %v5940 = vmax.f32 %v5908, 0.0
      %v5941 = vmax.f32 %v5909, 0.0
      %v5942 = vmax.f32 %v5910, 0.0
      %v5943 = vmax.f32 %v5911, 0.0
      %v5944 = vmax.f32 %v5912, 0.0
      %v5945 = vmax.f32 %v5913, 0.0
      %v5946 = vmax.f32 %v5914, 0.0
      %v5947 = vmax.f32 %v5915, 0.0
      %v5948 = vmax.f32 %v5916, 0.0
      %v5949 = vmax.f32 %v5917, 0.0
      %v5950 = vmax.f32 %v5918, 0.0
      %v5951 = vmax.f32 %v5919, 0.0
      %v5952 = vmax.f32 %v5920, 0.0
      %v5953 = vmax.f32 %v5921, 0.0
      %v5954 = vmax.f32 %v5922, 0.0
      %v5955 = vmax.f32 %v5923, 0.0
      %v5956 = vmax.f32 %v5924, 0.0
      %v5957 = vmax.f32 %v5925, 0.0
      %v5958 = vmax.f32 %v5926, 0.0
      %v5959 = vmax.f32 %v5927, 0.0
      %v5960 = vmax.f32 %v5928, 0.0
      %5961 = vst.msk [vmem:[%s143] sm:$0xff] %vm1086, %v5929
      %5962 = vst.msk [vmem:[%s143 + $0x8] sm:$0xff] %vm1086, %v5930
      %5963 = vst.msk [vmem:[%s143 + $0x20] sm:$0xff] %vm1086, %v5931
      %5964 = vst.msk [vmem:[%s143 + $0x28] sm:$0xff] %vm1086, %v5932
      %5965 = vst.msk [vmem:[%s143 + $0x40] sm:$0xff] %vm1086, %v5933
      %5966 = vst.msk [vmem:[%s143 + $0x48] sm:$0xff] %vm1086, %v5934
      %5967 = vst.msk [vmem:[%s143 + $0x60] sm:$0xff] %vm1086, %v5935
      %5968 = vst.msk [vmem:[%s143 + $0x68] sm:$0xff] %vm1086, %v5936
      %5969 = vst.msk [vmem:[%s143 + $0x80] sm:$0xff] %vm1086, %v5937
      %5970 = vst.msk [vmem:[%s143 + $0x88] sm:$0xff] %vm1086, %v5938
      %5971 = vst.msk [vmem:[%s143 + $0xa0] sm:$0xff] %vm1086, %v5939
      %5972 = vst.msk [vmem:[%s143 + $0xa8] sm:$0xff] %vm1086, %v5940
      %5973 = vst.msk [vmem:[%s143 + $0xc0] sm:$0xff] %vm1086, %v5941
      %5974 = vst.msk [vmem:[%s143 + $0xc8] sm:$0xff] %vm1086, %v5942
      %5975 = vst.msk [vmem:[%s143 + $0xe0] sm:$0xff] %vm1086, %v5943
      %5976 = vst.msk [vmem:[%s143 + $0xe8] sm:$0xff] %vm1086, %v5944
      %5977 = vst.msk [vmem:[%s143 + $0x100] sm:$0xff] %vm1086, %v5945
      %5978 = vst.msk [vmem:[%s143 + $0x108] sm:$0xff] %vm1086, %v5946
      %5979 = vst.msk [vmem:[%s143 + $0x120] sm:$0xff] %vm1086, %v5947
      %5980 = vst.msk [vmem:[%s143 + $0x128] sm:$0xff] %vm1086, %v5948
      %5981 = vst.msk [vmem:[%s143 + $0x140] sm:$0xff] %vm1086, %v5949
      %5982 = vst.msk [vmem:[%s143 + $0x148] sm:$0xff] %vm1086, %v5950
      %5983 = vst.msk [vmem:[%s143 + $0x160] sm:$0xff] %vm1086, %v5951
      %5984 = vst.msk [vmem:[%s143 + $0x168] sm:$0xff] %vm1086, %v5952
      %5985 = vst.msk [vmem:[%s143 + $0x180] sm:$0xff] %vm1086, %v5953
      %5986 = vst.msk [vmem:[%s143 + $0x188] sm:$0xff] %vm1086, %v5954
      %5987 = vst.msk [vmem:[%s143 + $0x1a0] sm:$0xff] %vm1086, %v5955
      %5988 = vst.msk [vmem:[%s143 + $0x1a8] sm:$0xff] %vm1086, %v5956
      %5989 = vst.msk [vmem:[%s143 + $0x1c0] sm:$0xff] %vm1086, %v5957
      %5990 = vst.msk [vmem:[%s143 + $0x1c8] sm:$0xff] %vm1086, %v5958
      %5991 = vst.msk [vmem:[%s143 + $0x1e0] sm:$0xff] %vm1086, %v5959
      %5992 = vst.msk [vmem:[%s143 + $0x1e8] sm:$0xff] %vm1086, %v5960
      %v5993 = vld [vmem:[%s5775] sm:$0xff]
      %v5994 = vld [vmem:[%s5775 + $0x8] sm:$0xff]
      %v5995 = vld [vmem:[%s5775 + $0x20] sm:$0xff]
      %v5996 = vld [vmem:[%s5775 + $0x28] sm:$0xff]
      %v5997 = vld [vmem:[%s5775 + $0x40] sm:$0xff]
      %v5998 = vld [vmem:[%s5775 + $0x48] sm:$0xff]
      %v5999 = vld [vmem:[%s5775 + $0x60] sm:$0xff]
      %v6000 = vld [vmem:[%s5775 + $0x68] sm:$0xff]
      %v6001 = vld [vmem:[%s5775 + $0x80] sm:$0xff]
      %v6002 = vld [vmem:[%s5775 + $0x88] sm:$0xff]
      %v6003 = vld [vmem:[%s5775 + $0xa0] sm:$0xff]
      %v6004 = vld [vmem:[%s5775 + $0xa8] sm:$0xff]
      %v6005 = vld [vmem:[%s5775 + $0xc0] sm:$0xff]
      %v6006 = vld [vmem:[%s5775 + $0xc8] sm:$0xff]
      %v6007 = vld [vmem:[%s5775 + $0xe0] sm:$0xff]
      %v6008 = vld [vmem:[%s5775 + $0xe8] sm:$0xff]
      %v6009 = vld [vmem:[%s5775 + $0x100] sm:$0xff]
      %v6010 = vld [vmem:[%s5775 + $0x108] sm:$0xff]
      %v6011 = vld [vmem:[%s5775 + $0x120] sm:$0xff]
      %v6012 = vld [vmem:[%s5775 + $0x128] sm:$0xff]
      %v6013 = vld [vmem:[%s5775 + $0x140] sm:$0xff]
      %v6014 = vld [vmem:[%s5775 + $0x148] sm:$0xff]
      %v6015 = vld [vmem:[%s5775 + $0x160] sm:$0xff]
      %v6016 = vld [vmem:[%s5775 + $0x168] sm:$0xff]
      %v6017 = vld [vmem:[%s5775 + $0x180] sm:$0xff]
      %v6018 = vld [vmem:[%s5775 + $0x188] sm:$0xff]
      %v6019 = vld [vmem:[%s5775 + $0x1a0] sm:$0xff]
      %v6020 = vld [vmem:[%s5775 + $0x1a8] sm:$0xff]
      %v6021 = vld [vmem:[%s5775 + $0x1c0] sm:$0xff]
      %v6022 = vld [vmem:[%s5775 + $0x1c8] sm:$0xff]
      %v6023 = vld [vmem:[%s5775 + $0x1e0] sm:$0xff]
      %v6024 = vld [vmem:[%s5775 + $0x1e8] sm:$0xff]
      %v6025 = vmul.f32 %v5993, %v5860
      %v6026 = vmul.f32 %v5994, %v5860
      %v6027 = vmul.f32 %v5995, %v5860
      %v6028 = vmul.f32 %v5996, %v5860
      %v6029 = vmul.f32 %v5997, %v5860
      %v6030 = vmul.f32 %v5998, %v5860
      %v6031 = vmul.f32 %v5999, %v5860
      %v6032 = vmul.f32 %v6000, %v5860
      %v6033 = vmul.f32 %v6001, %v5860
      %v6034 = vmul.f32 %v6002, %v5860
      %v6035 = vmul.f32 %v6003, %v5860
      %v6036 = vmul.f32 %v6004, %v5860
      %v6037 = vmul.f32 %v6005, %v5860
      %v6038 = vmul.f32 %v6006, %v5860
      %v6039 = vmul.f32 %v6007, %v5860
      %v6040 = vmul.f32 %v6008, %v5860
      %v6041 = vmul.f32 %v6009, %v5860
      %v6042 = vmul.f32 %v6010, %v5860
      %v6043 = vmul.f32 %v6011, %v5860
      %v6044 = vmul.f32 %v6012, %v5860
      %v6045 = vmul.f32 %v6013, %v5860
      %v6046 = vmul.f32 %v6014, %v5860
      %v6047 = vmul.f32 %v6015, %v5860
      %v6048 = vmul.f32 %v6016, %v5860
      %v6049 = vmul.f32 %v6017, %v5860
      %v6050 = vmul.f32 %v6018, %v5860
      %v6051 = vmul.f32 %v6019, %v5860
      %v6052 = vmul.f32 %v6020, %v5860
      %v6053 = vmul.f32 %v6021, %v5860
      %v6054 = vmul.f32 %v6022, %v5860
      %v6055 = vmul.f32 %v6023, %v5860
      %v6056 = vmul.f32 %v6024, %v5860
      %v6057 = vsub.f32 %v6025, %v5896
      %v6058 = vsub.f32 %v6026, %v5896
      %v6059 = vsub.f32 %v6027, %v5896
      %v6060 = vsub.f32 %v6028, %v5896
      %v6061 = vsub.f32 %v6029, %v5896
      %v6062 = vsub.f32 %v6030, %v5896
      %v6063 = vsub.f32 %v6031, %v5896
      %v6064 = vsub.f32 %v6032, %v5896
      %v6065 = vsub.f32 %v6033, %v5896
      %v6066 = vsub.f32 %v6034, %v5896
      %v6067 = vsub.f32 %v6035, %v5896
      %v6068 = vsub.f32 %v6036, %v5896
      %v6069 = vsub.f32 %v6037, %v5896
      %v6070 = vsub.f32 %v6038, %v5896
      %v6071 = vsub.f32 %v6039, %v5896
      %v6072 = vsub.f32 %v6040, %v5896
      %v6073 = vsub.f32 %v6041, %v5896
      %v6074 = vsub.f32 %v6042, %v5896
      %v6075 = vsub.f32 %v6043, %v5896
      %v6076 = vsub.f32 %v6044, %v5896
      %v6077 = vsub.f32 %v6045, %v5896
      %v6078 = vsub.f32 %v6046, %v5896
      %v6079 = vsub.f32 %v6047, %v5896
      %v6080 = vsub.f32 %v6048, %v5896
      %v6081 = vsub.f32 %v6049, %v5896
      %v6082 = vsub.f32 %v6050, %v5896
      %v6083 = vsub.f32 %v6051, %v5896
      %v6084 = vsub.f32 %v6052, %v5896
      %v6085 = vsub.f32 %v6053, %v5896
      %v6086 = vsub.f32 %v6054, %v5896
      %v6087 = vsub.f32 %v6055, %v5896
      %v6088 = vsub.f32 %v6056, %v5896
      %v6089 = vmax.f32 %v6057, 0.0
      %v6090 = vmax.f32 %v6058, 0.0
      %v6091 = vmax.f32 %v6059, 0.0
      %v6092 = vmax.f32 %v6060, 0.0
      %v6093 = vmax.f32 %v6061, 0.0
      %v6094 = vmax.f32 %v6062, 0.0
      %v6095 = vmax.f32 %v6063, 0.0
      %v6096 = vmax.f32 %v6064, 0.0
      %v6097 = vmax.f32 %v6065, 0.0
      %v6098 = vmax.f32 %v6066, 0.0
      %v6099 = vmax.f32 %v6067, 0.0
      %v6100 = vmax.f32 %v6068, 0.0
      %v6101 = vmax.f32 %v6069, 0.0
      %v6102 = vmax.f32 %v6070, 0.0
      %v6103 = vmax.f32 %v6071, 0.0
      %v6104 = vmax.f32 %v6072, 0.0
      %v6105 = vmax.f32 %v6073, 0.0
      %v6106 = vmax.f32 %v6074, 0.0
      %v6107 = vmax.f32 %v6075, 0.0
      %v6108 = vmax.f32 %v6076, 0.0
      %v6109 = vmax.f32 %v6077, 0.0
      %v6110 = vmax.f32 %v6078, 0.0
      %v6111 = vmax.f32 %v6079, 0.0
      %v6112 = vmax.f32 %v6080, 0.0
      %v6113 = vmax.f32 %v6081, 0.0
      %v6114 = vmax.f32 %v6082, 0.0
      %v6115 = vmax.f32 %v6083, 0.0
      %v6116 = vmax.f32 %v6084, 0.0
      %v6117 = vmax.f32 %v6085, 0.0
      %v6118 = vmax.f32 %v6086, 0.0
      %v6119 = vmax.f32 %v6087, 0.0
      %v6120 = vmax.f32 %v6088, 0.0
      %6121 = vst.msk [vmem:[%s5775] sm:$0xff] %vm1086, %v6089
      %6122 = vst.msk [vmem:[%s5775 + $0x8] sm:$0xff] %vm1086, %v6090
      %6123 = vst.msk [vmem:[%s5775 + $0x20] sm:$0xff] %vm1086, %v6091
      %6124 = vst.msk [vmem:[%s5775 + $0x28] sm:$0xff] %vm1086, %v6092
      %6125 = vst.msk [vmem:[%s5775 + $0x40] sm:$0xff] %vm1086, %v6093
      %6126 = vst.msk [vmem:[%s5775 + $0x48] sm:$0xff] %vm1086, %v6094
      %6127 = vst.msk [vmem:[%s5775 + $0x60] sm:$0xff] %vm1086, %v6095
      %6128 = vst.msk [vmem:[%s5775 + $0x68] sm:$0xff] %vm1086, %v6096
      %6129 = vst.msk [vmem:[%s5775 + $0x80] sm:$0xff] %vm1086, %v6097
      %6130 = vst.msk [vmem:[%s5775 + $0x88] sm:$0xff] %vm1086, %v6098
      %6131 = vst.msk [vmem:[%s5775 + $0xa0] sm:$0xff] %vm1086, %v6099
      %6132 = vst.msk [vmem:[%s5775 + $0xa8] sm:$0xff] %vm1086, %v6100
      %6133 = vst.msk [vmem:[%s5775 + $0xc0] sm:$0xff] %vm1086, %v6101
      %6134 = vst.msk [vmem:[%s5775 + $0xc8] sm:$0xff] %vm1086, %v6102
      %6135 = vst.msk [vmem:[%s5775 + $0xe0] sm:$0xff] %vm1086, %v6103
      %6136 = vst.msk [vmem:[%s5775 + $0xe8] sm:$0xff] %vm1086, %v6104
      %6137 = vst.msk [vmem:[%s5775 + $0x100] sm:$0xff] %vm1086, %v6105
      %6138 = vst.msk [vmem:[%s5775 + $0x108] sm:$0xff] %vm1086, %v6106
      %6139 = vst.msk [vmem:[%s5775 + $0x120] sm:$0xff] %vm1086, %v6107
      %6140 = vst.msk [vmem:[%s5775 + $0x128] sm:$0xff] %vm1086, %v6108
      %6141 = vst.msk [vmem:[%s5775 + $0x140] sm:$0xff] %vm1086, %v6109
      %6142 = vst.msk [vmem:[%s5775 + $0x148] sm:$0xff] %vm1086, %v6110
      %6143 = vst.msk [vmem:[%s5775 + $0x160] sm:$0xff] %vm1086, %v6111
      %6144 = vst.msk [vmem:[%s5775 + $0x168] sm:$0xff] %vm1086, %v6112
      %6145 = vst.msk [vmem:[%s5775 + $0x180] sm:$0xff] %vm1086, %v6113
      %6146 = vst.msk [vmem:[%s5775 + $0x188] sm:$0xff] %vm1086, %v6114
      %6147 = vst.msk [vmem:[%s5775 + $0x1a0] sm:$0xff] %vm1086, %v6115
      %6148 = vst.msk [vmem:[%s5775 + $0x1a8] sm:$0xff] %vm1086, %v6116
      %6149 = vst.msk [vmem:[%s5775 + $0x1c0] sm:$0xff] %vm1086, %v6117
      %6150 = vst.msk [vmem:[%s5775 + $0x1c8] sm:$0xff] %vm1086, %v6118
      %6151 = vst.msk [vmem:[%s5775 + $0x1e0] sm:$0xff] %vm1086, %v6119
      %6152 = vst.msk [vmem:[%s5775 + $0x1e8] sm:$0xff] %vm1086, %v6120
      %p6153 = scmp.lt.s32.totalorder %s13, 1
      %s6154 = scalar_select %p6153, %s13, 1
      %s6155 = smul.addr %s6154, 64
      %s6156 = smul.addr %s6155, 8
      %s6157 = scalar_lea.vmem %s2, %s6156
      // Predicated region
      $region29: #{unet_up_forward.1} parent=27 // pred_check
        %p6158 = pneg %p78
      $region30: #{unet_up_forward.1} parent=27 // pred_check_branch
        %6160 = sbr.rel (%p6158) target = $region32
      $region31: #{unet_up_forward.1} parent=27 // pred_region
        _
      $region32: #{unet_up_forward.1} parent=27 // pred_fallthru
        _
    $region28: #{unet_up_forward.1} parent=5 // pred_fallthru
      _
    %p6161 = scmp.le.s32.totalorder 2, %s8
    // Predicated region
    $region33: #{unet_up_forward.1} parent=5 // pred_check
      %p6162 = pneg %p6161
    $region34: #{unet_up_forward.1} parent=5 // pred_check_branch
      %6164 = sbr.rel (%p6162) target = $region36
    $region35: #{unet_up_forward.1} parent=5 // pred_region
      %s6165 = ssub.s32 %s8, 2
      // Predicated region
      $region37: #{unet_up_forward.1} parent=35 // pred_check
        %p6166 = pneg %p84
      $region38: #{unet_up_forward.1} parent=35 // pred_check_branch
        %6168 = sbr.rel (%p6166) target = $region40
      $region39: #{unet_up_forward.1} parent=35 // pred_region
        %p6169 = scmp.lt.s32.totalorder %s14, 1
        %s6170 = scalar_select %p6169, %s14, 1
        %s6171 = smul.addr %s6170, 64
        %s6172 = smul.addr %s6171, 8
        %s6173 = scalar_lea.vmem %s2, %s6172
      $region40: #{unet_up_forward.1} parent=35 // pred_fallthru
        _
    $region36: #{unet_up_forward.1} parent=5 // pred_fallthru
      _
  $region6: #{unet_up_forward.1} parent=0 // loop_footer
    %s12 = sadd.s32 1, %s8
  $region7: #{unet_up_forward.1} parent=0 // loop_footer_branch
    %7 = sbr.rel target = $region3
  $region8: #{unet_up_forward.1} parent=0 // loop_exit
    _

</llo_original>
